<compile_context>
chip_gen: v7x
topology: tpu7x:2x2x1
jax: 0.10.0
libtpu: 0.0.40
codegen_flags: <defaults>
</compile_context>

<pallas_src>
import math
import functools

import jax
import jax.numpy as jnp
from jax import lax
from jax.experimental import pallas as pl
from jax.experimental.pallas import tpu as pltpu

# -------------------- model dimensions (small, synthetic) --------------------
B = 2        # batch
TQ = 8       # target (decoder) sequence length
TK = 8       # source (memory) sequence length
D_MODEL = 32
N_HEADS = 4
D_K = D_MODEL // N_HEADS
D_FF = 64
LN_EPS = 1e-6
LANE = 128   # weight-slab segment alignment


# ----------------------------- fused Pallas kernel ----------------------------
def _decoder_layer_kernel(
    x_ref,         # (B*TQ, D)  f32
    mem_ref,       # (B*TK, D)  bf16
    tgt_mask_ref,  # (B, TQ, TQ) f32, 1=keep 0=mask
    src_mask_ref,  # (B, 1, TK)  f32
    w_ref,         # (D, SLAB_W) bf16 weight slab
    p_ref,         # (7, SLAB_W) f32  bias/LN slab
    o_ref,         # (B*TQ, D)  f32
    *, d_model, n_heads, d_ff, batch, tq, tk, offs,
):
    d_k = d_model // n_heads
    (off_self_qkv, off_self_o, off_src_q,
     off_src_kv, off_src_o, off_ff1, off_ff2t) = offs

    def bias(off, width):                      # (1, width) f32
        return p_ref[0:1, off:off + width]

    def layer_norm(v, idx):
        # Annotated-Transformer LN: unbiased std (N-1), normalize by (std + eps).
        g = p_ref[1 + idx:2 + idx, 0:d_model]  # (1, D)
        b = p_ref[4 + idx:5 + idx, 0:d_model]  # (1, D)
        mean = jnp.mean(v, axis=-1, keepdims=True)
        var = jnp.sum((v - mean) ** 2, axis=-1, keepdims=True) * (1.0 / (d_model - 1))
        std = jnp.sqrt(var)
        return g * (v - mean) / (std + LN_EPS) + b          # exact reciprocal path

    def proj(act_f32, w_off, width):
        # (N, D) f32 -> bf16 MXU operands -> f32 accumulator + f32 bias.
        w = w_ref[:, w_off:w_off + width]                    # (D, width) bf16
        return jnp.dot(act_f32.astype(jnp.bfloat16), w,
                       preferred_element_type=jnp.float32) + bias(w_off, width)

    def mha(q, k, v, mask, wo_off):
        # q: (TQ, D) f32 (scale already folded into Wq), k/v: (TKx, D) f32,
        # mask broadcastable to (TQ, TKx).  Heads are static lane slices; the
        # concat is replaced by per-head out-projection + accumulation:
        #   concat_h(o_h) @ Wo == sum_h o_h @ Wo[h*dk:(h+1)*dk, :]
        out = None
        for h in range(n_heads):
            lo = h * d_k
            qh = q[:, lo:lo + d_k].astype(jnp.bfloat16)
            kh = k[:, lo:lo + d_k].astype(jnp.bfloat16)
            vh = v[:, lo:lo + d_k].astype(jnp.bfloat16)
            # contract last axes directly -> no materialized k.T; f32 scores.
            s = lax.dot_general(qh, kh, (((1,), (1,)), ((), ())),
                                preferred_element_type=jnp.float32)
            s = jnp.where(mask > 0.5, s, -1e9)
            s = s - jnp.max(s, axis=-1, keepdims=True)
            p = jnp.exp(s)
            p = p * pl.reciprocal(jnp.sum(p, axis=-1, keepdims=True), approx=True)
            oh = jnp.dot(p.astype(jnp.bfloat16), vh,
                         preferred_element_type=jnp.float32)          # (TQ, dk)
            w_oh = w_ref[lo:lo + d_k, wo_off:wo_off + d_model]        # (dk, D) bf16
            contrib = jnp.dot(oh.astype(jnp.bfloat16), w_oh,
                              preferred_element_type=jnp.float32)     # (TQ, D)
            out = contrib if out is None else out + contrib
        return out

    x = x_ref[...]          # (B*TQ, D) f32 residual stream
    mem = mem_ref[...]      # (B*TK, D) bf16

    # ---- sublayer 0: self-attention (fused QKV projection on the full slab) ----
    y = layer_norm(x, 0)
    qkv = proj(y, off_self_qkv, 3 * d_model)                 # (B*TQ, 3D) f32
    rows = []
    for b in range(batch):                                   # static unroll, B=2
        r0 = b * tq
        q = qkv[r0:r0 + tq, 0:d_model]
        k = qkv[r0:r0 + tq, d_model:2 * d_model]
        v = qkv[r0:r0 + tq, 2 * d_model:3 * d_model]
        rows.append(mha(q, k, v, tgt_mask_ref[b], off_self_o))
    x = x + jnp.concatenate(rows, axis=0) + bias(off_self_o, d_model)

    # ---- sublayer 1: cross-attention over memory (fused KV projection) ----
    y = layer_norm(x, 1)
    q_all = proj(y, off_src_q, d_model)                      # (B*TQ, D) f32
    kv = jnp.dot(mem, w_ref[:, off_src_kv:off_src_kv + 2 * d_model],
                 preferred_element_type=jnp.float32) + bias(off_src_kv, 2 * d_model)
    rows = []
    for b in range(batch):
        r0q, r0k = b * tq, b * tk
        q = q_all[r0q:r0q + tq, :]
        k = kv[r0k:r0k + tk, 0:d_model]
        v = kv[r0k:r0k + tk, d_model:2 * d_model]
        rows.append(mha(q, k, v, src_mask_ref[b], off_src_o))
    x = x + jnp.concatenate(rows, axis=0) + bias(off_src_o, d_model)

    # ---- sublayer 2: position-wise feed-forward (both linears fused) ----
    y = layer_norm(x, 2)
    h = jnp.maximum(proj(y, off_ff1, d_ff), 0.0)             # (B*TQ, Dff) f32
    w2t = w_ref[:, off_ff2t:off_ff2t + d_ff]                 # (D, Dff) = ff_w2.T
    ffn = lax.dot_general(h.astype(jnp.bfloat16), w2t, (((1,), (1,)), ((), ())),
                          preferred_element_type=jnp.float32)
    x = x + ffn + bias(off_ff2t, d_model)

    o_ref[...] = x


# ------------------------------ wrapper ---------------------------------------
def decoder_layer_forward(params, x, memory, src_mask, tgt_mask, *, n_heads=N_HEADS):
    """x:(B,TQ,D) memory:(B,TK,D) src_mask:(B,1,TK) tgt_mask:(B,TQ,TQ)."""
    b, tq, d = x.shape
    tk = memory.shape[1]
    d_ff = params["ff_w1"].shape[1]
    assert d % n_heads == 0
    assert tgt_mask.shape == (b, tq, tq)
    assert src_mask.shape == (b, 1, tk)

    d_k = d // n_heads
    scale = 1.0 / math.sqrt(d_k)          # folded into Q projection at pack time
    sa, ca = params["self_attn"], params["src_attn"]

    # --- weight slab segments (all have D rows; ff_w2 stored transposed) ---
    w_segs = [
        jnp.concatenate([sa["wq"] * scale, sa["wk"], sa["wv"]], axis=1),  # (D, 3D)
        sa["wo"],                                                         # (D, D)
        ca["wq"] * scale,                                                 # (D, D)
        jnp.concatenate([ca["wk"], ca["wv"]], axis=1),                    # (D, 2D)
        ca["wo"],                                                         # (D, D)
        params["ff_w1"],                                                  # (D, Dff)
        params["ff_w2"].T,                                                # (D, Dff)
    ]
    b_segs = [
        jnp.concatenate([sa["bq"] * scale, sa["bk"], sa["bv"]]),          # (3D,)
        sa["bo"],
        ca["bq"] * scale,
        jnp.concatenate([ca["bk"], ca["bv"]]),
        ca["bo"],
        params["ff_b1"],
        params["ff_b2"],
    ]
    padded = [pl.cdiv(w.shape[1], LANE) * LANE for w in w_segs]   # 128-aligned segments
    offs, acc = [], 0
    for pw in padded:
        offs.append(acc)
        acc += pw
    slab_w = acc

    w_slab = jnp.concatenate(
        [jnp.pad(w, ((0, 0), (0, pw - w.shape[1]))) for w, pw in zip(w_segs, padded)],
        axis=1).astype(jnp.bfloat16)                                       # (D, slab_w)
    bias_row = jnp.concatenate(
        [jnp.pad(v, (0, pw - v.shape[0])) for v, pw in zip(b_segs, padded)]
    ).reshape(1, slab_w)
    ln_g = jnp.stack([params["ln0_g"], params["ln1_g"], params["ln2_g"]])  # (3, D)
    ln_b = jnp.stack([params["ln0_b"], params["ln1_b"], params["ln2_b"]])  # (3, D)
    ln_rows = jnp.pad(jnp.concatenate([ln_g, ln_b], axis=0), ((0, 0), (0, slab_w - d)))
    p_slab = jnp.concatenate([bias_row, ln_rows], axis=0).astype(jnp.float32)  # (7, slab_w)

    # --- fold batch into one slab: single grid step, no per-batch serial loop ---
    x2 = x.reshape(b * tq, d).astype(jnp.float32)
    mem2 = memory.reshape(b * tk, d).astype(jnp.bfloat16)    # only used as MXU operand

    kernel = functools.partial(
        _decoder_layer_kernel, d_model=d, n_heads=n_heads, d_ff=d_ff,
        batch=b, tq=tq, tk=tk, offs=tuple(offs))

    out = pl.pallas_call(
        kernel,
        out_shape=jax.ShapeDtypeStruct((b * tq, d), jnp.float32),
        grid=(1,),
        in_specs=[
            pl.BlockSpec((b * tq, d), lambda i: (0, 0)),       # x slab
            pl.BlockSpec((b * tk, d), lambda i: (0, 0)),       # memory slab (bf16)
            pl.BlockSpec((b, tq, tq), lambda i: (0, 0, 0)),    # tgt_mask
            pl.BlockSpec((b, 1, tk), lambda i: (0, 0, 0)),     # src_mask
            pl.BlockSpec((d, slab_w), lambda i: (0, 0)),       # weight slab
            pl.BlockSpec((7, slab_w), lambda i: (0, 0)),       # bias / LN slab
        ],
        out_specs=pl.BlockSpec((b * tq, d), lambda i: (0, 0)),
        compiler_params=pltpu.CompilerParams(dimension_semantics=("arbitrary",)),
    )(x2, mem2, tgt_mask.astype(jnp.float32), src_mask.astype(jnp.float32),
      w_slab, p_slab)
    return out.reshape(b, tq, d)


# --------------------------- pure-JAX reference --------------------------------
def _reference_forward(params, x, memory, src_mask, tgt_mask, *, n_heads=N_HEADS):
    d = x.shape[-1]
    d_k = d // n_heads

    def ln(v, g, b):
        mean = v.mean(-1, keepdims=True)
        var = ((v - mean) ** 2).sum(-1, keepdims=True) / (d - 1)
        return g * (v - mean) / (jnp.sqrt(var) + LN_EPS) + b

    def mha(xq, xkv, mask, p):
        bb, tq, _ = xq.shape
        tk = xkv.shape[1]
        q = (xq @ p["wq"] + p["bq"]).reshape(bb, tq, n_heads, d_k).transpose(0, 2, 1, 3)
        k = (xkv @ p["wk"] + p["bk"]).reshape(bb, tk, n_heads, d_k).transpose(0, 2, 1, 3)
        v = (xkv @ p["wv"] + p["bv"]).reshape(bb, tk, n_heads, d_k).transpose(0, 2, 1, 3)
        s = jnp.einsum("bhqd,bhkd->bhqk", q, k) / math.sqrt(d_k)
        s = jnp.where(mask[:, None] > 0.5, s, -1e9)
        a = jax.nn.softmax(s, axis=-1)
        o = jnp.einsum("bhqk,bhkd->bhqd", a, v)
        o = o.transpose(0, 2, 1, 3).reshape(bb, tq, d)
        return o @ p["wo"] + p["bo"]

    y = ln(x, params["ln0_g"], params["ln0_b"])
    x = x + mha(y, y, tgt_mask, params["self_attn"])
    y = ln(x, params["ln1_g"], params["ln1_b"])
    x = x + mha(y, memory, src_mask, params["src_attn"])
    y = ln(x, params["ln2_g"], params["ln2_b"])
    h = jax.nn.relu(y @ params["ff_w1"] + params["ff_b1"])
    return x + h @ params["ff_w2"] + params["ff_b2"]


# --------------------------- deterministic params -----------------------------
def _dense_init(key, din, dout, scale=0.05):
    w = scale * jax.random.normal(key, (din, dout), jnp.float32)
    b = jnp.zeros((dout,), jnp.float32)
    return w, b


def make_params(key):
    keys = jax.random.split(key, 16)

    def attn_params(ks):
        wq, bq = _dense_init(ks[0], D_MODEL, D_MODEL)
        wk, bk = _dense_init(ks[1], D_MODEL, D_MODEL)
        wv, bv = _dense_init(ks[2], D_MODEL, D_MODEL)
        wo, bo = _dense_init(ks[3], D_MODEL, D_MODEL)
        return dict(wq=wq, bq=bq, wk=wk, bk=bk, wv=wv, bv=bv, wo=wo, bo=bo)

    ff_w1, ff_b1 = _dense_init(keys[8], D_MODEL, D_FF)
    ff_w2, ff_b2 = _dense_init(keys[9], D_FF, D_MODEL)
    return dict(
        self_attn=attn_params(keys[0:4]),
        src_attn=attn_params(keys[4:8]),
        ff_w1=ff_w1, ff_b1=ff_b1, ff_w2=ff_w2, ff_b2=ff_b2,
        ln0_g=jnp.ones((D_MODEL,), jnp.float32), ln0_b=jnp.zeros((D_MODEL,), jnp.float32),
        ln1_g=jnp.ones((D_MODEL,), jnp.float32), ln1_b=jnp.zeros((D_MODEL,), jnp.float32),
        ln2_g=jnp.ones((D_MODEL,), jnp.float32), ln2_b=jnp.zeros((D_MODEL,), jnp.float32),
    )


# ---------------------------------- main ---------------------------------------
if __name__ == "__main__":
    key = jax.random.PRNGKey(0)
    k_x, k_m, k_p = jax.random.split(key, 3)

    x = jax.random.normal(k_x, (B, TQ, D_MODEL), jnp.float32)        # decoder input
    memory = jax.random.normal(k_m, (B, TK, D_MODEL), jnp.float32)   # encoder memory
    params = make_params(k_p)

    # tgt_mask: (B, TQ, TQ) causal; src_mask: (B, 1, TK) all-valid.
    tgt_mask = jnp.broadcast_to(jnp.tril(jnp.ones((TQ, TQ), jnp.float32)), (B, TQ, TQ))
    src_mask = jnp.ones((B, 1, TK), jnp.float32)

    out = decoder_layer_forward(params, x, memory, src_mask, tgt_mask)
    out = jax.block_until_ready(out)
    assert out.shape == (B, TQ, D_MODEL)

    # Validate against a pure-JAX f32 reference (tolerance covers bf16 MXU
    # operands and the approx softmax reciprocal; structural bugs are O(0.1-1)).
    ref = _reference_forward(params, x, memory, src_mask, tgt_mask)
    err = float(jnp.max(jnp.abs(out - ref)))
    assert math.isfinite(err) and err < 2e-2, f"max abs error {err}"

    print("KERNEL_OK")
</pallas_src>

<mosaic_0001>
module attributes {stable_mosaic.version = 11 : i64} {
  func.func @_decoder_layer_kernel(%arg0: i32, %arg1: memref<16x32xf32, #tpu.memory_space<vmem>>, %arg2: memref<16x32xbf16, #tpu.memory_space<vmem>>, %arg3: memref<2x8x8xf32, #tpu.memory_space<vmem>>, %arg4: memref<2x1x8xf32, #tpu.memory_space<vmem>>, %arg5: memref<32x896xbf16, #tpu.memory_space<vmem>>, %arg6: memref<7x896xf32, #tpu.memory_space<vmem>>, %arg7: memref<16x32xf32, #tpu.memory_space<vmem>>) attributes {dimension_semantics = [#tpu.dimension_semantics<arbitrary>], iteration_bounds = array<i64: 1>, scalar_prefetch = 0 : i64, scratch_operands = 0 : i64, tpu.core_type = #tpu.core_type<tc>, window_params = [{pipeline_mode = #tpu.pipeline_mode<synchronous>, transform_indices = @transform_0, window_bounds = array<i64: 16, 32>}, {pipeline_mode = #tpu.pipeline_mode<synchronous>, transform_indices = @transform_1, window_bounds = array<i64: 16, 32>}, {pipeline_mode = #tpu.pipeline_mode<synchronous>, transform_indices = @transform_2, window_bounds = array<i64: 2, 8, 8>}, {pipeline_mode = #tpu.pipeline_mode<synchronous>, transform_indices = @transform_3, window_bounds = array<i64: 2, 1, 8>}, {pipeline_mode = #tpu.pipeline_mode<synchronous>, transform_indices = @transform_4, window_bounds = array<i64: 32, 896>}, {pipeline_mode = #tpu.pipeline_mode<synchronous>, transform_indices = @transform_5, window_bounds = array<i64: 7, 896>}, {pipeline_mode = #tpu.pipeline_mode<synchronous>, transform_indices = @transform_6, window_bounds = array<i64: 16, 32>}]} {
    %c0 = arith.constant 0 : index
    %c0_0 = arith.constant 0 : index
    %0 = vector.load %arg1[%c0, %c0_0] : memref<16x32xf32, #tpu.memory_space<vmem>>, vector<16x32xf32>
    %c0_1 = arith.constant 0 : index
    %c0_2 = arith.constant 0 : index
    %1 = vector.load %arg2[%c0_1, %c0_2] : memref<16x32xbf16, #tpu.memory_space<vmem>>, vector<16x32xbf16>
    %c1 = arith.constant 1 : index
    %c0_3 = arith.constant 0 : index
    %2 = vector.load %arg6[%c1, %c0_3] : memref<7x896xf32, #tpu.memory_space<vmem>>, vector<1x32xf32>
    %c4 = arith.constant 4 : index
    %c0_4 = arith.constant 0 : index
    %3 = vector.load %arg6[%c4, %c0_4] : memref<7x896xf32, #tpu.memory_space<vmem>>, vector<1x32xf32>
    %cst = arith.constant dense<0.000000e+00> : vector<16xf32>
    %4 = vector.multi_reduction <add>, %0, %cst [1] : vector<16x32xf32> to vector<16xf32>
    %5 = vector.shape_cast %4 : vector<16xf32> to vector<16x1xf32>
    %cst_5 = arith.constant 3.200000e+01 : f32
    %6 = vector.broadcast %cst_5 : f32 to vector<16x1xf32>
    %7 = arith.divf %5, %6 : vector<16x1xf32>
    %8 = vector.broadcast %7 : vector<16x1xf32> to vector<16x32xf32>
    %9 = arith.subf %0, %8 : vector<16x32xf32>
    %10 = arith.mulf %9, %9 : vector<16x32xf32>
    %cst_6 = arith.constant dense<0.000000e+00> : vector<16xf32>
    %11 = vector.multi_reduction <add>, %10, %cst_6 [1] : vector<16x32xf32> to vector<16xf32>
    %12 = vector.shape_cast %11 : vector<16xf32> to vector<16x1xf32>
    %cst_7 = arith.constant 0.0322580636 : f32
    %13 = vector.broadcast %cst_7 : f32 to vector<16x1xf32>
    %14 = arith.mulf %12, %13 : vector<16x1xf32>
    %15 = math.sqrt %14 : vector<16x1xf32>
    %16 = vector.broadcast %7 : vector<16x1xf32> to vector<16x32xf32>
    %17 = arith.subf %0, %16 : vector<16x32xf32>
    %18 = vector.broadcast %2 : vector<1x32xf32> to vector<16x32xf32>
    %19 = arith.mulf %18, %17 : vector<16x32xf32>
    %cst_8 = arith.constant 9.99999997E-7 : f32
    %20 = vector.broadcast %cst_8 : f32 to vector<16x1xf32>
    %21 = arith.addf %15, %20 : vector<16x1xf32>
    %22 = vector.broadcast %21 : vector<16x1xf32> to vector<16x32xf32>
    %23 = arith.divf %19, %22 : vector<16x32xf32>
    %24 = vector.broadcast %3 : vector<1x32xf32> to vector<16x32xf32>
    %25 = arith.addf %23, %24 : vector<16x32xf32>
    %c0_9 = arith.constant 0 : index
    %c0_10 = arith.constant 0 : index
    %26 = vector.load %arg5[%c0_9, %c0_10] : memref<32x896xbf16, #tpu.memory_space<vmem>>, vector<32x96xbf16>
    %27 = arith.truncf %25 : vector<16x32xf32> to vector<16x32xbf16>
    %cst_11 = arith.constant dense<0.000000e+00> : vector<16x96xf32>
    %28 = tpu.matmul %27, %26, %cst_11 {dimension_numbers = #tpu.dot_dimension_numbers<[1], [0], [0], [1], [0, 0, 1, 1], [], []>} : vector<16x32xbf16>, vector<32x96xbf16>, vector<16x96xf32> -> vector<16x96xf32>
    %c0_12 = arith.constant 0 : index
    %c0_13 = arith.constant 0 : index
    %29 = vector.load %arg6[%c0_12, %c0_13] : memref<7x896xf32, #tpu.memory_space<vmem>>, vector<1x96xf32>
    %30 = vector.broadcast %29 : vector<1x96xf32> to vector<16x96xf32>
    %31 = arith.addf %28, %30 : vector<16x96xf32>
    %32 = vector.extract_strided_slice %31 {offsets = [0, 0], sizes = [8, 32], strides = [1, 1]} : vector<16x96xf32> to vector<8x32xf32>
    %33 = vector.extract_strided_slice %31 {offsets = [0, 32], sizes = [8, 32], strides = [1, 1]} : vector<16x96xf32> to vector<8x32xf32>
    %34 = vector.extract_strided_slice %31 {offsets = [0, 64], sizes = [8, 32], strides = [1, 1]} : vector<16x96xf32> to vector<8x32xf32>
    %c0_14 = arith.constant 0 : index
    %c0_15 = arith.constant 0 : index
    %c0_16 = arith.constant 0 : index
    %35 = vector.load %arg3[%c0_14, %c0_15, %c0_16] : memref<2x8x8xf32, #tpu.memory_space<vmem>>, vector<1x8x8xf32>
    %36 = vector.shape_cast %35 : vector<1x8x8xf32> to vector<8x8xf32>
    %37 = vector.extract_strided_slice %32 {offsets = [0, 0], sizes = [8, 8], strides = [1, 1]} : vector<8x32xf32> to vector<8x8xf32>
    %38 = arith.truncf %37 : vector<8x8xf32> to vector<8x8xbf16>
    %39 = vector.extract_strided_slice %33 {offsets = [0, 0], sizes = [8, 8], strides = [1, 1]} : vector<8x32xf32> to vector<8x8xf32>
    %40 = arith.truncf %39 : vector<8x8xf32> to vector<8x8xbf16>
    %41 = vector.extract_strided_slice %34 {offsets = [0, 0], sizes = [8, 8], strides = [1, 1]} : vector<8x32xf32> to vector<8x8xf32>
    %42 = arith.truncf %41 : vector<8x8xf32> to vector<8x8xbf16>
    %cst_17 = arith.constant dense<0.000000e+00> : vector<8x8xf32>
    %43 = tpu.matmul %38, %40, %cst_17 {dimension_numbers = #tpu.dot_dimension_numbers<[1], [1], [0], [0], [0, 0, 1, 0], [], []>} : vector<8x8xbf16>, vector<8x8xbf16>, vector<8x8xf32> -> vector<8x8xf32>
    %cst_18 = arith.constant 5.000000e-01 : f32
    %44 = vector.broadcast %cst_18 : f32 to vector<8x8xf32>
    %45 = arith.cmpf ogt, %36, %44 : vector<8x8xf32>
    %cst_19 = arith.constant -1.000000e+09 : f32
    %46 = vector.broadcast %cst_19 : f32 to vector<8x8xf32>
    %47 = arith.select %45, %43, %46 : vector<8x8xi1>, vector<8x8xf32>
    %cst_20 = arith.constant dense<0xFF800000> : vector<8xf32>
    %48 = vector.multi_reduction <maximumf>, %47, %cst_20 [1] : vector<8x8xf32> to vector<8xf32>
    %49 = vector.shape_cast %48 : vector<8xf32> to vector<8x1xf32>
    %50 = vector.broadcast %49 : vector<8x1xf32> to vector<8x8xf32>
    %51 = arith.subf %47, %50 : vector<8x8xf32>
    %52 = math.exp %51 : vector<8x8xf32>
    %cst_21 = arith.constant dense<0.000000e+00> : vector<8xf32>
    %53 = vector.multi_reduction <add>, %52, %cst_21 [1] : vector<8x8xf32> to vector<8xf32>
    %54 = vector.shape_cast %53 : vector<8xf32> to vector<8x1xf32>
    %55 = tpu.reciprocal %54 {approx = true} : vector<8x1xf32> -> vector<8x1xf32>
    %56 = vector.broadcast %55 : vector<8x1xf32> to vector<8x8xf32>
    %57 = arith.mulf %52, %56 : vector<8x8xf32>
    %58 = arith.truncf %57 : vector<8x8xf32> to vector<8x8xbf16>
    %cst_22 = arith.constant dense<0.000000e+00> : vector<8x8xf32>
    %59 = tpu.matmul %58, %42, %cst_22 {dimension_numbers = #tpu.dot_dimension_numbers<[1], [0], [0], [1], [0, 0, 1, 1], [], []>} : vector<8x8xbf16>, vector<8x8xbf16>, vector<8x8xf32> -> vector<8x8xf32>
    %c0_23 = arith.constant 0 : index
    %c128 = arith.constant 128 : index
    %60 = vector.load %arg5[%c0_23, %c128] : memref<32x896xbf16, #tpu.memory_space<vmem>>, vector<8x32xbf16>
    %61 = arith.truncf %59 : vector<8x8xf32> to vector<8x8xbf16>
    %cst_24 = arith.constant dense<0.000000e+00> : vector<8x32xf32>
    %62 = tpu.matmul %61, %60, %cst_24 {dimension_numbers = #tpu.dot_dimension_numbers<[1], [0], [0], [1], [0, 0, 1, 1], [], []>} : vector<8x8xbf16>, vector<8x32xbf16>, vector<8x32xf32> -> vector<8x32xf32>
    %63 = vector.extract_strided_slice %32 {offsets = [0, 8], sizes = [8, 8], strides = [1, 1]} : vector<8x32xf32> to vector<8x8xf32>
    %64 = arith.truncf %63 : vector<8x8xf32> to vector<8x8xbf16>
    %65 = vector.extract_strided_slice %33 {offsets = [0, 8], sizes = [8, 8], strides = [1, 1]} : vector<8x32xf32> to vector<8x8xf32>
    %66 = arith.truncf %65 : vector<8x8xf32> to vector<8x8xbf16>
    %67 = vector.extract_strided_slice %34 {offsets = [0, 8], sizes = [8, 8], strides = [1, 1]} : vector<8x32xf32> to vector<8x8xf32>
    %68 = arith.truncf %67 : vector<8x8xf32> to vector<8x8xbf16>
    %cst_25 = arith.constant dense<0.000000e+00> : vector<8x8xf32>
    %69 = tpu.matmul %64, %66, %cst_25 {dimension_numbers = #tpu.dot_dimension_numbers<[1], [1], [0], [0], [0, 0, 1, 0], [], []>} : vector<8x8xbf16>, vector<8x8xbf16>, vector<8x8xf32> -> vector<8x8xf32>
    %cst_26 = arith.constant 5.000000e-01 : f32
    %70 = vector.broadcast %cst_26 : f32 to vector<8x8xf32>
    %71 = arith.cmpf ogt, %36, %70 : vector<8x8xf32>
    %cst_27 = arith.constant -1.000000e+09 : f32
    %72 = vector.broadcast %cst_27 : f32 to vector<8x8xf32>
    %73 = arith.select %71, %69, %72 : vector<8x8xi1>, vector<8x8xf32>
    %cst_28 = arith.constant dense<0xFF800000> : vector<8xf32>
    %74 = vector.multi_reduction <maximumf>, %73, %cst_28 [1] : vector<8x8xf32> to vector<8xf32>
    %75 = vector.shape_cast %74 : vector<8xf32> to vector<8x1xf32>
    %76 = vector.broadcast %75 : vector<8x1xf32> to vector<8x8xf32>
    %77 = arith.subf %73, %76 : vector<8x8xf32>
    %78 = math.exp %77 : vector<8x8xf32>
    %cst_29 = arith.constant dense<0.000000e+00> : vector<8xf32>
    %79 = vector.multi_reduction <add>, %78, %cst_29 [1] : vector<8x8xf32> to vector<8xf32>
    %80 = vector.shape_cast %79 : vector<8xf32> to vector<8x1xf32>
    %81 = tpu.reciprocal %80 {approx = true} : vector<8x1xf32> -> vector<8x1xf32>
    %82 = vector.broadcast %81 : vector<8x1xf32> to vector<8x8xf32>
    %83 = arith.mulf %78, %82 : vector<8x8xf32>
    %84 = arith.truncf %83 : vector<8x8xf32> to vector<8x8xbf16>
    %cst_30 = arith.constant dense<0.000000e+00> : vector<8x8xf32>
    %85 = tpu.matmul %84, %68, %cst_30 {dimension_numbers = #tpu.dot_dimension_numbers<[1], [0], [0], [1], [0, 0, 1, 1], [], []>} : vector<8x8xbf16>, vector<8x8xbf16>, vector<8x8xf32> -> vector<8x8xf32>
    %c8 = arith.constant 8 : index
    %c128_31 = arith.constant 128 : index
    %86 = vector.load %arg5[%c8, %c128_31] : memref<32x896xbf16, #tpu.memory_space<vmem>>, vector<8x32xbf16>
    %87 = arith.truncf %85 : vector<8x8xf32> to vector<8x8xbf16>
    %cst_32 = arith.constant dense<0.000000e+00> : vector<8x32xf32>
    %88 = tpu.matmul %87, %86, %cst_32 {dimension_numbers = #tpu.dot_dimension_numbers<[1], [0], [0], [1], [0, 0, 1, 1], [], []>} : vector<8x8xbf16>, vector<8x32xbf16>, vector<8x32xf32> -> vector<8x32xf32>
    %89 = arith.addf %62, %88 : vector<8x32xf32>
    %90 = vector.extract_strided_slice %32 {offsets = [0, 16], sizes = [8, 8], strides = [1, 1]} : vector<8x32xf32> to vector<8x8xf32>
    %91 = arith.truncf %90 : vector<8x8xf32> to vector<8x8xbf16>
    %92 = vector.extract_strided_slice %33 {offsets = [0, 16], sizes = [8, 8], strides = [1, 1]} : vector<8x32xf32> to vector<8x8xf32>
    %93 = arith.truncf %92 : vector<8x8xf32> to vector<8x8xbf16>
    %94 = vector.extract_strided_slice %34 {offsets = [0, 16], sizes = [8, 8], strides = [1, 1]} : vector<8x32xf32> to vector<8x8xf32>
    %95 = arith.truncf %94 : vector<8x8xf32> to vector<8x8xbf16>
    %cst_33 = arith.constant dense<0.000000e+00> : vector<8x8xf32>
    %96 = tpu.matmul %91, %93, %cst_33 {dimension_numbers = #tpu.dot_dimension_numbers<[1], [1], [0], [0], [0, 0, 1, 0], [], []>} : vector<8x8xbf16>, vector<8x8xbf16>, vector<8x8xf32> -> vector<8x8xf32>
    %cst_34 = arith.constant 5.000000e-01 : f32
    %97 = vector.broadcast %cst_34 : f32 to vector<8x8xf32>
    %98 = arith.cmpf ogt, %36, %97 : vector<8x8xf32>
    %cst_35 = arith.constant -1.000000e+09 : f32
    %99 = vector.broadcast %cst_35 : f32 to vector<8x8xf32>
    %100 = arith.select %98, %96, %99 : vector<8x8xi1>, vector<8x8xf32>
    %cst_36 = arith.constant dense<0xFF800000> : vector<8xf32>
    %101 = vector.multi_reduction <maximumf>, %100, %cst_36 [1] : vector<8x8xf32> to vector<8xf32>
    %102 = vector.shape_cast %101 : vector<8xf32> to vector<8x1xf32>
    %103 = vector.broadcast %102 : vector<8x1xf32> to vector<8x8xf32>
    %104 = arith.subf %100, %103 : vector<8x8xf32>
    %105 = math.exp %104 : vector<8x8xf32>
    %cst_37 = arith.constant dense<0.000000e+00> : vector<8xf32>
    %106 = vector.multi_reduction <add>, %105, %cst_37 [1] : vector<8x8xf32> to vector<8xf32>
    %107 = vector.shape_cast %106 : vector<8xf32> to vector<8x1xf32>
    %108 = tpu.reciprocal %107 {approx = true} : vector<8x1xf32> -> vector<8x1xf32>
    %109 = vector.broadcast %108 : vector<8x1xf32> to vector<8x8xf32>
    %110 = arith.mulf %105, %109 : vector<8x8xf32>
    %111 = arith.truncf %110 : vector<8x8xf32> to vector<8x8xbf16>
    %cst_38 = arith.constant dense<0.000000e+00> : vector<8x8xf32>
    %112 = tpu.matmul %111, %95, %cst_38 {dimension_numbers = #tpu.dot_dimension_numbers<[1], [0], [0], [1], [0, 0, 1, 1], [], []>} : vector<8x8xbf16>, vector<8x8xbf16>, vector<8x8xf32> -> vector<8x8xf32>
    %c16 = arith.constant 16 : index
    %c128_39 = arith.constant 128 : index
    %113 = vector.load %arg5[%c16, %c128_39] : memref<32x896xbf16, #tpu.memory_space<vmem>>, vector<8x32xbf16>
    %114 = arith.truncf %112 : vector<8x8xf32> to vector<8x8xbf16>
    %cst_40 = arith.constant dense<0.000000e+00> : vector<8x32xf32>
    %115 = tpu.matmul %114, %113, %cst_40 {dimension_numbers = #tpu.dot_dimension_numbers<[1], [0], [0], [1], [0, 0, 1, 1], [], []>} : vector<8x8xbf16>, vector<8x32xbf16>, vector<8x32xf32> -> vector<8x32xf32>
    %116 = arith.addf %89, %115 : vector<8x32xf32>
    %117 = vector.extract_strided_slice %32 {offsets = [0, 24], sizes = [8, 8], strides = [1, 1]} : vector<8x32xf32> to vector<8x8xf32>
    %118 = arith.truncf %117 : vector<8x8xf32> to vector<8x8xbf16>
    %119 = vector.extract_strided_slice %33 {offsets = [0, 24], sizes = [8, 8], strides = [1, 1]} : vector<8x32xf32> to vector<8x8xf32>
    %120 = arith.truncf %119 : vector<8x8xf32> to vector<8x8xbf16>
    %121 = vector.extract_strided_slice %34 {offsets = [0, 24], sizes = [8, 8], strides = [1, 1]} : vector<8x32xf32> to vector<8x8xf32>
    %122 = arith.truncf %121 : vector<8x8xf32> to vector<8x8xbf16>
    %cst_41 = arith.constant dense<0.000000e+00> : vector<8x8xf32>
    %123 = tpu.matmul %118, %120, %cst_41 {dimension_numbers = #tpu.dot_dimension_numbers<[1], [1], [0], [0], [0, 0, 1, 0], [], []>} : vector<8x8xbf16>, vector<8x8xbf16>, vector<8x8xf32> -> vector<8x8xf32>
    %cst_42 = arith.constant 5.000000e-01 : f32
    %124 = vector.broadcast %cst_42 : f32 to vector<8x8xf32>
    %125 = arith.cmpf ogt, %36, %124 : vector<8x8xf32>
    %cst_43 = arith.constant -1.000000e+09 : f32
    %126 = vector.broadcast %cst_43 : f32 to vector<8x8xf32>
    %127 = arith.select %125, %123, %126 : vector<8x8xi1>, vector<8x8xf32>
    %cst_44 = arith.constant dense<0xFF800000> : vector<8xf32>
    %128 = vector.multi_reduction <maximumf>, %127, %cst_44 [1] : vector<8x8xf32> to vector<8xf32>
    %129 = vector.shape_cast %128 : vector<8xf32> to vector<8x1xf32>
    %130 = vector.broadcast %129 : vector<8x1xf32> to vector<8x8xf32>
    %131 = arith.subf %127, %130 : vector<8x8xf32>
    %132 = math.exp %131 : vector<8x8xf32>
    %cst_45 = arith.constant dense<0.000000e+00> : vector<8xf32>
    %133 = vector.multi_reduction <add>, %132, %cst_45 [1] : vector<8x8xf32> to vector<8xf32>
    %134 = vector.shape_cast %133 : vector<8xf32> to vector<8x1xf32>
    %135 = tpu.reciprocal %134 {approx = true} : vector<8x1xf32> -> vector<8x1xf32>
    %136 = vector.broadcast %135 : vector<8x1xf32> to vector<8x8xf32>
    %137 = arith.mulf %132, %136 : vector<8x8xf32>
    %138 = arith.truncf %137 : vector<8x8xf32> to vector<8x8xbf16>
    %cst_46 = arith.constant dense<0.000000e+00> : vector<8x8xf32>
    %139 = tpu.matmul %138, %122, %cst_46 {dimension_numbers = #tpu.dot_dimension_numbers<[1], [0], [0], [1], [0, 0, 1, 1], [], []>} : vector<8x8xbf16>, vector<8x8xbf16>, vector<8x8xf32> -> vector<8x8xf32>
    %c24 = arith.constant 24 : index
    %c128_47 = arith.constant 128 : index
    %140 = vector.load %arg5[%c24, %c128_47] : memref<32x896xbf16, #tpu.memory_space<vmem>>, vector<8x32xbf16>
    %141 = arith.truncf %139 : vector<8x8xf32> to vector<8x8xbf16>
    %cst_48 = arith.constant dense<0.000000e+00> : vector<8x32xf32>
    %142 = tpu.matmul %141, %140, %cst_48 {dimension_numbers = #tpu.dot_dimension_numbers<[1], [0], [0], [1], [0, 0, 1, 1], [], []>} : vector<8x8xbf16>, vector<8x32xbf16>, vector<8x32xf32> -> vector<8x32xf32>
    %143 = arith.addf %116, %142 : vector<8x32xf32>
    %144 = vector.extract_strided_slice %31 {offsets = [8, 0], sizes = [8, 32], strides = [1, 1]} : vector<16x96xf32> to vector<8x32xf32>
    %145 = vector.extract_strided_slice %31 {offsets = [8, 32], sizes = [8, 32], strides = [1, 1]} : vector<16x96xf32> to vector<8x32xf32>
    %146 = vector.extract_strided_slice %31 {offsets = [8, 64], sizes = [8, 32], strides = [1, 1]} : vector<16x96xf32> to vector<8x32xf32>
    %c1_49 = arith.constant 1 : index
    %c0_50 = arith.constant 0 : index
    %c0_51 = arith.constant 0 : index
    %147 = vector.load %arg3[%c1_49, %c0_50, %c0_51] : memref<2x8x8xf32, #tpu.memory_space<vmem>>, vector<1x8x8xf32>
    %148 = vector.shape_cast %147 : vector<1x8x8xf32> to vector<8x8xf32>
    %149 = vector.extract_strided_slice %144 {offsets = [0, 0], sizes = [8, 8], strides = [1, 1]} : vector<8x32xf32> to vector<8x8xf32>
    %150 = arith.truncf %149 : vector<8x8xf32> to vector<8x8xbf16>
    %151 = vector.extract_strided_slice %145 {offsets = [0, 0], sizes = [8, 8], strides = [1, 1]} : vector<8x32xf32> to vector<8x8xf32>
    %152 = arith.truncf %151 : vector<8x8xf32> to vector<8x8xbf16>
    %153 = vector.extract_strided_slice %146 {offsets = [0, 0], sizes = [8, 8], strides = [1, 1]} : vector<8x32xf32> to vector<8x8xf32>
    %154 = arith.truncf %153 : vector<8x8xf32> to vector<8x8xbf16>
    %cst_52 = arith.constant dense<0.000000e+00> : vector<8x8xf32>
    %155 = tpu.matmul %150, %152, %cst_52 {dimension_numbers = #tpu.dot_dimension_numbers<[1], [1], [0], [0], [0, 0, 1, 0], [], []>} : vector<8x8xbf16>, vector<8x8xbf16>, vector<8x8xf32> -> vector<8x8xf32>
    %cst_53 = arith.constant 5.000000e-01 : f32
    %156 = vector.broadcast %cst_53 : f32 to vector<8x8xf32>
    %157 = arith.cmpf ogt, %148, %156 : vector<8x8xf32>
    %cst_54 = arith.constant -1.000000e+09 : f32
    %158 = vector.broadcast %cst_54 : f32 to vector<8x8xf32>
    %159 = arith.select %157, %155, %158 : vector<8x8xi1>, vector<8x8xf32>
    %cst_55 = arith.constant dense<0xFF800000> : vector<8xf32>
    %160 = vector.multi_reduction <maximumf>, %159, %cst_55 [1] : vector<8x8xf32> to vector<8xf32>
    %161 = vector.shape_cast %160 : vector<8xf32> to vector<8x1xf32>
    %162 = vector.broadcast %161 : vector<8x1xf32> to vector<8x8xf32>
    %163 = arith.subf %159, %162 : vector<8x8xf32>
    %164 = math.exp %163 : vector<8x8xf32>
    %cst_56 = arith.constant dense<0.000000e+00> : vector<8xf32>
    %165 = vector.multi_reduction <add>, %164, %cst_56 [1] : vector<8x8xf32> to vector<8xf32>
    %166 = vector.shape_cast %165 : vector<8xf32> to vector<8x1xf32>
    %167 = tpu.reciprocal %166 {approx = true} : vector<8x1xf32> -> vector<8x1xf32>
    %168 = vector.broadcast %167 : vector<8x1xf32> to vector<8x8xf32>
    %169 = arith.mulf %164, %168 : vector<8x8xf32>
    %170 = arith.truncf %169 : vector<8x8xf32> to vector<8x8xbf16>
    %cst_57 = arith.constant dense<0.000000e+00> : vector<8x8xf32>
    %171 = tpu.matmul %170, %154, %cst_57 {dimension_numbers = #tpu.dot_dimension_numbers<[1], [0], [0], [1], [0, 0, 1, 1], [], []>} : vector<8x8xbf16>, vector<8x8xbf16>, vector<8x8xf32> -> vector<8x8xf32>
    %c0_58 = arith.constant 0 : index
    %c128_59 = arith.constant 128 : index
    %172 = vector.load %arg5[%c0_58, %c128_59] : memref<32x896xbf16, #tpu.memory_space<vmem>>, vector<8x32xbf16>
    %173 = arith.truncf %171 : vector<8x8xf32> to vector<8x8xbf16>
    %cst_60 = arith.constant dense<0.000000e+00> : vector<8x32xf32>
    %174 = tpu.matmul %173, %172, %cst_60 {dimension_numbers = #tpu.dot_dimension_numbers<[1], [0], [0], [1], [0, 0, 1, 1], [], []>} : vector<8x8xbf16>, vector<8x32xbf16>, vector<8x32xf32> -> vector<8x32xf32>
    %175 = vector.extract_strided_slice %144 {offsets = [0, 8], sizes = [8, 8], strides = [1, 1]} : vector<8x32xf32> to vector<8x8xf32>
    %176 = arith.truncf %175 : vector<8x8xf32> to vector<8x8xbf16>
    %177 = vector.extract_strided_slice %145 {offsets = [0, 8], sizes = [8, 8], strides = [1, 1]} : vector<8x32xf32> to vector<8x8xf32>
    %178 = arith.truncf %177 : vector<8x8xf32> to vector<8x8xbf16>
    %179 = vector.extract_strided_slice %146 {offsets = [0, 8], sizes = [8, 8], strides = [1, 1]} : vector<8x32xf32> to vector<8x8xf32>
    %180 = arith.truncf %179 : vector<8x8xf32> to vector<8x8xbf16>
    %cst_61 = arith.constant dense<0.000000e+00> : vector<8x8xf32>
    %181 = tpu.matmul %176, %178, %cst_61 {dimension_numbers = #tpu.dot_dimension_numbers<[1], [1], [0], [0], [0, 0, 1, 0], [], []>} : vector<8x8xbf16>, vector<8x8xbf16>, vector<8x8xf32> -> vector<8x8xf32>
    %cst_62 = arith.constant 5.000000e-01 : f32
    %182 = vector.broadcast %cst_62 : f32 to vector<8x8xf32>
    %183 = arith.cmpf ogt, %148, %182 : vector<8x8xf32>
    %cst_63 = arith.constant -1.000000e+09 : f32
    %184 = vector.broadcast %cst_63 : f32 to vector<8x8xf32>
    %185 = arith.select %183, %181, %184 : vector<8x8xi1>, vector<8x8xf32>
    %cst_64 = arith.constant dense<0xFF800000> : vector<8xf32>
    %186 = vector.multi_reduction <maximumf>, %185, %cst_64 [1] : vector<8x8xf32> to vector<8xf32>
    %187 = vector.shape_cast %186 : vector<8xf32> to vector<8x1xf32>
    %188 = vector.broadcast %187 : vector<8x1xf32> to vector<8x8xf32>
    %189 = arith.subf %185, %188 : vector<8x8xf32>
    %190 = math.exp %189 : vector<8x8xf32>
    %cst_65 = arith.constant dense<0.000000e+00> : vector<8xf32>
    %191 = vector.multi_reduction <add>, %190, %cst_65 [1] : vector<8x8xf32> to vector<8xf32>
    %192 = vector.shape_cast %191 : vector<8xf32> to vector<8x1xf32>
    %193 = tpu.reciprocal %192 {approx = true} : vector<8x1xf32> -> vector<8x1xf32>
    %194 = vector.broadcast %193 : vector<8x1xf32> to vector<8x8xf32>
    %195 = arith.mulf %190, %194 : vector<8x8xf32>
    %196 = arith.truncf %195 : vector<8x8xf32> to vector<8x8xbf16>
    %cst_66 = arith.constant dense<0.000000e+00> : vector<8x8xf32>
    %197 = tpu.matmul %196, %180, %cst_66 {dimension_numbers = #tpu.dot_dimension_numbers<[1], [0], [0], [1], [0, 0, 1, 1], [], []>} : vector<8x8xbf16>, vector<8x8xbf16>, vector<8x8xf32> -> vector<8x8xf32>
    %c8_67 = arith.constant 8 : index
    %c128_68 = arith.constant 128 : index
    %198 = vector.load %arg5[%c8_67, %c128_68] : memref<32x896xbf16, #tpu.memory_space<vmem>>, vector<8x32xbf16>
    %199 = arith.truncf %197 : vector<8x8xf32> to vector<8x8xbf16>
    %cst_69 = arith.constant dense<0.000000e+00> : vector<8x32xf32>
    %200 = tpu.matmul %199, %198, %cst_69 {dimension_numbers = #tpu.dot_dimension_numbers<[1], [0], [0], [1], [0, 0, 1, 1], [], []>} : vector<8x8xbf16>, vector<8x32xbf16>, vector<8x32xf32> -> vector<8x32xf32>
    %201 = arith.addf %174, %200 : vector<8x32xf32>
    %202 = vector.extract_strided_slice %144 {offsets = [0, 16], sizes = [8, 8], strides = [1, 1]} : vector<8x32xf32> to vector<8x8xf32>
    %203 = arith.truncf %202 : vector<8x8xf32> to vector<8x8xbf16>
    %204 = vector.extract_strided_slice %145 {offsets = [0, 16], sizes = [8, 8], strides = [1, 1]} : vector<8x32xf32> to vector<8x8xf32>
    %205 = arith.truncf %204 : vector<8x8xf32> to vector<8x8xbf16>
    %206 = vector.extract_strided_slice %146 {offsets = [0, 16], sizes = [8, 8], strides = [1, 1]} : vector<8x32xf32> to vector<8x8xf32>
    %207 = arith.truncf %206 : vector<8x8xf32> to vector<8x8xbf16>
    %cst_70 = arith.constant dense<0.000000e+00> : vector<8x8xf32>
    %208 = tpu.matmul %203, %205, %cst_70 {dimension_numbers = #tpu.dot_dimension_numbers<[1], [1], [0], [0], [0, 0, 1, 0], [], []>} : vector<8x8xbf16>, vector<8x8xbf16>, vector<8x8xf32> -> vector<8x8xf32>
    %cst_71 = arith.constant 5.000000e-01 : f32
    %209 = vector.broadcast %cst_71 : f32 to vector<8x8xf32>
    %210 = arith.cmpf ogt, %148, %209 : vector<8x8xf32>
    %cst_72 = arith.constant -1.000000e+09 : f32
    %211 = vector.broadcast %cst_72 : f32 to vector<8x8xf32>
    %212 = arith.select %210, %208, %211 : vector<8x8xi1>, vector<8x8xf32>
    %cst_73 = arith.constant dense<0xFF800000> : vector<8xf32>
    %213 = vector.multi_reduction <maximumf>, %212, %cst_73 [1] : vector<8x8xf32> to vector<8xf32>
    %214 = vector.shape_cast %213 : vector<8xf32> to vector<8x1xf32>
    %215 = vector.broadcast %214 : vector<8x1xf32> to vector<8x8xf32>
    %216 = arith.subf %212, %215 : vector<8x8xf32>
    %217 = math.exp %216 : vector<8x8xf32>
    %cst_74 = arith.constant dense<0.000000e+00> : vector<8xf32>
    %218 = vector.multi_reduction <add>, %217, %cst_74 [1] : vector<8x8xf32> to vector<8xf32>
    %219 = vector.shape_cast %218 : vector<8xf32> to vector<8x1xf32>
    %220 = tpu.reciprocal %219 {approx = true} : vector<8x1xf32> -> vector<8x1xf32>
    %221 = vector.broadcast %220 : vector<8x1xf32> to vector<8x8xf32>
    %222 = arith.mulf %217, %221 : vector<8x8xf32>
    %223 = arith.truncf %222 : vector<8x8xf32> to vector<8x8xbf16>
    %cst_75 = arith.constant dense<0.000000e+00> : vector<8x8xf32>
    %224 = tpu.matmul %223, %207, %cst_75 {dimension_numbers = #tpu.dot_dimension_numbers<[1], [0], [0], [1], [0, 0, 1, 1], [], []>} : vector<8x8xbf16>, vector<8x8xbf16>, vector<8x8xf32> -> vector<8x8xf32>
    %c16_76 = arith.constant 16 : index
    %c128_77 = arith.constant 128 : index
    %225 = vector.load %arg5[%c16_76, %c128_77] : memref<32x896xbf16, #tpu.memory_space<vmem>>, vector<8x32xbf16>
    %226 = arith.truncf %224 : vector<8x8xf32> to vector<8x8xbf16>
    %cst_78 = arith.constant dense<0.000000e+00> : vector<8x32xf32>
    %227 = tpu.matmul %226, %225, %cst_78 {dimension_numbers = #tpu.dot_dimension_numbers<[1], [0], [0], [1], [0, 0, 1, 1], [], []>} : vector<8x8xbf16>, vector<8x32xbf16>, vector<8x32xf32> -> vector<8x32xf32>
    %228 = arith.addf %201, %227 : vector<8x32xf32>
    %229 = vector.extract_strided_slice %144 {offsets = [0, 24], sizes = [8, 8], strides = [1, 1]} : vector<8x32xf32> to vector<8x8xf32>
    %230 = arith.truncf %229 : vector<8x8xf32> to vector<8x8xbf16>
    %231 = vector.extract_strided_slice %145 {offsets = [0, 24], sizes = [8, 8], strides = [1, 1]} : vector<8x32xf32> to vector<8x8xf32>
    %232 = arith.truncf %231 : vector<8x8xf32> to vector<8x8xbf16>
    %233 = vector.extract_strided_slice %146 {offsets = [0, 24], sizes = [8, 8], strides = [1, 1]} : vector<8x32xf32> to vector<8x8xf32>
    %234 = arith.truncf %233 : vector<8x8xf32> to vector<8x8xbf16>
    %cst_79 = arith.constant dense<0.000000e+00> : vector<8x8xf32>
    %235 = tpu.matmul %230, %232, %cst_79 {dimension_numbers = #tpu.dot_dimension_numbers<[1], [1], [0], [0], [0, 0, 1, 0], [], []>} : vector<8x8xbf16>, vector<8x8xbf16>, vector<8x8xf32> -> vector<8x8xf32>
    %cst_80 = arith.constant 5.000000e-01 : f32
    %236 = vector.broadcast %cst_80 : f32 to vector<8x8xf32>
    %237 = arith.cmpf ogt, %148, %236 : vector<8x8xf32>
    %cst_81 = arith.constant -1.000000e+09 : f32
    %238 = vector.broadcast %cst_81 : f32 to vector<8x8xf32>
    %239 = arith.select %237, %235, %238 : vector<8x8xi1>, vector<8x8xf32>
    %cst_82 = arith.constant dense<0xFF800000> : vector<8xf32>
    %240 = vector.multi_reduction <maximumf>, %239, %cst_82 [1] : vector<8x8xf32> to vector<8xf32>
    %241 = vector.shape_cast %240 : vector<8xf32> to vector<8x1xf32>
    %242 = vector.broadcast %241 : vector<8x1xf32> to vector<8x8xf32>
    %243 = arith.subf %239, %242 : vector<8x8xf32>
    %244 = math.exp %243 : vector<8x8xf32>
    %cst_83 = arith.constant dense<0.000000e+00> : vector<8xf32>
    %245 = vector.multi_reduction <add>, %244, %cst_83 [1] : vector<8x8xf32> to vector<8xf32>
    %246 = vector.shape_cast %245 : vector<8xf32> to vector<8x1xf32>
    %247 = tpu.reciprocal %246 {approx = true} : vector<8x1xf32> -> vector<8x1xf32>
    %248 = vector.broadcast %247 : vector<8x1xf32> to vector<8x8xf32>
    %249 = arith.mulf %244, %248 : vector<8x8xf32>
    %250 = arith.truncf %249 : vector<8x8xf32> to vector<8x8xbf16>
    %cst_84 = arith.constant dense<0.000000e+00> : vector<8x8xf32>
    %251 = tpu.matmul %250, %234, %cst_84 {dimension_numbers = #tpu.dot_dimension_numbers<[1], [0], [0], [1], [0, 0, 1, 1], [], []>} : vector<8x8xbf16>, vector<8x8xbf16>, vector<8x8xf32> -> vector<8x8xf32>
    %c24_85 = arith.constant 24 : index
    %c128_86 = arith.constant 128 : index
    %252 = vector.load %arg5[%c24_85, %c128_86] : memref<32x896xbf16, #tpu.memory_space<vmem>>, vector<8x32xbf16>
    %253 = arith.truncf %251 : vector<8x8xf32> to vector<8x8xbf16>
    %cst_87 = arith.constant dense<0.000000e+00> : vector<8x32xf32>
    %254 = tpu.matmul %253, %252, %cst_87 {dimension_numbers = #tpu.dot_dimension_numbers<[1], [0], [0], [1], [0, 0, 1, 1], [], []>} : vector<8x8xbf16>, vector<8x32xbf16>, vector<8x32xf32> -> vector<8x32xf32>
    %255 = arith.addf %228, %254 : vector<8x32xf32>
    %256 = tpu.concatenate %143, %255 in 0 : vector<8x32xf32>, vector<8x32xf32> -> vector<16x32xf32>
    %257 = arith.addf %0, %256 : vector<16x32xf32>
    %c0_88 = arith.constant 0 : index
    %c128_89 = arith.constant 128 : index
    %258 = vector.load %arg6[%c0_88, %c128_89] : memref<7x896xf32, #tpu.memory_space<vmem>>, vector<1x32xf32>
    %259 = vector.broadcast %258 : vector<1x32xf32> to vector<16x32xf32>
    %260 = arith.addf %257, %259 : vector<16x32xf32>
    %c2 = arith.constant 2 : index
    %c0_90 = arith.constant 0 : index
    %261 = vector.load %arg6[%c2, %c0_90] : memref<7x896xf32, #tpu.memory_space<vmem>>, vector<1x32xf32>
    %c5 = arith.constant 5 : index
    %c0_91 = arith.constant 0 : index
    %262 = vector.load %arg6[%c5, %c0_91] : memref<7x896xf32, #tpu.memory_space<vmem>>, vector<1x32xf32>
    %cst_92 = arith.constant dense<0.000000e+00> : vector<16xf32>
    %263 = vector.multi_reduction <add>, %260, %cst_92 [1] : vector<16x32xf32> to vector<16xf32>
    %264 = vector.shape_cast %263 : vector<16xf32> to vector<16x1xf32>
    %cst_93 = arith.constant 3.200000e+01 : f32
    %265 = vector.broadcast %cst_93 : f32 to vector<16x1xf32>
    %266 = arith.divf %264, %265 : vector<16x1xf32>
    %267 = vector.broadcast %266 : vector<16x1xf32> to vector<16x32xf32>
    %268 = arith.subf %260, %267 : vector<16x32xf32>
    %269 = arith.mulf %268, %268 : vector<16x32xf32>
    %cst_94 = arith.constant dense<0.000000e+00> : vector<16xf32>
    %270 = vector.multi_reduction <add>, %269, %cst_94 [1] : vector<16x32xf32> to vector<16xf32>
    %271 = vector.shape_cast %270 : vector<16xf32> to vector<16x1xf32>
    %cst_95 = arith.constant 0.0322580636 : f32
    %272 = vector.broadcast %cst_95 : f32 to vector<16x1xf32>
    %273 = arith.mulf %271, %272 : vector<16x1xf32>
    %274 = math.sqrt %273 : vector<16x1xf32>
    %275 = vector.broadcast %266 : vector<16x1xf32> to vector<16x32xf32>
    %276 = arith.subf %260, %275 : vector<16x32xf32>
    %277 = vector.broadcast %261 : vector<1x32xf32> to vector<16x32xf32>
    %278 = arith.mulf %277, %276 : vector<16x32xf32>
    %cst_96 = arith.constant 9.99999997E-7 : f32
    %279 = vector.broadcast %cst_96 : f32 to vector<16x1xf32>
    %280 = arith.addf %274, %279 : vector<16x1xf32>
    %281 = vector.broadcast %280 : vector<16x1xf32> to vector<16x32xf32>
    %282 = arith.divf %278, %281 : vector<16x32xf32>
    %283 = vector.broadcast %262 : vector<1x32xf32> to vector<16x32xf32>
    %284 = arith.addf %282, %283 : vector<16x32xf32>
    %c0_97 = arith.constant 0 : index
    %c256 = arith.constant 256 : index
    %285 = vector.load %arg5[%c0_97, %c256] : memref<32x896xbf16, #tpu.memory_space<vmem>>, vector<32x32xbf16>
    %286 = arith.truncf %284 : vector<16x32xf32> to vector<16x32xbf16>
    %cst_98 = arith.constant dense<0.000000e+00> : vector<16x32xf32>
    %287 = tpu.matmul %286, %285, %cst_98 {dimension_numbers = #tpu.dot_dimension_numbers<[1], [0], [0], [1], [0, 0, 1, 1], [], []>} : vector<16x32xbf16>, vector<32x32xbf16>, vector<16x32xf32> -> vector<16x32xf32>
    %c0_99 = arith.constant 0 : index
    %c256_100 = arith.constant 256 : index
    %288 = vector.load %arg6[%c0_99, %c256_100] : memref<7x896xf32, #tpu.memory_space<vmem>>, vector<1x32xf32>
    %289 = vector.broadcast %288 : vector<1x32xf32> to vector<16x32xf32>
    %290 = arith.addf %287, %289 : vector<16x32xf32>
    %c0_101 = arith.constant 0 : index
    %c384 = arith.constant 384 : index
    %291 = vector.load %arg5[%c0_101, %c384] : memref<32x896xbf16, #tpu.memory_space<vmem>>, vector<32x64xbf16>
    %cst_102 = arith.constant dense<0.000000e+00> : vector<16x64xf32>
    %292 = tpu.matmul %1, %291, %cst_102 {dimension_numbers = #tpu.dot_dimension_numbers<[1], [0], [0], [1], [0, 0, 1, 1], [], []>} : vector<16x32xbf16>, vector<32x64xbf16>, vector<16x64xf32> -> vector<16x64xf32>
    %c0_103 = arith.constant 0 : index
    %c384_104 = arith.constant 384 : index
    %293 = vector.load %arg6[%c0_103, %c384_104] : memref<7x896xf32, #tpu.memory_space<vmem>>, vector<1x64xf32>
    %294 = vector.broadcast %293 : vector<1x64xf32> to vector<16x64xf32>
    %295 = arith.addf %292, %294 : vector<16x64xf32>
    %296 = vector.extract_strided_slice %290 {offsets = [0, 0], sizes = [8, 32], strides = [1, 1]} : vector<16x32xf32> to vector<8x32xf32>
    %297 = vector.extract_strided_slice %295 {offsets = [0, 0], sizes = [8, 32], strides = [1, 1]} : vector<16x64xf32> to vector<8x32xf32>
    %298 = vector.extract_strided_slice %295 {offsets = [0, 32], sizes = [8, 32], strides = [1, 1]} : vector<16x64xf32> to vector<8x32xf32>
    %c0_105 = arith.constant 0 : index
    %c0_106 = arith.constant 0 : index
    %c0_107 = arith.constant 0 : index
    %299 = vector.load %arg4[%c0_105, %c0_106, %c0_107] : memref<2x1x8xf32, #tpu.memory_space<vmem>>, vector<1x1x8xf32>
    %300 = vector.shape_cast %299 : vector<1x1x8xf32> to vector<1x8xf32>
    %301 = vector.extract_strided_slice %296 {offsets = [0, 0], sizes = [8, 8], strides = [1, 1]} : vector<8x32xf32> to vector<8x8xf32>
    %302 = arith.truncf %301 : vector<8x8xf32> to vector<8x8xbf16>
    %303 = vector.extract_strided_slice %297 {offsets = [0, 0], sizes = [8, 8], strides = [1, 1]} : vector<8x32xf32> to vector<8x8xf32>
    %304 = arith.truncf %303 : vector<8x8xf32> to vector<8x8xbf16>
    %305 = vector.extract_strided_slice %298 {offsets = [0, 0], sizes = [8, 8], strides = [1, 1]} : vector<8x32xf32> to vector<8x8xf32>
    %306 = arith.truncf %305 : vector<8x8xf32> to vector<8x8xbf16>
    %cst_108 = arith.constant dense<0.000000e+00> : vector<8x8xf32>
    %307 = tpu.matmul %302, %304, %cst_108 {dimension_numbers = #tpu.dot_dimension_numbers<[1], [1], [0], [0], [0, 0, 1, 0], [], []>} : vector<8x8xbf16>, vector<8x8xbf16>, vector<8x8xf32> -> vector<8x8xf32>
    %cst_109 = arith.constant 5.000000e-01 : f32
    %308 = vector.broadcast %cst_109 : f32 to vector<1x8xf32>
    %309 = arith.cmpf ogt, %300, %308 : vector<1x8xf32>
    %cst_110 = arith.constant -1.000000e+09 : f32
    %310 = vector.shape_cast %309 : vector<1x8xi1> to vector<1x8xi1>
    %311 = vector.broadcast %310 : vector<1x8xi1> to vector<8x8xi1>
    %312 = vector.broadcast %cst_110 : f32 to vector<8x8xf32>
    %313 = arith.select %311, %307, %312 : vector<8x8xi1>, vector<8x8xf32>
    %cst_111 = arith.constant dense<0xFF800000> : vector<8xf32>
    %314 = vector.multi_reduction <maximumf>, %313, %cst_111 [1] : vector<8x8xf32> to vector<8xf32>
    %315 = vector.shape_cast %314 : vector<8xf32> to vector<8x1xf32>
    %316 = vector.broadcast %315 : vector<8x1xf32> to vector<8x8xf32>
    %317 = arith.subf %313, %316 : vector<8x8xf32>
    %318 = math.exp %317 : vector<8x8xf32>
    %cst_112 = arith.constant dense<0.000000e+00> : vector<8xf32>
    %319 = vector.multi_reduction <add>, %318, %cst_112 [1] : vector<8x8xf32> to vector<8xf32>
    %320 = vector.shape_cast %319 : vector<8xf32> to vector<8x1xf32>
    %321 = tpu.reciprocal %320 {approx = true} : vector<8x1xf32> -> vector<8x1xf32>
    %322 = vector.broadcast %321 : vector<8x1xf32> to vector<8x8xf32>
    %323 = arith.mulf %318, %322 : vector<8x8xf32>
    %324 = arith.truncf %323 : vector<8x8xf32> to vector<8x8xbf16>
    %cst_113 = arith.constant dense<0.000000e+00> : vector<8x8xf32>
    %325 = tpu.matmul %324, %306, %cst_113 {dimension_numbers = #tpu.dot_dimension_numbers<[1], [0], [0], [1], [0, 0, 1, 1], [], []>} : vector<8x8xbf16>, vector<8x8xbf16>, vector<8x8xf32> -> vector<8x8xf32>
    %c0_114 = arith.constant 0 : index
    %c512 = arith.constant 512 : index
    %326 = vector.load %arg5[%c0_114, %c512] : memref<32x896xbf16, #tpu.memory_space<vmem>>, vector<8x32xbf16>
    %327 = arith.truncf %325 : vector<8x8xf32> to vector<8x8xbf16>
    %cst_115 = arith.constant dense<0.000000e+00> : vector<8x32xf32>
    %328 = tpu.matmul %327, %326, %cst_115 {dimension_numbers = #tpu.dot_dimension_numbers<[1], [0], [0], [1], [0, 0, 1, 1], [], []>} : vector<8x8xbf16>, vector<8x32xbf16>, vector<8x32xf32> -> vector<8x32xf32>
    %329 = vector.extract_strided_slice %296 {offsets = [0, 8], sizes = [8, 8], strides = [1, 1]} : vector<8x32xf32> to vector<8x8xf32>
    %330 = arith.truncf %329 : vector<8x8xf32> to vector<8x8xbf16>
    %331 = vector.extract_strided_slice %297 {offsets = [0, 8], sizes = [8, 8], strides = [1, 1]} : vector<8x32xf32> to vector<8x8xf32>
    %332 = arith.truncf %331 : vector<8x8xf32> to vector<8x8xbf16>
    %333 = vector.extract_strided_slice %298 {offsets = [0, 8], sizes = [8, 8], strides = [1, 1]} : vector<8x32xf32> to vector<8x8xf32>
    %334 = arith.truncf %333 : vector<8x8xf32> to vector<8x8xbf16>
    %cst_116 = arith.constant dense<0.000000e+00> : vector<8x8xf32>
    %335 = tpu.matmul %330, %332, %cst_116 {dimension_numbers = #tpu.dot_dimension_numbers<[1], [1], [0], [0], [0, 0, 1, 0], [], []>} : vector<8x8xbf16>, vector<8x8xbf16>, vector<8x8xf32> -> vector<8x8xf32>
    %cst_117 = arith.constant 5.000000e-01 : f32
    %336 = vector.broadcast %cst_117 : f32 to vector<1x8xf32>
    %337 = arith.cmpf ogt, %300, %336 : vector<1x8xf32>
    %cst_118 = arith.constant -1.000000e+09 : f32
    %338 = vector.shape_cast %337 : vector<1x8xi1> to vector<1x8xi1>
    %339 = vector.broadcast %338 : vector<1x8xi1> to vector<8x8xi1>
    %340 = vector.broadcast %cst_118 : f32 to vector<8x8xf32>
    %341 = arith.select %339, %335, %340 : vector<8x8xi1>, vector<8x8xf32>
    %cst_119 = arith.constant dense<0xFF800000> : vector<8xf32>
    %342 = vector.multi_reduction <maximumf>, %341, %cst_119 [1] : vector<8x8xf32> to vector<8xf32>
    %343 = vector.shape_cast %342 : vector<8xf32> to vector<8x1xf32>
    %344 = vector.broadcast %343 : vector<8x1xf32> to vector<8x8xf32>
    %345 = arith.subf %341, %344 : vector<8x8xf32>
    %346 = math.exp %345 : vector<8x8xf32>
    %cst_120 = arith.constant dense<0.000000e+00> : vector<8xf32>
    %347 = vector.multi_reduction <add>, %346, %cst_120 [1] : vector<8x8xf32> to vector<8xf32>
    %348 = vector.shape_cast %347 : vector<8xf32> to vector<8x1xf32>
    %349 = tpu.reciprocal %348 {approx = true} : vector<8x1xf32> -> vector<8x1xf32>
    %350 = vector.broadcast %349 : vector<8x1xf32> to vector<8x8xf32>
    %351 = arith.mulf %346, %350 : vector<8x8xf32>
    %352 = arith.truncf %351 : vector<8x8xf32> to vector<8x8xbf16>
    %cst_121 = arith.constant dense<0.000000e+00> : vector<8x8xf32>
    %353 = tpu.matmul %352, %334, %cst_121 {dimension_numbers = #tpu.dot_dimension_numbers<[1], [0], [0], [1], [0, 0, 1, 1], [], []>} : vector<8x8xbf16>, vector<8x8xbf16>, vector<8x8xf32> -> vector<8x8xf32>
    %c8_122 = arith.constant 8 : index
    %c512_123 = arith.constant 512 : index
    %354 = vector.load %arg5[%c8_122, %c512_123] : memref<32x896xbf16, #tpu.memory_space<vmem>>, vector<8x32xbf16>
    %355 = arith.truncf %353 : vector<8x8xf32> to vector<8x8xbf16>
    %cst_124 = arith.constant dense<0.000000e+00> : vector<8x32xf32>
    %356 = tpu.matmul %355, %354, %cst_124 {dimension_numbers = #tpu.dot_dimension_numbers<[1], [0], [0], [1], [0, 0, 1, 1], [], []>} : vector<8x8xbf16>, vector<8x32xbf16>, vector<8x32xf32> -> vector<8x32xf32>
    %357 = arith.addf %328, %356 : vector<8x32xf32>
    %358 = vector.extract_strided_slice %296 {offsets = [0, 16], sizes = [8, 8], strides = [1, 1]} : vector<8x32xf32> to vector<8x8xf32>
    %359 = arith.truncf %358 : vector<8x8xf32> to vector<8x8xbf16>
    %360 = vector.extract_strided_slice %297 {offsets = [0, 16], sizes = [8, 8], strides = [1, 1]} : vector<8x32xf32> to vector<8x8xf32>
    %361 = arith.truncf %360 : vector<8x8xf32> to vector<8x8xbf16>
    %362 = vector.extract_strided_slice %298 {offsets = [0, 16], sizes = [8, 8], strides = [1, 1]} : vector<8x32xf32> to vector<8x8xf32>
    %363 = arith.truncf %362 : vector<8x8xf32> to vector<8x8xbf16>
    %cst_125 = arith.constant dense<0.000000e+00> : vector<8x8xf32>
    %364 = tpu.matmul %359, %361, %cst_125 {dimension_numbers = #tpu.dot_dimension_numbers<[1], [1], [0], [0], [0, 0, 1, 0], [], []>} : vector<8x8xbf16>, vector<8x8xbf16>, vector<8x8xf32> -> vector<8x8xf32>
    %cst_126 = arith.constant 5.000000e-01 : f32
    %365 = vector.broadcast %cst_126 : f32 to vector<1x8xf32>
    %366 = arith.cmpf ogt, %300, %365 : vector<1x8xf32>
    %cst_127 = arith.constant -1.000000e+09 : f32
    %367 = vector.shape_cast %366 : vector<1x8xi1> to vector<1x8xi1>
    %368 = vector.broadcast %367 : vector<1x8xi1> to vector<8x8xi1>
    %369 = vector.broadcast %cst_127 : f32 to vector<8x8xf32>
    %370 = arith.select %368, %364, %369 : vector<8x8xi1>, vector<8x8xf32>
    %cst_128 = arith.constant dense<0xFF800000> : vector<8xf32>
    %371 = vector.multi_reduction <maximumf>, %370, %cst_128 [1] : vector<8x8xf32> to vector<8xf32>
    %372 = vector.shape_cast %371 : vector<8xf32> to vector<8x1xf32>
    %373 = vector.broadcast %372 : vector<8x1xf32> to vector<8x8xf32>
    %374 = arith.subf %370, %373 : vector<8x8xf32>
    %375 = math.exp %374 : vector<8x8xf32>
    %cst_129 = arith.constant dense<0.000000e+00> : vector<8xf32>
    %376 = vector.multi_reduction <add>, %375, %cst_129 [1] : vector<8x8xf32> to vector<8xf32>
    %377 = vector.shape_cast %376 : vector<8xf32> to vector<8x1xf32>
    %378 = tpu.reciprocal %377 {approx = true} : vector<8x1xf32> -> vector<8x1xf32>
    %379 = vector.broadcast %378 : vector<8x1xf32> to vector<8x8xf32>
    %380 = arith.mulf %375, %379 : vector<8x8xf32>
    %381 = arith.truncf %380 : vector<8x8xf32> to vector<8x8xbf16>
    %cst_130 = arith.constant dense<0.000000e+00> : vector<8x8xf32>
    %382 = tpu.matmul %381, %363, %cst_130 {dimension_numbers = #tpu.dot_dimension_numbers<[1], [0], [0], [1], [0, 0, 1, 1], [], []>} : vector<8x8xbf16>, vector<8x8xbf16>, vector<8x8xf32> -> vector<8x8xf32>
    %c16_131 = arith.constant 16 : index
    %c512_132 = arith.constant 512 : index
    %383 = vector.load %arg5[%c16_131, %c512_132] : memref<32x896xbf16, #tpu.memory_space<vmem>>, vector<8x32xbf16>
    %384 = arith.truncf %382 : vector<8x8xf32> to vector<8x8xbf16>
    %cst_133 = arith.constant dense<0.000000e+00> : vector<8x32xf32>
    %385 = tpu.matmul %384, %383, %cst_133 {dimension_numbers = #tpu.dot_dimension_numbers<[1], [0], [0], [1], [0, 0, 1, 1], [], []>} : vector<8x8xbf16>, vector<8x32xbf16>, vector<8x32xf32> -> vector<8x32xf32>
    %386 = arith.addf %357, %385 : vector<8x32xf32>
    %387 = vector.extract_strided_slice %296 {offsets = [0, 24], sizes = [8, 8], strides = [1, 1]} : vector<8x32xf32> to vector<8x8xf32>
    %388 = arith.truncf %387 : vector<8x8xf32> to vector<8x8xbf16>
    %389 = vector.extract_strided_slice %297 {offsets = [0, 24], sizes = [8, 8], strides = [1, 1]} : vector<8x32xf32> to vector<8x8xf32>
    %390 = arith.truncf %389 : vector<8x8xf32> to vector<8x8xbf16>
    %391 = vector.extract_strided_slice %298 {offsets = [0, 24], sizes = [8, 8], strides = [1, 1]} : vector<8x32xf32> to vector<8x8xf32>
    %392 = arith.truncf %391 : vector<8x8xf32> to vector<8x8xbf16>
    %cst_134 = arith.constant dense<0.000000e+00> : vector<8x8xf32>
    %393 = tpu.matmul %388, %390, %cst_134 {dimension_numbers = #tpu.dot_dimension_numbers<[1], [1], [0], [0], [0, 0, 1, 0], [], []>} : vector<8x8xbf16>, vector<8x8xbf16>, vector<8x8xf32> -> vector<8x8xf32>
    %cst_135 = arith.constant 5.000000e-01 : f32
    %394 = vector.broadcast %cst_135 : f32 to vector<1x8xf32>
    %395 = arith.cmpf ogt, %300, %394 : vector<1x8xf32>
    %cst_136 = arith.constant -1.000000e+09 : f32
    %396 = vector.shape_cast %395 : vector<1x8xi1> to vector<1x8xi1>
    %397 = vector.broadcast %396 : vector<1x8xi1> to vector<8x8xi1>
    %398 = vector.broadcast %cst_136 : f32 to vector<8x8xf32>
    %399 = arith.select %397, %393, %398 : vector<8x8xi1>, vector<8x8xf32>
    %cst_137 = arith.constant dense<0xFF800000> : vector<8xf32>
    %400 = vector.multi_reduction <maximumf>, %399, %cst_137 [1] : vector<8x8xf32> to vector<8xf32>
    %401 = vector.shape_cast %400 : vector<8xf32> to vector<8x1xf32>
    %402 = vector.broadcast %401 : vector<8x1xf32> to vector<8x8xf32>
    %403 = arith.subf %399, %402 : vector<8x8xf32>
    %404 = math.exp %403 : vector<8x8xf32>
    %cst_138 = arith.constant dense<0.000000e+00> : vector<8xf32>
    %405 = vector.multi_reduction <add>, %404, %cst_138 [1] : vector<8x8xf32> to vector<8xf32>
    %406 = vector.shape_cast %405 : vector<8xf32> to vector<8x1xf32>
    %407 = tpu.reciprocal %406 {approx = true} : vector<8x1xf32> -> vector<8x1xf32>
    %408 = vector.broadcast %407 : vector<8x1xf32> to vector<8x8xf32>
    %409 = arith.mulf %404, %408 : vector<8x8xf32>
    %410 = arith.truncf %409 : vector<8x8xf32> to vector<8x8xbf16>
    %cst_139 = arith.constant dense<0.000000e+00> : vector<8x8xf32>
    %411 = tpu.matmul %410, %392, %cst_139 {dimension_numbers = #tpu.dot_dimension_numbers<[1], [0], [0], [1], [0, 0, 1, 1], [], []>} : vector<8x8xbf16>, vector<8x8xbf16>, vector<8x8xf32> -> vector<8x8xf32>
    %c24_140 = arith.constant 24 : index
    %c512_141 = arith.constant 512 : index
    %412 = vector.load %arg5[%c24_140, %c512_141] : memref<32x896xbf16, #tpu.memory_space<vmem>>, vector<8x32xbf16>
    %413 = arith.truncf %411 : vector<8x8xf32> to vector<8x8xbf16>
    %cst_142 = arith.constant dense<0.000000e+00> : vector<8x32xf32>
    %414 = tpu.matmul %413, %412, %cst_142 {dimension_numbers = #tpu.dot_dimension_numbers<[1], [0], [0], [1], [0, 0, 1, 1], [], []>} : vector<8x8xbf16>, vector<8x32xbf16>, vector<8x32xf32> -> vector<8x32xf32>
    %415 = arith.addf %386, %414 : vector<8x32xf32>
    %416 = vector.extract_strided_slice %290 {offsets = [8, 0], sizes = [8, 32], strides = [1, 1]} : vector<16x32xf32> to vector<8x32xf32>
    %417 = vector.extract_strided_slice %295 {offsets = [8, 0], sizes = [8, 32], strides = [1, 1]} : vector<16x64xf32> to vector<8x32xf32>
    %418 = vector.extract_strided_slice %295 {offsets = [8, 32], sizes = [8, 32], strides = [1, 1]} : vector<16x64xf32> to vector<8x32xf32>
    %c1_143 = arith.constant 1 : index
    %c0_144 = arith.constant 0 : index
    %c0_145 = arith.constant 0 : index
    %419 = vector.load %arg4[%c1_143, %c0_144, %c0_145] : memref<2x1x8xf32, #tpu.memory_space<vmem>>, vector<1x1x8xf32>
    %420 = vector.shape_cast %419 : vector<1x1x8xf32> to vector<1x8xf32>
    %421 = vector.extract_strided_slice %416 {offsets = [0, 0], sizes = [8, 8], strides = [1, 1]} : vector<8x32xf32> to vector<8x8xf32>
    %422 = arith.truncf %421 : vector<8x8xf32> to vector<8x8xbf16>
    %423 = vector.extract_strided_slice %417 {offsets = [0, 0], sizes = [8, 8], strides = [1, 1]} : vector<8x32xf32> to vector<8x8xf32>
    %424 = arith.truncf %423 : vector<8x8xf32> to vector<8x8xbf16>
    %425 = vector.extract_strided_slice %418 {offsets = [0, 0], sizes = [8, 8], strides = [1, 1]} : vector<8x32xf32> to vector<8x8xf32>
    %426 = arith.truncf %425 : vector<8x8xf32> to vector<8x8xbf16>
    %cst_146 = arith.constant dense<0.000000e+00> : vector<8x8xf32>
    %427 = tpu.matmul %422, %424, %cst_146 {dimension_numbers = #tpu.dot_dimension_numbers<[1], [1], [0], [0], [0, 0, 1, 0], [], []>} : vector<8x8xbf16>, vector<8x8xbf16>, vector<8x8xf32> -> vector<8x8xf32>
    %cst_147 = arith.constant 5.000000e-01 : f32
    %428 = vector.broadcast %cst_147 : f32 to vector<1x8xf32>
    %429 = arith.cmpf ogt, %420, %428 : vector<1x8xf32>
    %cst_148 = arith.constant -1.000000e+09 : f32
    %430 = vector.shape_cast %429 : vector<1x8xi1> to vector<1x8xi1>
    %431 = vector.broadcast %430 : vector<1x8xi1> to vector<8x8xi1>
    %432 = vector.broadcast %cst_148 : f32 to vector<8x8xf32>
    %433 = arith.select %431, %427, %432 : vector<8x8xi1>, vector<8x8xf32>
    %cst_149 = arith.constant dense<0xFF800000> : vector<8xf32>
    %434 = vector.multi_reduction <maximumf>, %433, %cst_149 [1] : vector<8x8xf32> to vector<8xf32>
    %435 = vector.shape_cast %434 : vector<8xf32> to vector<8x1xf32>
    %436 = vector.broadcast %435 : vector<8x1xf32> to vector<8x8xf32>
    %437 = arith.subf %433, %436 : vector<8x8xf32>
    %438 = math.exp %437 : vector<8x8xf32>
    %cst_150 = arith.constant dense<0.000000e+00> : vector<8xf32>
    %439 = vector.multi_reduction <add>, %438, %cst_150 [1] : vector<8x8xf32> to vector<8xf32>
    %440 = vector.shape_cast %439 : vector<8xf32> to vector<8x1xf32>
    %441 = tpu.reciprocal %440 {approx = true} : vector<8x1xf32> -> vector<8x1xf32>
    %442 = vector.broadcast %441 : vector<8x1xf32> to vector<8x8xf32>
    %443 = arith.mulf %438, %442 : vector<8x8xf32>
    %444 = arith.truncf %443 : vector<8x8xf32> to vector<8x8xbf16>
    %cst_151 = arith.constant dense<0.000000e+00> : vector<8x8xf32>
    %445 = tpu.matmul %444, %426, %cst_151 {dimension_numbers = #tpu.dot_dimension_numbers<[1], [0], [0], [1], [0, 0, 1, 1], [], []>} : vector<8x8xbf16>, vector<8x8xbf16>, vector<8x8xf32> -> vector<8x8xf32>
    %c0_152 = arith.constant 0 : index
    %c512_153 = arith.constant 512 : index
    %446 = vector.load %arg5[%c0_152, %c512_153] : memref<32x896xbf16, #tpu.memory_space<vmem>>, vector<8x32xbf16>
    %447 = arith.truncf %445 : vector<8x8xf32> to vector<8x8xbf16>
    %cst_154 = arith.constant dense<0.000000e+00> : vector<8x32xf32>
    %448 = tpu.matmul %447, %446, %cst_154 {dimension_numbers = #tpu.dot_dimension_numbers<[1], [0], [0], [1], [0, 0, 1, 1], [], []>} : vector<8x8xbf16>, vector<8x32xbf16>, vector<8x32xf32> -> vector<8x32xf32>
    %449 = vector.extract_strided_slice %416 {offsets = [0, 8], sizes = [8, 8], strides = [1, 1]} : vector<8x32xf32> to vector<8x8xf32>
    %450 = arith.truncf %449 : vector<8x8xf32> to vector<8x8xbf16>
    %451 = vector.extract_strided_slice %417 {offsets = [0, 8], sizes = [8, 8], strides = [1, 1]} : vector<8x32xf32> to vector<8x8xf32>
    %452 = arith.truncf %451 : vector<8x8xf32> to vector<8x8xbf16>
    %453 = vector.extract_strided_slice %418 {offsets = [0, 8], sizes = [8, 8], strides = [1, 1]} : vector<8x32xf32> to vector<8x8xf32>
    %454 = arith.truncf %453 : vector<8x8xf32> to vector<8x8xbf16>
    %cst_155 = arith.constant dense<0.000000e+00> : vector<8x8xf32>
    %455 = tpu.matmul %450, %452, %cst_155 {dimension_numbers = #tpu.dot_dimension_numbers<[1], [1], [0], [0], [0, 0, 1, 0], [], []>} : vector<8x8xbf16>, vector<8x8xbf16>, vector<8x8xf32> -> vector<8x8xf32>
    %cst_156 = arith.constant 5.000000e-01 : f32
    %456 = vector.broadcast %cst_156 : f32 to vector<1x8xf32>
    %457 = arith.cmpf ogt, %420, %456 : vector<1x8xf32>
    %cst_157 = arith.constant -1.000000e+09 : f32
    %458 = vector.shape_cast %457 : vector<1x8xi1> to vector<1x8xi1>
    %459 = vector.broadcast %458 : vector<1x8xi1> to vector<8x8xi1>
    %460 = vector.broadcast %cst_157 : f32 to vector<8x8xf32>
    %461 = arith.select %459, %455, %460 : vector<8x8xi1>, vector<8x8xf32>
    %cst_158 = arith.constant dense<0xFF800000> : vector<8xf32>
    %462 = vector.multi_reduction <maximumf>, %461, %cst_158 [1] : vector<8x8xf32> to vector<8xf32>
    %463 = vector.shape_cast %462 : vector<8xf32> to vector<8x1xf32>
    %464 = vector.broadcast %463 : vector<8x1xf32> to vector<8x8xf32>
    %465 = arith.subf %461, %464 : vector<8x8xf32>
    %466 = math.exp %465 : vector<8x8xf32>
    %cst_159 = arith.constant dense<0.000000e+00> : vector<8xf32>
    %467 = vector.multi_reduction <add>, %466, %cst_159 [1] : vector<8x8xf32> to vector<8xf32>
    %468 = vector.shape_cast %467 : vector<8xf32> to vector<8x1xf32>
    %469 = tpu.reciprocal %468 {approx = true} : vector<8x1xf32> -> vector<8x1xf32>
    %470 = vector.broadcast %469 : vector<8x1xf32> to vector<8x8xf32>
    %471 = arith.mulf %466, %470 : vector<8x8xf32>
    %472 = arith.truncf %471 : vector<8x8xf32> to vector<8x8xbf16>
    %cst_160 = arith.constant dense<0.000000e+00> : vector<8x8xf32>
    %473 = tpu.matmul %472, %454, %cst_160 {dimension_numbers = #tpu.dot_dimension_numbers<[1], [0], [0], [1], [0, 0, 1, 1], [], []>} : vector<8x8xbf16>, vector<8x8xbf16>, vector<8x8xf32> -> vector<8x8xf32>
    %c8_161 = arith.constant 8 : index
    %c512_162 = arith.constant 512 : index
    %474 = vector.load %arg5[%c8_161, %c512_162] : memref<32x896xbf16, #tpu.memory_space<vmem>>, vector<8x32xbf16>
    %475 = arith.truncf %473 : vector<8x8xf32> to vector<8x8xbf16>
    %cst_163 = arith.constant dense<0.000000e+00> : vector<8x32xf32>
    %476 = tpu.matmul %475, %474, %cst_163 {dimension_numbers = #tpu.dot_dimension_numbers<[1], [0], [0], [1], [0, 0, 1, 1], [], []>} : vector<8x8xbf16>, vector<8x32xbf16>, vector<8x32xf32> -> vector<8x32xf32>
    %477 = arith.addf %448, %476 : vector<8x32xf32>
    %478 = vector.extract_strided_slice %416 {offsets = [0, 16], sizes = [8, 8], strides = [1, 1]} : vector<8x32xf32> to vector<8x8xf32>
    %479 = arith.truncf %478 : vector<8x8xf32> to vector<8x8xbf16>
    %480 = vector.extract_strided_slice %417 {offsets = [0, 16], sizes = [8, 8], strides = [1, 1]} : vector<8x32xf32> to vector<8x8xf32>
    %481 = arith.truncf %480 : vector<8x8xf32> to vector<8x8xbf16>
    %482 = vector.extract_strided_slice %418 {offsets = [0, 16], sizes = [8, 8], strides = [1, 1]} : vector<8x32xf32> to vector<8x8xf32>
    %483 = arith.truncf %482 : vector<8x8xf32> to vector<8x8xbf16>
    %cst_164 = arith.constant dense<0.000000e+00> : vector<8x8xf32>
    %484 = tpu.matmul %479, %481, %cst_164 {dimension_numbers = #tpu.dot_dimension_numbers<[1], [1], [0], [0], [0, 0, 1, 0], [], []>} : vector<8x8xbf16>, vector<8x8xbf16>, vector<8x8xf32> -> vector<8x8xf32>
    %cst_165 = arith.constant 5.000000e-01 : f32
    %485 = vector.broadcast %cst_165 : f32 to vector<1x8xf32>
    %486 = arith.cmpf ogt, %420, %485 : vector<1x8xf32>
    %cst_166 = arith.constant -1.000000e+09 : f32
    %487 = vector.shape_cast %486 : vector<1x8xi1> to vector<1x8xi1>
    %488 = vector.broadcast %487 : vector<1x8xi1> to vector<8x8xi1>
    %489 = vector.broadcast %cst_166 : f32 to vector<8x8xf32>
    %490 = arith.select %488, %484, %489 : vector<8x8xi1>, vector<8x8xf32>
    %cst_167 = arith.constant dense<0xFF800000> : vector<8xf32>
    %491 = vector.multi_reduction <maximumf>, %490, %cst_167 [1] : vector<8x8xf32> to vector<8xf32>
    %492 = vector.shape_cast %491 : vector<8xf32> to vector<8x1xf32>
    %493 = vector.broadcast %492 : vector<8x1xf32> to vector<8x8xf32>
    %494 = arith.subf %490, %493 : vector<8x8xf32>
    %495 = math.exp %494 : vector<8x8xf32>
    %cst_168 = arith.constant dense<0.000000e+00> : vector<8xf32>
    %496 = vector.multi_reduction <add>, %495, %cst_168 [1] : vector<8x8xf32> to vector<8xf32>
    %497 = vector.shape_cast %496 : vector<8xf32> to vector<8x1xf32>
    %498 = tpu.reciprocal %497 {approx = true} : vector<8x1xf32> -> vector<8x1xf32>
    %499 = vector.broadcast %498 : vector<8x1xf32> to vector<8x8xf32>
    %500 = arith.mulf %495, %499 : vector<8x8xf32>
    %501 = arith.truncf %500 : vector<8x8xf32> to vector<8x8xbf16>
    %cst_169 = arith.constant dense<0.000000e+00> : vector<8x8xf32>
    %502 = tpu.matmul %501, %483, %cst_169 {dimension_numbers = #tpu.dot_dimension_numbers<[1], [0], [0], [1], [0, 0, 1, 1], [], []>} : vector<8x8xbf16>, vector<8x8xbf16>, vector<8x8xf32> -> vector<8x8xf32>
    %c16_170 = arith.constant 16 : index
    %c512_171 = arith.constant 512 : index
    %503 = vector.load %arg5[%c16_170, %c512_171] : memref<32x896xbf16, #tpu.memory_space<vmem>>, vector<8x32xbf16>
    %504 = arith.truncf %502 : vector<8x8xf32> to vector<8x8xbf16>
    %cst_172 = arith.constant dense<0.000000e+00> : vector<8x32xf32>
    %505 = tpu.matmul %504, %503, %cst_172 {dimension_numbers = #tpu.dot_dimension_numbers<[1], [0], [0], [1], [0, 0, 1, 1], [], []>} : vector<8x8xbf16>, vector<8x32xbf16>, vector<8x32xf32> -> vector<8x32xf32>
    %506 = arith.addf %477, %505 : vector<8x32xf32>
    %507 = vector.extract_strided_slice %416 {offsets = [0, 24], sizes = [8, 8], strides = [1, 1]} : vector<8x32xf32> to vector<8x8xf32>
    %508 = arith.truncf %507 : vector<8x8xf32> to vector<8x8xbf16>
    %509 = vector.extract_strided_slice %417 {offsets = [0, 24], sizes = [8, 8], strides = [1, 1]} : vector<8x32xf32> to vector<8x8xf32>
    %510 = arith.truncf %509 : vector<8x8xf32> to vector<8x8xbf16>
    %511 = vector.extract_strided_slice %418 {offsets = [0, 24], sizes = [8, 8], strides = [1, 1]} : vector<8x32xf32> to vector<8x8xf32>
    %512 = arith.truncf %511 : vector<8x8xf32> to vector<8x8xbf16>
    %cst_173 = arith.constant dense<0.000000e+00> : vector<8x8xf32>
    %513 = tpu.matmul %508, %510, %cst_173 {dimension_numbers = #tpu.dot_dimension_numbers<[1], [1], [0], [0], [0, 0, 1, 0], [], []>} : vector<8x8xbf16>, vector<8x8xbf16>, vector<8x8xf32> -> vector<8x8xf32>
    %cst_174 = arith.constant 5.000000e-01 : f32
    %514 = vector.broadcast %cst_174 : f32 to vector<1x8xf32>
    %515 = arith.cmpf ogt, %420, %514 : vector<1x8xf32>
    %cst_175 = arith.constant -1.000000e+09 : f32
    %516 = vector.shape_cast %515 : vector<1x8xi1> to vector<1x8xi1>
    %517 = vector.broadcast %516 : vector<1x8xi1> to vector<8x8xi1>
    %518 = vector.broadcast %cst_175 : f32 to vector<8x8xf32>
    %519 = arith.select %517, %513, %518 : vector<8x8xi1>, vector<8x8xf32>
    %cst_176 = arith.constant dense<0xFF800000> : vector<8xf32>
    %520 = vector.multi_reduction <maximumf>, %519, %cst_176 [1] : vector<8x8xf32> to vector<8xf32>
    %521 = vector.shape_cast %520 : vector<8xf32> to vector<8x1xf32>
    %522 = vector.broadcast %521 : vector<8x1xf32> to vector<8x8xf32>
    %523 = arith.subf %519, %522 : vector<8x8xf32>
    %524 = math.exp %523 : vector<8x8xf32>
    %cst_177 = arith.constant dense<0.000000e+00> : vector<8xf32>
    %525 = vector.multi_reduction <add>, %524, %cst_177 [1] : vector<8x8xf32> to vector<8xf32>
    %526 = vector.shape_cast %525 : vector<8xf32> to vector<8x1xf32>
    %527 = tpu.reciprocal %526 {approx = true} : vector<8x1xf32> -> vector<8x1xf32>
    %528 = vector.broadcast %527 : vector<8x1xf32> to vector<8x8xf32>
    %529 = arith.mulf %524, %528 : vector<8x8xf32>
    %530 = arith.truncf %529 : vector<8x8xf32> to vector<8x8xbf16>
    %cst_178 = arith.constant dense<0.000000e+00> : vector<8x8xf32>
    %531 = tpu.matmul %530, %512, %cst_178 {dimension_numbers = #tpu.dot_dimension_numbers<[1], [0], [0], [1], [0, 0, 1, 1], [], []>} : vector<8x8xbf16>, vector<8x8xbf16>, vector<8x8xf32> -> vector<8x8xf32>
    %c24_179 = arith.constant 24 : index
    %c512_180 = arith.constant 512 : index
    %532 = vector.load %arg5[%c24_179, %c512_180] : memref<32x896xbf16, #tpu.memory_space<vmem>>, vector<8x32xbf16>
    %533 = arith.truncf %531 : vector<8x8xf32> to vector<8x8xbf16>
    %cst_181 = arith.constant dense<0.000000e+00> : vector<8x32xf32>
    %534 = tpu.matmul %533, %532, %cst_181 {dimension_numbers = #tpu.dot_dimension_numbers<[1], [0], [0], [1], [0, 0, 1, 1], [], []>} : vector<8x8xbf16>, vector<8x32xbf16>, vector<8x32xf32> -> vector<8x32xf32>
    %535 = arith.addf %506, %534 : vector<8x32xf32>
    %536 = tpu.concatenate %415, %535 in 0 : vector<8x32xf32>, vector<8x32xf32> -> vector<16x32xf32>
    %537 = arith.addf %260, %536 : vector<16x32xf32>
    %c0_182 = arith.constant 0 : index
    %c512_183 = arith.constant 512 : index
    %538 = vector.load %arg6[%c0_182, %c512_183] : memref<7x896xf32, #tpu.memory_space<vmem>>, vector<1x32xf32>
    %539 = vector.broadcast %538 : vector<1x32xf32> to vector<16x32xf32>
    %540 = arith.addf %537, %539 : vector<16x32xf32>
    %c3 = arith.constant 3 : index
    %c0_184 = arith.constant 0 : index
    %541 = vector.load %arg6[%c3, %c0_184] : memref<7x896xf32, #tpu.memory_space<vmem>>, vector<1x32xf32>
    %c6 = arith.constant 6 : index
    %c0_185 = arith.constant 0 : index
    %542 = vector.load %arg6[%c6, %c0_185] : memref<7x896xf32, #tpu.memory_space<vmem>>, vector<1x32xf32>
    %cst_186 = arith.constant dense<0.000000e+00> : vector<16xf32>
    %543 = vector.multi_reduction <add>, %540, %cst_186 [1] : vector<16x32xf32> to vector<16xf32>
    %544 = vector.shape_cast %543 : vector<16xf32> to vector<16x1xf32>
    %cst_187 = arith.constant 3.200000e+01 : f32
    %545 = vector.broadcast %cst_187 : f32 to vector<16x1xf32>
    %546 = arith.divf %544, %545 : vector<16x1xf32>
    %547 = vector.broadcast %546 : vector<16x1xf32> to vector<16x32xf32>
    %548 = arith.subf %540, %547 : vector<16x32xf32>
    %549 = arith.mulf %548, %548 : vector<16x32xf32>
    %cst_188 = arith.constant dense<0.000000e+00> : vector<16xf32>
    %550 = vector.multi_reduction <add>, %549, %cst_188 [1] : vector<16x32xf32> to vector<16xf32>
    %551 = vector.shape_cast %550 : vector<16xf32> to vector<16x1xf32>
    %cst_189 = arith.constant 0.0322580636 : f32
    %552 = vector.broadcast %cst_189 : f32 to vector<16x1xf32>
    %553 = arith.mulf %551, %552 : vector<16x1xf32>
    %554 = math.sqrt %553 : vector<16x1xf32>
    %555 = vector.broadcast %546 : vector<16x1xf32> to vector<16x32xf32>
    %556 = arith.subf %540, %555 : vector<16x32xf32>
    %557 = vector.broadcast %541 : vector<1x32xf32> to vector<16x32xf32>
    %558 = arith.mulf %557, %556 : vector<16x32xf32>
    %cst_190 = arith.constant 9.99999997E-7 : f32
    %559 = vector.broadcast %cst_190 : f32 to vector<16x1xf32>
    %560 = arith.addf %554, %559 : vector<16x1xf32>
    %561 = vector.broadcast %560 : vector<16x1xf32> to vector<16x32xf32>
    %562 = arith.divf %558, %561 : vector<16x32xf32>
    %563 = vector.broadcast %542 : vector<1x32xf32> to vector<16x32xf32>
    %564 = arith.addf %562, %563 : vector<16x32xf32>
    %c0_191 = arith.constant 0 : index
    %c640 = arith.constant 640 : index
    %565 = vector.load %arg5[%c0_191, %c640] : memref<32x896xbf16, #tpu.memory_space<vmem>>, vector<32x64xbf16>
    %566 = arith.truncf %564 : vector<16x32xf32> to vector<16x32xbf16>
    %cst_192 = arith.constant dense<0.000000e+00> : vector<16x64xf32>
    %567 = tpu.matmul %566, %565, %cst_192 {dimension_numbers = #tpu.dot_dimension_numbers<[1], [0], [0], [1], [0, 0, 1, 1], [], []>} : vector<16x32xbf16>, vector<32x64xbf16>, vector<16x64xf32> -> vector<16x64xf32>
    %c0_193 = arith.constant 0 : index
    %c640_194 = arith.constant 640 : index
    %568 = vector.load %arg6[%c0_193, %c640_194] : memref<7x896xf32, #tpu.memory_space<vmem>>, vector<1x64xf32>
    %569 = vector.broadcast %568 : vector<1x64xf32> to vector<16x64xf32>
    %570 = arith.addf %567, %569 : vector<16x64xf32>
    %cst_195 = arith.constant 0.000000e+00 : f32
    %571 = vector.broadcast %cst_195 : f32 to vector<16x64xf32>
    %572 = arith.maximumf %570, %571 : vector<16x64xf32>
    %c0_196 = arith.constant 0 : index
    %c768 = arith.constant 768 : index
    %573 = vector.load %arg5[%c0_196, %c768] : memref<32x896xbf16, #tpu.memory_space<vmem>>, vector<32x64xbf16>
    %574 = arith.truncf %572 : vector<16x64xf32> to vector<16x64xbf16>
    %cst_197 = arith.constant dense<0.000000e+00> : vector<16x32xf32>
    %575 = tpu.matmul %574, %573, %cst_197 {dimension_numbers = #tpu.dot_dimension_numbers<[1], [1], [0], [0], [0, 0, 1, 0], [], []>} : vector<16x64xbf16>, vector<32x64xbf16>, vector<16x32xf32> -> vector<16x32xf32>
    %576 = arith.addf %540, %575 : vector<16x32xf32>
    %c0_198 = arith.constant 0 : index
    %c768_199 = arith.constant 768 : index
    %577 = vector.load %arg6[%c0_198, %c768_199] : memref<7x896xf32, #tpu.memory_space<vmem>>, vector<1x32xf32>
    %578 = vector.broadcast %577 : vector<1x32xf32> to vector<16x32xf32>
    %579 = arith.addf %576, %578 : vector<16x32xf32>
    %c0_200 = arith.constant 0 : index
    %c0_201 = arith.constant 0 : index
    %580 = vector.load %arg7[%c0_200, %c0_201] : memref<16x32xf32, #tpu.memory_space<vmem>>, vector<16x32xf32>
    tpu.vector_store %arg7[%c0_200, %c0_201], %579 {strides = array<i32>} : memref<16x32xf32, #tpu.memory_space<vmem>>, vector<16x32xf32>,
    return
  }
  func.func @transform_0(%arg0: i32) -> (i32, i32) {
    %c0_i32 = arith.constant 0 : i32
    %c0_i32_0 = arith.constant 0 : i32
    %c0_i32_1 = arith.constant 0 : i32
    return %c0_i32, %c0_i32_0 : i32, i32
  }
  func.func @transform_1(%arg0: i32) -> (i32, i32) {
    %c0_i32 = arith.constant 0 : i32
    %c0_i32_0 = arith.constant 0 : i32
    %c0_i32_1 = arith.constant 0 : i32
    return %c0_i32, %c0_i32_0 : i32, i32
  }
  func.func @transform_2(%arg0: i32) -> (i32, i32, i32) {
    %c0_i32 = arith.constant 0 : i32
    %c0_i32_0 = arith.constant 0 : i32
    %c0_i32_1 = arith.constant 0 : i32
    %c0_i32_2 = arith.constant 0 : i32
    return %c0_i32, %c0_i32_0, %c0_i32_1 : i32, i32, i32
  }
  func.func @transform_3(%arg0: i32) -> (i32, i32, i32) {
    %c0_i32 = arith.constant 0 : i32
    %c0_i32_0 = arith.constant 0 : i32
    %c0_i32_1 = arith.constant 0 : i32
    %c0_i32_2 = arith.constant 0 : i32
    return %c0_i32, %c0_i32_0, %c0_i32_1 : i32, i32, i32
  }
  func.func @transform_4(%arg0: i32) -> (i32, i32) {
    %c0_i32 = arith.constant 0 : i32
    %c0_i32_0 = arith.constant 0 : i32
    %c0_i32_1 = arith.constant 0 : i32
    return %c0_i32, %c0_i32_0 : i32, i32
  }
  func.func @transform_5(%arg0: i32) -> (i32, i32) {
    %c0_i32 = arith.constant 0 : i32
    %c0_i32_0 = arith.constant 0 : i32
    %c0_i32_1 = arith.constant 0 : i32
    return %c0_i32, %c0_i32_0 : i32, i32
  }
  func.func @transform_6(%arg0: i32) -> (i32, i32) {
    %c0_i32 = arith.constant 0 : i32
    %c0_i32_0 = arith.constant 0 : i32
    %c0_i32_1 = arith.constant 0 : i32
    return %c0_i32, %c0_i32_0 : i32, i32
  }
}

</mosaic_0001>

<llo_original>
// kernel: tpu_custom_call.1
$region0: #{tpu_custom_call.1}
  #allocation0 [shape = 'u32[]', space=smem, size = 0x4, offset = 0x4, fixed_abs, tag = 'smem constant byte address 0x4 - core index']
  #allocation1 [shape = 'u32[144,128]{1,0:T(1,128)}', space=vmem, size = 0x12000, scoped, tag = 'internal scratch']
  %s0 = inlined_call_operand.hbm [shape: f32[16,32], index: 0, kind: input, shape index: {}]
  %s1 = inlined_call_operand.hbm [shape: bf16[16,32], index: 1, kind: input, shape index: {}]
  %s2 = inlined_call_operand.hbm [shape: f32[2,8,8], index: 2, kind: input, shape index: {}]
  %s3 = inlined_call_operand.vmem [shape: f32[2,1,8], index: 3, kind: input, shape index: {}]
  %s4 = inlined_call_operand.hbm [shape: bf16[32,896], index: 4, kind: input, shape index: {}]
  %s5 = inlined_call_operand.hbm [shape: f32[7,896], index: 5, kind: input, shape index: {}]
  %s6 = inlined_call_operand.hbm [shape: f32[16,32], index: 6, kind: output, shape index: {}]
  %s7 = sld [smem:[#allocation0]]
  $region54: #{tpu_custom_call.1} parent=0
    _
  %s9 = ssub.s32 1, %s7
  %s10 = scalar_select 0, %s9, %s7
  $region1: #{tpu_custom_call.1} parent=0
    #allocation2 [shape = 'u8[8192]{0}', space=vmem, size = 0x2000, scoped, tag = 'input window, operand 0, single buffered']
    #allocation3 [shape = 's32[1]{0}', space=sflag, size = 0x4, scoped, tag = 'scoped memory for tpu_custom_call.1']
    #allocation4 [shape = 's32[1]{0}', space=sflag, size = 0x4, scoped, tag = 'scoped memory for tpu_custom_call.1']
    #allocation5 [shape = 'u8[4096]{0}', space=vmem, size = 0x1000, scoped, tag = 'input window, operand 1, single buffered']
    #allocation6 [shape = 's32[1]{0}', space=sflag, size = 0x4, scoped, tag = 'scoped memory for tpu_custom_call.1']
    #allocation7 [shape = 'u8[8192]{0}', space=vmem, size = 0x2000, scoped, tag = 'input window, operand 2, single buffered']
    #allocation8 [shape = 'u8[57344]{0}', space=vmem, size = 0xe000, scoped, tag = 'input window, operand 4, single buffered']
    #allocation9 [shape = 's32[1]{0}', space=sflag, size = 0x4, scoped, tag = 'scoped memory for tpu_custom_call.1']
    #allocation10 [shape = 'u8[28672]{0}', space=vmem, size = 0x7000, scoped, tag = 'input window, operand 5, single buffered']
    #allocation11 [shape = 'u8[8192]{0}', space=vmem, size = 0x2000, scoped, tag = 'output window, operand 0, single buffered']
    %11 = vsyncpa [#allocation3], 0
    %12 = vsyncpa [#allocation6], 0
    %13 = vsyncpa [#allocation9], 0
    %14 = vsyncpa [#allocation4], 0
    // Predicated region
    $region2: #{tpu_custom_call.1} parent=1 // pred_check
      _
    $region3: #{tpu_custom_call.1} parent=1 // pred_check_branch
      %16 = sbr.rel (0) target = $region5
    $region4: #{tpu_custom_call.1} parent=1 // pred_region
      %s18 = ssub.s32 256, 256
      %19 = vsyncadd [#allocation3], %s18
      %s20 = sshll.u32 [#allocation2], 4
      %s21 = int_to_ptr.vmem [resolvable:$true] %s20
      %26 = dma.hbm_to_vmem [thread:$0]  %s0, 256, %s21, [#allocation3], 128, 128, 8
    $region5: #{tpu_custom_call.1} parent=1 // pred_fallthru
      _
    // Predicated region
    $region6: #{tpu_custom_call.1} parent=1 // pred_check
      _
    $region7: #{tpu_custom_call.1} parent=1 // pred_check_branch
      %28 = sbr.rel (0) target = $region9
    $region8: #{tpu_custom_call.1} parent=1 // pred_region
      %s30 = ssub.s32 128, 128
      %31 = vsyncadd [#allocation6], %s30
      %s32 = sshll.u32 [#allocation5], 4
      %s33 = int_to_ptr.vmem [resolvable:$true] %s32
      %38 = dma.hbm_to_vmem [thread:$0]  %s1, 128, %s33, [#allocation6], 64, 64, 4
    $region9: #{tpu_custom_call.1} parent=1 // pred_fallthru
      _
    // Predicated region
    $region10: #{tpu_custom_call.1} parent=1 // pred_check
      _
    $region11: #{tpu_custom_call.1} parent=1 // pred_check_branch
      %40 = sbr.rel (0) target = $region13
    $region12: #{tpu_custom_call.1} parent=1 // pred_region
      %s42 = ssub.s32 256, 256
      %43 = vsyncadd [#allocation6], %s42
      %s44 = sshll.u32 [#allocation7], 4
      %s45 = int_to_ptr.vmem [resolvable:$true] %s44
      %50 = dma.hbm_to_vmem [thread:$0]  %s2, 256, %s45, [#allocation6], 128, 128, 8
    $region13: #{tpu_custom_call.1} parent=1 // pred_fallthru
      _
    // Predicated region
    $region14: #{tpu_custom_call.1} parent=1 // pred_check
      _
    $region15: #{tpu_custom_call.1} parent=1 // pred_check_branch
      %52 = sbr.rel (0) target = $region17
    $region16: #{tpu_custom_call.1} parent=1 // pred_region
      _
    $region17: #{tpu_custom_call.1} parent=1 // pred_fallthru
      _
    // Predicated region
    $region18: #{tpu_custom_call.1} parent=1 // pred_check
      _
    $region19: #{tpu_custom_call.1} parent=1 // pred_check_branch
      %54 = sbr.rel (0) target = $region21
    $region20: #{tpu_custom_call.1} parent=1 // pred_region
      %s56 = ssub.s32 1792, 1792
      %57 = vsyncadd [#allocation9], %s56
      %s58 = sshll.u32 [#allocation8], 4
      %s59 = int_to_ptr.vmem [resolvable:$true] %s58
      %64 = dma.hbm_to_vmem [thread:$0]  %s4, 1792, %s59, [#allocation9], 448, 448, 28
    $region21: #{tpu_custom_call.1} parent=1 // pred_fallthru
      _
    // Predicated region
    $region22: #{tpu_custom_call.1} parent=1 // pred_check
      _
    $region23: #{tpu_custom_call.1} parent=1 // pred_check_branch
      %66 = sbr.rel (0) target = $region25
    $region24: #{tpu_custom_call.1} parent=1 // pred_region
      %s68 = ssub.s32 896, 896
      %69 = vsyncadd [#allocation9], %s68
      %s71 = sshll.u32 [#allocation10], 4
      %s72 = int_to_ptr.vmem [resolvable:$true] %s71
      %74 = dma.hbm_to_vmem [thread:$0]  %s5, 896, %s72, [#allocation9]
    $region25: #{tpu_custom_call.1} parent=1 // pred_fallthru
      _
    // Predicated region
    $region26: #{tpu_custom_call.1} parent=1 // pred_check
      _
    $region27: #{tpu_custom_call.1} parent=1 // pred_check_branch
      %76 = sbr.rel (0) target = $region29
    $region28: #{tpu_custom_call.1} parent=1 // pred_region
      %77 = dma.done [#allocation3], 256
    $region29: #{tpu_custom_call.1} parent=1 // pred_fallthru
      _
    // Predicated region
    $region30: #{tpu_custom_call.1} parent=1 // pred_check
      _
    $region31: #{tpu_custom_call.1} parent=1 // pred_check_branch
      %79 = sbr.rel (0) target = $region33
    $region32: #{tpu_custom_call.1} parent=1 // pred_region
      %80 = dma.done [#allocation6], 128
    $region33: #{tpu_custom_call.1} parent=1 // pred_fallthru
      _
    // Predicated region
    $region34: #{tpu_custom_call.1} parent=1 // pred_check
      _
    $region35: #{tpu_custom_call.1} parent=1 // pred_check_branch
      %82 = sbr.rel (0) target = $region37
    $region36: #{tpu_custom_call.1} parent=1 // pred_region
      %83 = dma.done [#allocation6], 256
    $region37: #{tpu_custom_call.1} parent=1 // pred_fallthru
      _
    // Predicated region
    $region38: #{tpu_custom_call.1} parent=1 // pred_check
      _
    $region39: #{tpu_custom_call.1} parent=1 // pred_check_branch
      %85 = sbr.rel (0) target = $region41
    $region40: #{tpu_custom_call.1} parent=1 // pred_region
      %86 = dma.done [#allocation9], 1792
    $region41: #{tpu_custom_call.1} parent=1 // pred_fallthru
      _
    // Predicated region
    $region42: #{tpu_custom_call.1} parent=1 // pred_check
      _
    $region43: #{tpu_custom_call.1} parent=1 // pred_check_branch
      %88 = sbr.rel (0) target = $region45
    $region44: #{tpu_custom_call.1} parent=1 // pred_region
      %89 = dma.done [#allocation9], 896
    $region45: #{tpu_custom_call.1} parent=1 // pred_fallthru
      _
    %v91 = vld [vmem:[#allocation2] sm:$0xff]
    %v92 = vld [vmem:[#allocation2 + $0x8] sm:$0xff]
    %v93 = vld [vmem:[#allocation5] sm:$0xf]
    %v94 = vld [vmem:[#allocation5 + $0x4] sm:$0xf]
    %v95 = vld [vmem:[#allocation10 + $0x1] ss:$0 sm:$0xff]
    %v96 = vld [vmem:[#allocation10 + $0x4] ss:$0 sm:$0xff]
    %vm97 = vcmask 261120
    %v98 = vsel %vm97, %v91, 0.0
    %99 = vadd.xlane.f32.xlu0 %v98
    %v100 = vpop.xlane.xlu0 %99
    %v101 = vsel %vm97, %v92, 0.0
    %102 = vadd.xlane.f32.xlu0 %v101
    %v103 = vpop.xlane.xlu0 %102
    %v104 = vrcp.pop 32.0
    %v105 = vmul.f32 %v100, %v104
    %v106 = vmul.f32 %v103, %v104
    %v107 = vsub.f32 %v91, %v105
    %v108 = vsub.f32 %v92, %v106
    %v109 = vmul.f32 %v107, %v107
    %v110 = vmul.f32 %v108, %v108
    %v111 = vsel %vm97, %v109, 0.0
    %112 = vadd.xlane.f32.xlu0 %v111
    %v113 = vpop.xlane.xlu0 %112
    %v114 = vsel %vm97, %v110, 0.0
    %115 = vadd.xlane.f32.xlu0 %v114
    %v116 = vpop.xlane.xlu0 %115
    %v117 = vmul.f32 %v113, 0.032258064
    %v118 = vmul.f32 %v116, 0.032258064
    %v119 = vrsqrt.pop %v117
    %v120 = vmul.f32 %v117, %v119
    %vm121 = vcmp.eq.f32.partialorder %v117, inf
    %v122 = vsel %vm121, %v117, %v120
    %vm123 = vcmp.eq.f32.partialorder %v117, 0.0
    %v124 = vand.u32 %v117, 2147483648
    %v125 = vsel %vm123, %v124, %v122
    %v126 = vrsqrt.pop %v118
    %v127 = vmul.f32 %v118, %v126
    %vm128 = vcmp.eq.f32.partialorder %v118, inf
    %v129 = vsel %vm128, %v118, %v127
    %vm130 = vcmp.eq.f32.partialorder %v118, 0.0
    %v131 = vand.u32 %v118, 2147483648
    %v132 = vsel %vm130, %v131, %v129
    %v133 = vmul.f32 %v95, %v107
    %v134 = vmul.f32 %v95, %v108
    %v135 = vadd.f32 %v125, 1e-06
    %v136 = vadd.f32 %v132, 1e-06
    %v137 = vrcp.pop %v135
    %v138 = vmul.f32 %v133, %v137
    %v139 = vrcp.pop %v136
    %v140 = vmul.f32 %v134, %v139
    %v141 = vadd.f32 %v138, %v96
    %v142 = vadd.f32 %v140, %v96
    %v143 = vld [vmem:[#allocation8] sm:$0xf]
    %v144 = vld [vmem:[#allocation8 + $0x1c] sm:$0xf]
    %v145 = vld [vmem:[#allocation8 + $0x38] sm:$0xf]
    %v146 = vld [vmem:[#allocation8 + $0x54] sm:$0xf]
    %v147 = vpack.c.bf16 %v142, %v141
    %v148 = vld [vmem:[#allocation10] ss:$0 sm:$0xff]
    %v153 = vunpack.c.l.b16 %v143
    %v154 = vunpack.c.l.b16 %v144
    %v155 = vunpack.c.l.b16 %v145
    %v156 = vunpack.c.l.b16 %v146
    %v157 = vpack.c.b16 %v154, %v153
    %v158 = vpack.c.b16 %v156, %v155
    %v162 = vsel %vm97, %v147, 0
    %164 = vmatprep.subr.bf16.mxu0 0
    %165 = vmatpush1.bf16.msra.mxu0 %v157
    %166 = vmatprep.subr.bf16.mxu0 0
    %167 = vmatpush1.bf16.msra.mxu0 %v158
    %168 = vmatprep.subr.bf16.mxu0 0
    %169 = vmatpush1.bf16.msra.mxu0 0
    %170 = vmatprep.subr.bf16.mxu0 0
    %171 = vmatpush1.bf16.msra.mxu0 0
    %172 = vmatprep.subr.bf16.mxu0 0
    %173 = vmatpush1.bf16.msra.mxu0 0
    %174 = vmatprep.subr.bf16.mxu0 0
    %175 = vmatpush1.bf16.msra.mxu0 0
    %176 = vmatprep.subr.bf16.mxu0 0
    %177 = vmatpush1.bf16.msra.mxu0 0
    %178 = vmatprep.subr.bf16.mxu0 0
    %179 = vmatpush1.bf16.msra.mxu0 0
    %180 = vmatprep.subr.bf16.mxu0 0
    %181 = vmatpush1.bf16.msra.mxu0 0
    %182 = vmatprep.subr.bf16.mxu0 0
    %183 = vmatpush1.bf16.msra.mxu0 0
    %184 = vmatprep.subr.bf16.mxu0 0
    %185 = vmatpush1.bf16.msra.mxu0 0
    %186 = vmatprep.subr.bf16.mxu0 0
    %187 = vmatpush1.bf16.msra.mxu0 0
    %188 = vmatprep.subr.bf16.mxu0 0
    %189 = vmatpush1.bf16.msra.mxu0 0
    %190 = vmatprep.subr.bf16.mxu0 0
    %191 = vmatpush1.bf16.msra.mxu0 0
    %192 = vmatprep.subr.bf16.mxu0 0
    %193 = vmatpush1.bf16.msra.mxu0 0
    %194 = vmatprep.subr.bf16.mxu0 0
    %195 = vmatpush1.bf16.msra.mxu0 0
    %196 = vmatprep.mubr.bf16.mxu0 0
    %197 = vmatmul.mubr.bf16.gmra.mrb[0].mxu0 %v162
    %v198 = vpop.f32.mrb[0].mxu0
    %v199 = vadd.f32 %v148, %v198
    %v200 = vpop.f32.mrb[0].mxu0
    %v201 = vpop.f32.mrb[0].mxu0
    %v202 = vadd.f32 %v148, %v201
    %v203 = vpop.f32.mrb[0].mxu0
    %204 = vdwg.mxu0
    %v205 = vld [vmem:[#allocation7] sm:$0xff]
    %v206 = vpack.c.bf16 %v199, %v199
    %208 = vrot.lane.b32.xlu0 %v206, 96
    %v209 = vpop.permute.xlu0 %208
    %vm210 = vcmask 64512
    %v212 = vsel %vm210, %v206, 0
    %v215 = vsel %vm210, %v209, 0
    %217 = vmatprep.subr.bf16.mxu0 0
    %218 = vmatpush1.bf16.xpose.msra.mxu0 %v215
    %219 = vmatprep.subr.bf16.mxu0 0
    %220 = vmatpush1.bf16.xpose.msra.mxu0 0
    %221 = vmatprep.subr.bf16.mxu0 0
    %222 = vmatpush1.bf16.xpose.msra.mxu0 0
    %223 = vmatprep.subr.bf16.mxu0 0
    %224 = vmatpush1.bf16.xpose.msra.mxu0 0
    %225 = vmatprep.subr.bf16.mxu0 0
    %226 = vmatpush1.bf16.xpose.msra.mxu0 0
    %227 = vmatprep.subr.bf16.mxu0 0
    %228 = vmatpush1.bf16.xpose.msra.mxu0 0
    %229 = vmatprep.subr.bf16.mxu0 0
    %230 = vmatpush1.bf16.xpose.msra.mxu0 0
    %231 = vmatprep.subr.bf16.mxu0 0
    %232 = vmatpush1.bf16.xpose.msra.mxu0 0
    %233 = vmatprep.subr.bf16.mxu0 0
    %234 = vmatpush1.bf16.xpose.msra.mxu0 0
    %235 = vmatprep.subr.bf16.mxu0 0
    %236 = vmatpush1.bf16.xpose.msra.mxu0 0
    %237 = vmatprep.subr.bf16.mxu0 0
    %238 = vmatpush1.bf16.xpose.msra.mxu0 0
    %239 = vmatprep.subr.bf16.mxu0 0
    %240 = vmatpush1.bf16.xpose.msra.mxu0 0
    %241 = vmatprep.subr.bf16.mxu0 0
    %242 = vmatpush1.bf16.xpose.msra.mxu0 0
    %243 = vmatprep.subr.bf16.mxu0 0
    %244 = vmatpush1.bf16.xpose.msra.mxu0 0
    %245 = vmatprep.subr.bf16.mxu0 0
    %246 = vmatpush1.bf16.xpose.msra.mxu0 0
    %247 = vmatprep.subr.bf16.mxu0 0
    %248 = vmatpush1.bf16.xpose.msra.mxu0 0
    %249 = vmatprep.mubr.bf16.mxu0 0
    %250 = vmatmul.mubr.bf16.gmra.mrb[0].mxu0 %v212
    %v251 = vpop.f32.mrb[0].mxu0
    %v252 = vadd.f32 0.0, %v251
    %v253 = vpop.f32.mrb[0].mxu0
    %v254 = vpop.f32.mrb[0].mxu0
    %v255 = vpop.f32.mrb[0].mxu0
    %256 = vdwg.mxu0
    %vm257 = vcmp.gt.f32.partialorder %v205, 0.5
    %v258 = vsel %vm257, %v252, -1e+09
    %v259 = vsel %vm210, %v258, -inf
    %260 = vmax.xlane.f32.xlu0 %v259
    %v261 = vpop.xlane.xlu0 %260
    %v262 = vsub.f32 %v258, %v261
    %v263 = vmul.f32 %v262, 1.442695
    %v264 = vpow.pop %v263
    %v265 = vsel %vm210, %v264, 0.0
    %266 = vadd.xlane.f32.xlu0 %v265
    %v267 = vpop.xlane.xlu0 %266
    %v268 = vrcp.pop %v267
    %v269 = vmul.f32 %v264, %v268
    %v270 = vpack.c.bf16 %v269, %v269
    %271 = vrot.lane.b32.xlu0 %v206, 64
    %v272 = vpop.permute.xlu0 %271
    %v274 = vsel %vm210, %v270, 0
    %vm276 = vcmask 1043456
    %v278 = vsel %vm276, %v272, 0
    %280 = vmatprep.subr.bf16.mxu0 0
    %281 = vmatpush1.bf16.msra.mxu0 %v278
    %282 = vmatprep.subr.bf16.mxu0 0
    %283 = vmatpush1.bf16.msra.mxu0 0
    %284 = vmatprep.subr.bf16.mxu0 0
    %285 = vmatpush1.bf16.msra.mxu0 0
    %286 = vmatprep.subr.bf16.mxu0 0
    %287 = vmatpush1.bf16.msra.mxu0 0
    %288 = vmatprep.subr.bf16.mxu0 0
    %289 = vmatpush1.bf16.msra.mxu0 0
    %290 = vmatprep.subr.bf16.mxu0 0
    %291 = vmatpush1.bf16.msra.mxu0 0
    %292 = vmatprep.subr.bf16.mxu0 0
    %293 = vmatpush1.bf16.msra.mxu0 0
    %294 = vmatprep.subr.bf16.mxu0 0
    %295 = vmatpush1.bf16.msra.mxu0 0
    %296 = vmatprep.subr.bf16.mxu0 0
    %297 = vmatpush1.bf16.msra.mxu0 0
    %298 = vmatprep.subr.bf16.mxu0 0
    %299 = vmatpush1.bf16.msra.mxu0 0
    %300 = vmatprep.subr.bf16.mxu0 0
    %301 = vmatpush1.bf16.msra.mxu0 0
    %302 = vmatprep.subr.bf16.mxu0 0
    %303 = vmatpush1.bf16.msra.mxu0 0
    %304 = vmatprep.subr.bf16.mxu0 0
    %305 = vmatpush1.bf16.msra.mxu0 0
    %306 = vmatprep.subr.bf16.mxu0 0
    %307 = vmatpush1.bf16.msra.mxu0 0
    %308 = vmatprep.subr.bf16.mxu0 0
    %309 = vmatpush1.bf16.msra.mxu0 0
    %310 = vmatprep.subr.bf16.mxu0 0
    %311 = vmatpush1.bf16.msra.mxu0 0
    %312 = vmatprep.mubr.bf16.mxu0 0
    %313 = vmatmul.mubr.bf16.gmra.mrb[0].mxu0 %v274
    %v314 = vpop.f32.mrb[0].mxu0
    %v315 = vadd.f32 0.0, %v314
    %v316 = vpop.f32.mrb[0].mxu0
    %v317 = vpop.f32.mrb[0].mxu0
    %v318 = vpop.f32.mrb[0].mxu0
    %319 = vdwg.mxu0
    %v320 = vld [vmem:[#allocation8 + $0x4] sm:$0xf]
    %v321 = vpack.c.bf16 %v315, %v315
    %322 = vrot.lane.b32.xlu0 %v206, 120
    %v323 = vpop.permute.xlu0 %322
    %324 = vrot.lane.b32.xlu0 %v206, 88
    %v325 = vpop.permute.xlu0 %324
    %v327 = vsel %vm210, %v323, 0
    %v330 = vsel %vm210, %v325, 0
    %332 = vmatprep.subr.bf16.mxu0 0
    %333 = vmatpush1.bf16.xpose.msra.mxu0 %v330
    %334 = vmatprep.subr.bf16.mxu0 0
    %335 = vmatpush1.bf16.xpose.msra.mxu0 0
    %336 = vmatprep.subr.bf16.mxu0 0
    %337 = vmatpush1.bf16.xpose.msra.mxu0 0
    %338 = vmatprep.subr.bf16.mxu0 0
    %339 = vmatpush1.bf16.xpose.msra.mxu0 0
    %340 = vmatprep.subr.bf16.mxu0 0
    %341 = vmatpush1.bf16.xpose.msra.mxu0 0
    %342 = vmatprep.subr.bf16.mxu0 0
    %343 = vmatpush1.bf16.xpose.msra.mxu0 0
    %344 = vmatprep.subr.bf16.mxu0 0
    %345 = vmatpush1.bf16.xpose.msra.mxu0 0
    %346 = vmatprep.subr.bf16.mxu0 0
    %347 = vmatpush1.bf16.xpose.msra.mxu0 0
    %348 = vmatprep.subr.bf16.mxu0 0
    %349 = vmatpush1.bf16.xpose.msra.mxu0 0
    %350 = vmatprep.subr.bf16.mxu0 0
    %351 = vmatpush1.bf16.xpose.msra.mxu0 0
    %352 = vmatprep.subr.bf16.mxu0 0
    %353 = vmatpush1.bf16.xpose.msra.mxu0 0
    %354 = vmatprep.subr.bf16.mxu0 0
    %355 = vmatpush1.bf16.xpose.msra.mxu0 0
    %356 = vmatprep.subr.bf16.mxu0 0
    %357 = vmatpush1.bf16.xpose.msra.mxu0 0
    %358 = vmatprep.subr.bf16.mxu0 0
    %359 = vmatpush1.bf16.xpose.msra.mxu0 0
    %360 = vmatprep.subr.bf16.mxu0 0
    %361 = vmatpush1.bf16.xpose.msra.mxu0 0
    %362 = vmatprep.subr.bf16.mxu0 0
    %363 = vmatpush1.bf16.xpose.msra.mxu0 0
    %364 = vmatprep.mubr.bf16.mxu0 0
    %365 = vmatmul.mubr.bf16.gmra.mrb[0].mxu0 %v327
    %v366 = vpop.f32.mrb[0].mxu0
    %v367 = vadd.f32 0.0, %v366
    %v368 = vpop.f32.mrb[0].mxu0
    %v369 = vpop.f32.mrb[0].mxu0
    %v370 = vpop.f32.mrb[0].mxu0
    %371 = vdwg.mxu0
    %v372 = vsel %vm257, %v367, -1e+09
    %v373 = vsel %vm210, %v372, -inf
    %374 = vmax.xlane.f32.xlu0 %v373
    %v375 = vpop.xlane.xlu0 %374
    %v376 = vsub.f32 %v372, %v375
    %v377 = vmul.f32 %v376, 1.442695
    %v378 = vpow.pop %v377
    %v379 = vsel %vm210, %v378, 0.0
    %380 = vadd.xlane.f32.xlu0 %v379
    %v381 = vpop.xlane.xlu0 %380
    %v382 = vrcp.pop %v381
    %v383 = vmul.f32 %v378, %v382
    %v384 = vpack.c.bf16 %v383, %v383
    %385 = vrot.lane.b32.xlu0 %v206, 56
    %v386 = vpop.permute.xlu0 %385
    %v388 = vsel %vm210, %v384, 0
    %v391 = vsel %vm276, %v386, 0
    %393 = vmatprep.subr.bf16.mxu0 0
    %394 = vmatpush1.bf16.msra.mxu0 %v391
    %395 = vmatprep.subr.bf16.mxu0 0
    %396 = vmatpush1.bf16.msra.mxu0 0
    %397 = vmatprep.subr.bf16.mxu0 0
    %398 = vmatpush1.bf16.msra.mxu0 0
    %399 = vmatprep.subr.bf16.mxu0 0
    %400 = vmatpush1.bf16.msra.mxu0 0
    %401 = vmatprep.subr.bf16.mxu0 0
    %402 = vmatpush1.bf16.msra.mxu0 0
    %403 = vmatprep.subr.bf16.mxu0 0
    %404 = vmatpush1.bf16.msra.mxu0 0
    %405 = vmatprep.subr.bf16.mxu0 0
    %406 = vmatpush1.bf16.msra.mxu0 0
    %407 = vmatprep.subr.bf16.mxu0 0
    %408 = vmatpush1.bf16.msra.mxu0 0
    %409 = vmatprep.subr.bf16.mxu0 0
    %410 = vmatpush1.bf16.msra.mxu0 0
    %411 = vmatprep.subr.bf16.mxu0 0
    %412 = vmatpush1.bf16.msra.mxu0 0
    %413 = vmatprep.subr.bf16.mxu0 0
    %414 = vmatpush1.bf16.msra.mxu0 0
    %415 = vmatprep.subr.bf16.mxu0 0
    %416 = vmatpush1.bf16.msra.mxu0 0
    %417 = vmatprep.subr.bf16.mxu0 0
    %418 = vmatpush1.bf16.msra.mxu0 0
    %419 = vmatprep.subr.bf16.mxu0 0
    %420 = vmatpush1.bf16.msra.mxu0 0
    %421 = vmatprep.subr.bf16.mxu0 0
    %422 = vmatpush1.bf16.msra.mxu0 0
    %423 = vmatprep.subr.bf16.mxu0 0
    %424 = vmatpush1.bf16.msra.mxu0 0
    %425 = vmatprep.mubr.bf16.mxu0 0
    %426 = vmatmul.mubr.bf16.gmra.mrb[0].mxu0 %v388
    %v427 = vpop.f32.mrb[0].mxu0
    %v428 = vadd.f32 0.0, %v427
    %v429 = vpop.f32.mrb[0].mxu0
    %v430 = vpop.f32.mrb[0].mxu0
    %v431 = vpop.f32.mrb[0].mxu0
    %432 = vdwg.mxu0
    %v433 = vld [vmem:[#allocation8 + $0x20] sm:$0xf]
    %v434 = vpack.c.bf16 %v428, %v428
    %v436 = vsel %vm210, %v434, 0
    %v439 = vsel %vm276, %v433, 0
    %441 = vmatprep.subr.bf16.mxu0 0
    %442 = vmatpush1.bf16.msra.mxu0 %v439
    %443 = vmatprep.subr.bf16.mxu0 0
    %444 = vmatpush1.bf16.msra.mxu0 0
    %445 = vmatprep.subr.bf16.mxu0 0
    %446 = vmatpush1.bf16.msra.mxu0 0
    %447 = vmatprep.subr.bf16.mxu0 0
    %448 = vmatpush1.bf16.msra.mxu0 0
    %449 = vmatprep.subr.bf16.mxu0 0
    %450 = vmatpush1.bf16.msra.mxu0 0
    %451 = vmatprep.subr.bf16.mxu0 0
    %452 = vmatpush1.bf16.msra.mxu0 0
    %453 = vmatprep.subr.bf16.mxu0 0
    %454 = vmatpush1.bf16.msra.mxu0 0
    %455 = vmatprep.subr.bf16.mxu0 0
    %456 = vmatpush1.bf16.msra.mxu0 0
    %457 = vmatprep.subr.bf16.mxu0 0
    %458 = vmatpush1.bf16.msra.mxu0 0
    %459 = vmatprep.subr.bf16.mxu0 0
    %460 = vmatpush1.bf16.msra.mxu0 0
    %461 = vmatprep.subr.bf16.mxu0 0
    %462 = vmatpush1.bf16.msra.mxu0 0
    %463 = vmatprep.subr.bf16.mxu0 0
    %464 = vmatpush1.bf16.msra.mxu0 0
    %465 = vmatprep.subr.bf16.mxu0 0
    %466 = vmatpush1.bf16.msra.mxu0 0
    %467 = vmatprep.subr.bf16.mxu0 0
    %468 = vmatpush1.bf16.msra.mxu0 0
    %469 = vmatprep.subr.bf16.mxu0 0
    %470 = vmatpush1.bf16.msra.mxu0 0
    %471 = vmatprep.subr.bf16.mxu0 0
    %472 = vmatpush1.bf16.msra.mxu0 0
    %473 = vmatprep.mubr.bf16.mxu0 0
    %474 = vmatmul.mubr.bf16.gmra.mrb[0].mxu0 %v436
    %v475 = vpop.f32.mrb[0].mxu0
    %v476 = vadd.f32 0.0, %v475
    %v477 = vpop.f32.mrb[0].mxu0
    %v478 = vpop.f32.mrb[0].mxu0
    %v479 = vpop.f32.mrb[0].mxu0
    %480 = vdwg.mxu0
    %v482 = vsel %vm210, %v321, 0
    %v485 = vsel %vm276, %v320, 0
    %487 = vmatprep.subr.bf16.mxu0 0
    %488 = vmatpush1.bf16.msra.mxu0 %v485
    %489 = vmatprep.subr.bf16.mxu0 0
    %490 = vmatpush1.bf16.msra.mxu0 0
    %491 = vmatprep.subr.bf16.mxu0 0
    %492 = vmatpush1.bf16.msra.mxu0 0
    %493 = vmatprep.subr.bf16.mxu0 0
    %494 = vmatpush1.bf16.msra.mxu0 0
    %495 = vmatprep.subr.bf16.mxu0 0
    %496 = vmatpush1.bf16.msra.mxu0 0
    %497 = vmatprep.subr.bf16.mxu0 0
    %498 = vmatpush1.bf16.msra.mxu0 0
    %499 = vmatprep.subr.bf16.mxu0 0
    %500 = vmatpush1.bf16.msra.mxu0 0
    %501 = vmatprep.subr.bf16.mxu0 0
    %502 = vmatpush1.bf16.msra.mxu0 0
    %503 = vmatprep.subr.bf16.mxu0 0
    %504 = vmatpush1.bf16.msra.mxu0 0
    %505 = vmatprep.subr.bf16.mxu0 0
    %506 = vmatpush1.bf16.msra.mxu0 0
    %507 = vmatprep.subr.bf16.mxu0 0
    %508 = vmatpush1.bf16.msra.mxu0 0
    %509 = vmatprep.subr.bf16.mxu0 0
    %510 = vmatpush1.bf16.msra.mxu0 0
    %511 = vmatprep.subr.bf16.mxu0 0
    %512 = vmatpush1.bf16.msra.mxu0 0
    %513 = vmatprep.subr.bf16.mxu0 0
    %514 = vmatpush1.bf16.msra.mxu0 0
    %515 = vmatprep.subr.bf16.mxu0 0
    %516 = vmatpush1.bf16.msra.mxu0 0
    %517 = vmatprep.subr.bf16.mxu0 0
    %518 = vmatpush1.bf16.msra.mxu0 0
    %519 = vmatprep.mubr.bf16.mxu0 0
    %520 = vmatmul.mubr.bf16.gmra.mrb[0].mxu0 %v482
    %v521 = vpop.f32.mrb[0].mxu0
    %v522 = vadd.f32 %v476, %v521
    %v523 = vpop.f32.mrb[0].mxu0
    %v524 = vpop.f32.mrb[0].mxu0
    %v525 = vpop.f32.mrb[0].mxu0
    %526 = vdwg.mxu0
    %527 = vrot.lane.b32.xlu0 %v206, 112
    %v528 = vpop.permute.xlu0 %527
    %529 = vrot.lane.b32.xlu0 %v206, 80
    %v530 = vpop.permute.xlu0 %529
    %v532 = vsel %vm210, %v528, 0
    %v535 = vsel %vm210, %v530, 0
    %537 = vmatprep.subr.bf16.mxu0 0
    %538 = vmatpush1.bf16.xpose.msra.mxu0 %v535
    %539 = vmatprep.subr.bf16.mxu0 0
    %540 = vmatpush1.bf16.xpose.msra.mxu0 0
    %541 = vmatprep.subr.bf16.mxu0 0
    %542 = vmatpush1.bf16.xpose.msra.mxu0 0
    %543 = vmatprep.subr.bf16.mxu0 0
    %544 = vmatpush1.bf16.xpose.msra.mxu0 0
    %545 = vmatprep.subr.bf16.mxu0 0
    %546 = vmatpush1.bf16.xpose.msra.mxu0 0
    %547 = vmatprep.subr.bf16.mxu0 0
    %548 = vmatpush1.bf16.xpose.msra.mxu0 0
    %549 = vmatprep.subr.bf16.mxu0 0
    %550 = vmatpush1.bf16.xpose.msra.mxu0 0
    %551 = vmatprep.subr.bf16.mxu0 0
    %552 = vmatpush1.bf16.xpose.msra.mxu0 0
    %553 = vmatprep.subr.bf16.mxu0 0
    %554 = vmatpush1.bf16.xpose.msra.mxu0 0
    %555 = vmatprep.subr.bf16.mxu0 0
    %556 = vmatpush1.bf16.xpose.msra.mxu0 0
    %557 = vmatprep.subr.bf16.mxu0 0
    %558 = vmatpush1.bf16.xpose.msra.mxu0 0
    %559 = vmatprep.subr.bf16.mxu0 0
    %560 = vmatpush1.bf16.xpose.msra.mxu0 0
    %561 = vmatprep.subr.bf16.mxu0 0
    %562 = vmatpush1.bf16.xpose.msra.mxu0 0
    %563 = vmatprep.subr.bf16.mxu0 0
    %564 = vmatpush1.bf16.xpose.msra.mxu0 0
    %565 = vmatprep.subr.bf16.mxu0 0
    %566 = vmatpush1.bf16.xpose.msra.mxu0 0
    %567 = vmatprep.subr.bf16.mxu0 0
    %568 = vmatpush1.bf16.xpose.msra.mxu0 0
    %569 = vmatprep.mubr.bf16.mxu0 0
    %570 = vmatmul.mubr.bf16.gmra.mrb[0].mxu0 %v532
    %v571 = vpop.f32.mrb[0].mxu0
    %v572 = vadd.f32 0.0, %v571
    %v573 = vpop.f32.mrb[0].mxu0
    %v574 = vpop.f32.mrb[0].mxu0
    %v575 = vpop.f32.mrb[0].mxu0
    %576 = vdwg.mxu0
    %v577 = vsel %vm257, %v572, -1e+09
    %v578 = vsel %vm210, %v577, -inf
    %579 = vmax.xlane.f32.xlu0 %v578
    %v580 = vpop.xlane.xlu0 %579
    %v581 = vsub.f32 %v577, %v580
    %v582 = vmul.f32 %v581, 1.442695
    %v583 = vpow.pop %v582
    %v584 = vsel %vm210, %v583, 0.0
    %585 = vadd.xlane.f32.xlu0 %v584
    %v586 = vpop.xlane.xlu0 %585
    %v587 = vrcp.pop %v586
    %v588 = vmul.f32 %v583, %v587
    %v589 = vpack.c.bf16 %v588, %v588
    %590 = vrot.lane.b32.xlu0 %v206, 48
    %v591 = vpop.permute.xlu0 %590
    %v593 = vsel %vm210, %v589, 0
    %v596 = vsel %vm276, %v591, 0
    %598 = vmatprep.subr.bf16.mxu0 0
    %599 = vmatpush1.bf16.msra.mxu0 %v596
    %600 = vmatprep.subr.bf16.mxu0 0
    %601 = vmatpush1.bf16.msra.mxu0 0
    %602 = vmatprep.subr.bf16.mxu0 0
    %603 = vmatpush1.bf16.msra.mxu0 0
    %604 = vmatprep.subr.bf16.mxu0 0
    %605 = vmatpush1.bf16.msra.mxu0 0
    %606 = vmatprep.subr.bf16.mxu0 0
    %607 = vmatpush1.bf16.msra.mxu0 0
    %608 = vmatprep.subr.bf16.mxu0 0
    %609 = vmatpush1.bf16.msra.mxu0 0
    %610 = vmatprep.subr.bf16.mxu0 0
    %611 = vmatpush1.bf16.msra.mxu0 0
    %612 = vmatprep.subr.bf16.mxu0 0
    %613 = vmatpush1.bf16.msra.mxu0 0
    %614 = vmatprep.subr.bf16.mxu0 0
    %615 = vmatpush1.bf16.msra.mxu0 0
    %616 = vmatprep.subr.bf16.mxu0 0
    %617 = vmatpush1.bf16.msra.mxu0 0
    %618 = vmatprep.subr.bf16.mxu0 0
    %619 = vmatpush1.bf16.msra.mxu0 0
    %620 = vmatprep.subr.bf16.mxu0 0
    %621 = vmatpush1.bf16.msra.mxu0 0
    %622 = vmatprep.subr.bf16.mxu0 0
    %623 = vmatpush1.bf16.msra.mxu0 0
    %624 = vmatprep.subr.bf16.mxu0 0
    %625 = vmatpush1.bf16.msra.mxu0 0
    %626 = vmatprep.subr.bf16.mxu0 0
    %627 = vmatpush1.bf16.msra.mxu0 0
    %628 = vmatprep.subr.bf16.mxu0 0
    %629 = vmatpush1.bf16.msra.mxu0 0
    %630 = vmatprep.mubr.bf16.mxu0 0
    %631 = vmatmul.mubr.bf16.gmra.mrb[0].mxu0 %v593
    %v632 = vpop.f32.mrb[0].mxu0
    %v633 = vadd.f32 0.0, %v632
    %v634 = vpop.f32.mrb[0].mxu0
    %v635 = vpop.f32.mrb[0].mxu0
    %v636 = vpop.f32.mrb[0].mxu0
    %637 = vdwg.mxu0
    %v638 = vld [vmem:[#allocation8 + $0x3c] sm:$0xf]
    %v639 = vpack.c.bf16 %v633, %v633
    %v641 = vsel %vm210, %v639, 0
    %v644 = vsel %vm276, %v638, 0
    %646 = vmatprep.subr.bf16.mxu0 0
    %647 = vmatpush1.bf16.msra.mxu0 %v644
    %648 = vmatprep.subr.bf16.mxu0 0
    %649 = vmatpush1.bf16.msra.mxu0 0
    %650 = vmatprep.subr.bf16.mxu0 0
    %651 = vmatpush1.bf16.msra.mxu0 0
    %652 = vmatprep.subr.bf16.mxu0 0
    %653 = vmatpush1.bf16.msra.mxu0 0
    %654 = vmatprep.subr.bf16.mxu0 0
    %655 = vmatpush1.bf16.msra.mxu0 0
    %656 = vmatprep.subr.bf16.mxu0 0
    %657 = vmatpush1.bf16.msra.mxu0 0
    %658 = vmatprep.subr.bf16.mxu0 0
    %659 = vmatpush1.bf16.msra.mxu0 0
    %660 = vmatprep.subr.bf16.mxu0 0
    %661 = vmatpush1.bf16.msra.mxu0 0
    %662 = vmatprep.subr.bf16.mxu0 0
    %663 = vmatpush1.bf16.msra.mxu0 0
    %664 = vmatprep.subr.bf16.mxu0 0
    %665 = vmatpush1.bf16.msra.mxu0 0
    %666 = vmatprep.subr.bf16.mxu0 0
    %667 = vmatpush1.bf16.msra.mxu0 0
    %668 = vmatprep.subr.bf16.mxu0 0
    %669 = vmatpush1.bf16.msra.mxu0 0
    %670 = vmatprep.subr.bf16.mxu0 0
    %671 = vmatpush1.bf16.msra.mxu0 0
    %672 = vmatprep.subr.bf16.mxu0 0
    %673 = vmatpush1.bf16.msra.mxu0 0
    %674 = vmatprep.subr.bf16.mxu0 0
    %675 = vmatpush1.bf16.msra.mxu0 0
    %676 = vmatprep.subr.bf16.mxu0 0
    %677 = vmatpush1.bf16.msra.mxu0 0
    %678 = vmatprep.mubr.bf16.mxu0 0
    %679 = vmatmul.mubr.bf16.gmra.mrb[0].mxu0 %v641
    %v680 = vpop.f32.mrb[0].mxu0
    %v681 = vadd.f32 0.0, %v680
    %v682 = vpop.f32.mrb[0].mxu0
    %v683 = vpop.f32.mrb[0].mxu0
    %v684 = vpop.f32.mrb[0].mxu0
    %685 = vdwg.mxu0
    %v686 = vadd.f32 %v522, %v681
    %687 = vrot.lane.b32.xlu0 %v206, 104
    %v688 = vpop.permute.xlu0 %687
    %689 = vrot.lane.b32.xlu0 %v206, 72
    %v690 = vpop.permute.xlu0 %689
    %v692 = vsel %vm210, %v688, 0
    %v695 = vsel %vm210, %v690, 0
    %697 = vmatprep.subr.bf16.mxu0 0
    %698 = vmatpush1.bf16.xpose.msra.mxu0 %v695
    %699 = vmatprep.subr.bf16.mxu0 0
    %700 = vmatpush1.bf16.xpose.msra.mxu0 0
    %701 = vmatprep.subr.bf16.mxu0 0
    %702 = vmatpush1.bf16.xpose.msra.mxu0 0
    %703 = vmatprep.subr.bf16.mxu0 0
    %704 = vmatpush1.bf16.xpose.msra.mxu0 0
    %705 = vmatprep.subr.bf16.mxu0 0
    %706 = vmatpush1.bf16.xpose.msra.mxu0 0
    %707 = vmatprep.subr.bf16.mxu0 0
    %708 = vmatpush1.bf16.xpose.msra.mxu0 0
    %709 = vmatprep.subr.bf16.mxu0 0
    %710 = vmatpush1.bf16.xpose.msra.mxu0 0
    %711 = vmatprep.subr.bf16.mxu0 0
    %712 = vmatpush1.bf16.xpose.msra.mxu0 0
    %713 = vmatprep.subr.bf16.mxu0 0
    %714 = vmatpush1.bf16.xpose.msra.mxu0 0
    %715 = vmatprep.subr.bf16.mxu0 0
    %716 = vmatpush1.bf16.xpose.msra.mxu0 0
    %717 = vmatprep.subr.bf16.mxu0 0
    %718 = vmatpush1.bf16.xpose.msra.mxu0 0
    %719 = vmatprep.subr.bf16.mxu0 0
    %720 = vmatpush1.bf16.xpose.msra.mxu0 0
    %721 = vmatprep.subr.bf16.mxu0 0
    %722 = vmatpush1.bf16.xpose.msra.mxu0 0
    %723 = vmatprep.subr.bf16.mxu0 0
    %724 = vmatpush1.bf16.xpose.msra.mxu0 0
    %725 = vmatprep.subr.bf16.mxu0 0
    %726 = vmatpush1.bf16.xpose.msra.mxu0 0
    %727 = vmatprep.subr.bf16.mxu0 0
    %728 = vmatpush1.bf16.xpose.msra.mxu0 0
    %729 = vmatprep.mubr.bf16.mxu0 0
    %730 = vmatmul.mubr.bf16.gmra.mrb[0].mxu0 %v692
    %v731 = vpop.f32.mrb[0].mxu0
    %v732 = vadd.f32 0.0, %v731
    %v733 = vpop.f32.mrb[0].mxu0
    %v734 = vpop.f32.mrb[0].mxu0
    %v735 = vpop.f32.mrb[0].mxu0
    %736 = vdwg.mxu0
    %v737 = vsel %vm257, %v732, -1e+09
    %v738 = vsel %vm210, %v737, -inf
    %739 = vmax.xlane.f32.xlu0 %v738
    %v740 = vpop.xlane.xlu0 %739
    %v741 = vsub.f32 %v737, %v740
    %v742 = vmul.f32 %v741, 1.442695
    %v743 = vpow.pop %v742
    %v744 = vsel %vm210, %v743, 0.0
    %745 = vadd.xlane.f32.xlu0 %v744
    %v746 = vpop.xlane.xlu0 %745
    %v747 = vrcp.pop %v746
    %v748 = vmul.f32 %v743, %v747
    %v749 = vpack.c.bf16 %v748, %v748
    %750 = vrot.lane.b32.xlu0 %v206, 40
    %v751 = vpop.permute.xlu0 %750
    %v753 = vsel %vm210, %v749, 0
    %v756 = vsel %vm276, %v751, 0
    %758 = vmatprep.subr.bf16.mxu0 0
    %759 = vmatpush1.bf16.msra.mxu0 %v756
    %760 = vmatprep.subr.bf16.mxu0 0
    %761 = vmatpush1.bf16.msra.mxu0 0
    %762 = vmatprep.subr.bf16.mxu0 0
    %763 = vmatpush1.bf16.msra.mxu0 0
    %764 = vmatprep.subr.bf16.mxu0 0
    %765 = vmatpush1.bf16.msra.mxu0 0
    %766 = vmatprep.subr.bf16.mxu0 0
    %767 = vmatpush1.bf16.msra.mxu0 0
    %768 = vmatprep.subr.bf16.mxu0 0
    %769 = vmatpush1.bf16.msra.mxu0 0
    %770 = vmatprep.subr.bf16.mxu0 0
    %771 = vmatpush1.bf16.msra.mxu0 0
    %772 = vmatprep.subr.bf16.mxu0 0
    %773 = vmatpush1.bf16.msra.mxu0 0
    %774 = vmatprep.subr.bf16.mxu0 0
    %775 = vmatpush1.bf16.msra.mxu0 0
    %776 = vmatprep.subr.bf16.mxu0 0
    %777 = vmatpush1.bf16.msra.mxu0 0
    %778 = vmatprep.subr.bf16.mxu0 0
    %779 = vmatpush1.bf16.msra.mxu0 0
    %780 = vmatprep.subr.bf16.mxu0 0
    %781 = vmatpush1.bf16.msra.mxu0 0
    %782 = vmatprep.subr.bf16.mxu0 0
    %783 = vmatpush1.bf16.msra.mxu0 0
    %784 = vmatprep.subr.bf16.mxu0 0
    %785 = vmatpush1.bf16.msra.mxu0 0
    %786 = vmatprep.subr.bf16.mxu0 0
    %787 = vmatpush1.bf16.msra.mxu0 0
    %788 = vmatprep.subr.bf16.mxu0 0
    %789 = vmatpush1.bf16.msra.mxu0 0
    %790 = vmatprep.mubr.bf16.mxu0 0
    %791 = vmatmul.mubr.bf16.gmra.mrb[0].mxu0 %v753
    %v792 = vpop.f32.mrb[0].mxu0
    %v793 = vadd.f32 0.0, %v792
    %v794 = vpop.f32.mrb[0].mxu0
    %v795 = vpop.f32.mrb[0].mxu0
    %v796 = vpop.f32.mrb[0].mxu0
    %797 = vdwg.mxu0
    %v798 = vld [vmem:[#allocation8 + $0x58] sm:$0xf]
    %v799 = vpack.c.bf16 %v793, %v793
    %v801 = vsel %vm210, %v799, 0
    %v804 = vsel %vm276, %v798, 0
    %806 = vmatprep.subr.bf16.mxu0 0
    %807 = vmatpush1.bf16.msra.mxu0 %v804
    %808 = vmatprep.subr.bf16.mxu0 0
    %809 = vmatpush1.bf16.msra.mxu0 0
    %810 = vmatprep.subr.bf16.mxu0 0
    %811 = vmatpush1.bf16.msra.mxu0 0
    %812 = vmatprep.subr.bf16.mxu0 0
    %813 = vmatpush1.bf16.msra.mxu0 0
    %814 = vmatprep.subr.bf16.mxu0 0
    %815 = vmatpush1.bf16.msra.mxu0 0
    %816 = vmatprep.subr.bf16.mxu0 0
    %817 = vmatpush1.bf16.msra.mxu0 0
    %818 = vmatprep.subr.bf16.mxu0 0
    %819 = vmatpush1.bf16.msra.mxu0 0
    %820 = vmatprep.subr.bf16.mxu0 0
    %821 = vmatpush1.bf16.msra.mxu0 0
    %822 = vmatprep.subr.bf16.mxu0 0
    %823 = vmatpush1.bf16.msra.mxu0 0
    %824 = vmatprep.subr.bf16.mxu0 0
    %825 = vmatpush1.bf16.msra.mxu0 0
    %826 = vmatprep.subr.bf16.mxu0 0
    %827 = vmatpush1.bf16.msra.mxu0 0
    %828 = vmatprep.subr.bf16.mxu0 0
    %829 = vmatpush1.bf16.msra.mxu0 0
    %830 = vmatprep.subr.bf16.mxu0 0
    %831 = vmatpush1.bf16.msra.mxu0 0
    %832 = vmatprep.subr.bf16.mxu0 0
    %833 = vmatpush1.bf16.msra.mxu0 0
    %834 = vmatprep.subr.bf16.mxu0 0
    %835 = vmatpush1.bf16.msra.mxu0 0
    %836 = vmatprep.subr.bf16.mxu0 0
    %837 = vmatpush1.bf16.msra.mxu0 0
    %838 = vmatprep.mubr.bf16.mxu0 0
    %839 = vmatmul.mubr.bf16.gmra.mrb[0].mxu0 %v801
    %v840 = vpop.f32.mrb[0].mxu0
    %v841 = vadd.f32 0.0, %v840
    %v842 = vpop.f32.mrb[0].mxu0
    %v843 = vpop.f32.mrb[0].mxu0
    %v844 = vpop.f32.mrb[0].mxu0
    %845 = vdwg.mxu0
    %v846 = vadd.f32 %v686, %v841
    %s847 = scalar_lea.vmem [#allocation7], 8
    %v848 = vld [vmem:[%s847] sm:$0xff]
    %v849 = vpack.c.bf16 %v202, %v202
    %851 = vrot.lane.b32.xlu0 %v849, 96
    %v852 = vpop.permute.xlu0 %851
    %v854 = vsel %vm210, %v849, 0
    %v857 = vsel %vm210, %v852, 0
    %859 = vmatprep.subr.bf16.mxu0 0
    %860 = vmatpush1.bf16.xpose.msra.mxu0 %v857
    %861 = vmatprep.subr.bf16.mxu0 0
    %862 = vmatpush1.bf16.xpose.msra.mxu0 0
    %863 = vmatprep.subr.bf16.mxu0 0
    %864 = vmatpush1.bf16.xpose.msra.mxu0 0
    %865 = vmatprep.subr.bf16.mxu0 0
    %866 = vmatpush1.bf16.xpose.msra.mxu0 0
    %867 = vmatprep.subr.bf16.mxu0 0
    %868 = vmatpush1.bf16.xpose.msra.mxu0 0
    %869 = vmatprep.subr.bf16.mxu0 0
    %870 = vmatpush1.bf16.xpose.msra.mxu0 0
    %871 = vmatprep.subr.bf16.mxu0 0
    %872 = vmatpush1.bf16.xpose.msra.mxu0 0
    %873 = vmatprep.subr.bf16.mxu0 0
    %874 = vmatpush1.bf16.xpose.msra.mxu0 0
    %875 = vmatprep.subr.bf16.mxu0 0
    %876 = vmatpush1.bf16.xpose.msra.mxu0 0
    %877 = vmatprep.subr.bf16.mxu0 0
    %878 = vmatpush1.bf16.xpose.msra.mxu0 0
    %879 = vmatprep.subr.bf16.mxu0 0
    %880 = vmatpush1.bf16.xpose.msra.mxu0 0
    %881 = vmatprep.subr.bf16.mxu0 0
    %882 = vmatpush1.bf16.xpose.msra.mxu0 0
    %883 = vmatprep.subr.bf16.mxu0 0
    %884 = vmatpush1.bf16.xpose.msra.mxu0 0
    %885 = vmatprep.subr.bf16.mxu0 0
    %886 = vmatpush1.bf16.xpose.msra.mxu0 0
    %887 = vmatprep.subr.bf16.mxu0 0
    %888 = vmatpush1.bf16.xpose.msra.mxu0 0
    %889 = vmatprep.subr.bf16.mxu0 0
    %890 = vmatpush1.bf16.xpose.msra.mxu0 0
    %891 = vmatprep.mubr.bf16.mxu0 0
    %892 = vmatmul.mubr.bf16.gmra.mrb[0].mxu0 %v854
    %v893 = vpop.f32.mrb[0].mxu0
    %v894 = vadd.f32 0.0, %v893
    %v895 = vpop.f32.mrb[0].mxu0
    %v896 = vpop.f32.mrb[0].mxu0
    %v897 = vpop.f32.mrb[0].mxu0
    %898 = vdwg.mxu0
    %vm899 = vcmp.gt.f32.partialorder %v848, 0.5
    %v900 = vsel %vm899, %v894, -1e+09
    %v901 = vsel %vm210, %v900, -inf
    %902 = vmax.xlane.f32.xlu0 %v901
    %v903 = vpop.xlane.xlu0 %902
    %v904 = vsub.f32 %v900, %v903
    %v905 = vmul.f32 %v904, 1.442695
    %v906 = vpow.pop %v905
    %v907 = vsel %vm210, %v906, 0.0
    %908 = vadd.xlane.f32.xlu0 %v907
    %v909 = vpop.xlane.xlu0 %908
    %v910 = vrcp.pop %v909
    %v911 = vmul.f32 %v906, %v910
    %v912 = vpack.c.bf16 %v911, %v911
    %913 = vrot.lane.b32.xlu0 %v849, 64
    %v914 = vpop.permute.xlu0 %913
    %v916 = vsel %vm210, %v912, 0
    %v919 = vsel %vm276, %v914, 0
    %921 = vmatprep.subr.bf16.mxu0 0
    %922 = vmatpush1.bf16.msra.mxu0 %v919
    %923 = vmatprep.subr.bf16.mxu0 0
    %924 = vmatpush1.bf16.msra.mxu0 0
    %925 = vmatprep.subr.bf16.mxu0 0
    %926 = vmatpush1.bf16.msra.mxu0 0
    %927 = vmatprep.subr.bf16.mxu0 0
    %928 = vmatpush1.bf16.msra.mxu0 0
    %929 = vmatprep.subr.bf16.mxu0 0
    %930 = vmatpush1.bf16.msra.mxu0 0
    %931 = vmatprep.subr.bf16.mxu0 0
    %932 = vmatpush1.bf16.msra.mxu0 0
    %933 = vmatprep.subr.bf16.mxu0 0
    %934 = vmatpush1.bf16.msra.mxu0 0
    %935 = vmatprep.subr.bf16.mxu0 0
    %936 = vmatpush1.bf16.msra.mxu0 0
    %937 = vmatprep.subr.bf16.mxu0 0
    %938 = vmatpush1.bf16.msra.mxu0 0
    %939 = vmatprep.subr.bf16.mxu0 0
    %940 = vmatpush1.bf16.msra.mxu0 0
    %941 = vmatprep.subr.bf16.mxu0 0
    %942 = vmatpush1.bf16.msra.mxu0 0
    %943 = vmatprep.subr.bf16.mxu0 0
    %944 = vmatpush1.bf16.msra.mxu0 0
    %945 = vmatprep.subr.bf16.mxu0 0
    %946 = vmatpush1.bf16.msra.mxu0 0
    %947 = vmatprep.subr.bf16.mxu0 0
    %948 = vmatpush1.bf16.msra.mxu0 0
    %949 = vmatprep.subr.bf16.mxu0 0
    %950 = vmatpush1.bf16.msra.mxu0 0
    %951 = vmatprep.subr.bf16.mxu0 0
    %952 = vmatpush1.bf16.msra.mxu0 0
    %953 = vmatprep.mubr.bf16.mxu0 0
    %954 = vmatmul.mubr.bf16.gmra.mrb[0].mxu0 %v916
    %v955 = vpop.f32.mrb[0].mxu0
    %v956 = vadd.f32 0.0, %v955
    %v957 = vpop.f32.mrb[0].mxu0
    %v958 = vpop.f32.mrb[0].mxu0
    %v959 = vpop.f32.mrb[0].mxu0
    %960 = vdwg.mxu0
    %v961 = vpack.c.bf16 %v956, %v956
    %962 = vrot.lane.b32.xlu0 %v849, 120
    %v963 = vpop.permute.xlu0 %962
    %964 = vrot.lane.b32.xlu0 %v849, 88
    %v965 = vpop.permute.xlu0 %964
    %v967 = vsel %vm210, %v963, 0
    %v970 = vsel %vm210, %v965, 0
    %972 = vmatprep.subr.bf16.mxu0 0
    %973 = vmatpush1.bf16.xpose.msra.mxu0 %v970
    %974 = vmatprep.subr.bf16.mxu0 0
    %975 = vmatpush1.bf16.xpose.msra.mxu0 0
    %976 = vmatprep.subr.bf16.mxu0 0
    %977 = vmatpush1.bf16.xpose.msra.mxu0 0
    %978 = vmatprep.subr.bf16.mxu0 0
    %979 = vmatpush1.bf16.xpose.msra.mxu0 0
    %980 = vmatprep.subr.bf16.mxu0 0
    %981 = vmatpush1.bf16.xpose.msra.mxu0 0
    %982 = vmatprep.subr.bf16.mxu0 0
    %983 = vmatpush1.bf16.xpose.msra.mxu0 0
    %984 = vmatprep.subr.bf16.mxu0 0
    %985 = vmatpush1.bf16.xpose.msra.mxu0 0
    %986 = vmatprep.subr.bf16.mxu0 0
    %987 = vmatpush1.bf16.xpose.msra.mxu0 0
    %988 = vmatprep.subr.bf16.mxu0 0
    %989 = vmatpush1.bf16.xpose.msra.mxu0 0
    %990 = vmatprep.subr.bf16.mxu0 0
    %991 = vmatpush1.bf16.xpose.msra.mxu0 0
    %992 = vmatprep.subr.bf16.mxu0 0
    %993 = vmatpush1.bf16.xpose.msra.mxu0 0
    %994 = vmatprep.subr.bf16.mxu0 0
    %995 = vmatpush1.bf16.xpose.msra.mxu0 0
    %996 = vmatprep.subr.bf16.mxu0 0
    %997 = vmatpush1.bf16.xpose.msra.mxu0 0
    %998 = vmatprep.subr.bf16.mxu0 0
    %999 = vmatpush1.bf16.xpose.msra.mxu0 0
    %1000 = vmatprep.subr.bf16.mxu0 0
    %1001 = vmatpush1.bf16.xpose.msra.mxu0 0
    %1002 = vmatprep.subr.bf16.mxu0 0
    %1003 = vmatpush1.bf16.xpose.msra.mxu0 0
    %1004 = vmatprep.mubr.bf16.mxu0 0
    %1005 = vmatmul.mubr.bf16.gmra.mrb[0].mxu0 %v967
    %v1006 = vpop.f32.mrb[0].mxu0
    %v1007 = vadd.f32 0.0, %v1006
    %v1008 = vpop.f32.mrb[0].mxu0
    %v1009 = vpop.f32.mrb[0].mxu0
    %v1010 = vpop.f32.mrb[0].mxu0
    %1011 = vdwg.mxu0
    %v1012 = vsel %vm899, %v1007, -1e+09
    %v1013 = vsel %vm210, %v1012, -inf
    %1014 = vmax.xlane.f32.xlu0 %v1013
    %v1015 = vpop.xlane.xlu0 %1014
    %v1016 = vsub.f32 %v1012, %v1015
    %v1017 = vmul.f32 %v1016, 1.442695
    %v1018 = vpow.pop %v1017
    %v1019 = vsel %vm210, %v1018, 0.0
    %1020 = vadd.xlane.f32.xlu0 %v1019
    %v1021 = vpop.xlane.xlu0 %1020
    %v1022 = vrcp.pop %v1021
    %v1023 = vmul.f32 %v1018, %v1022
    %v1024 = vpack.c.bf16 %v1023, %v1023
    %1025 = vrot.lane.b32.xlu0 %v849, 56
    %v1026 = vpop.permute.xlu0 %1025
    %v1028 = vsel %vm210, %v1024, 0
    %v1031 = vsel %vm276, %v1026, 0
    %1033 = vmatprep.subr.bf16.mxu0 0
    %1034 = vmatpush1.bf16.msra.mxu0 %v1031
    %1035 = vmatprep.subr.bf16.mxu0 0
    %1036 = vmatpush1.bf16.msra.mxu0 0
    %1037 = vmatprep.subr.bf16.mxu0 0
    %1038 = vmatpush1.bf16.msra.mxu0 0
    %1039 = vmatprep.subr.bf16.mxu0 0
    %1040 = vmatpush1.bf16.msra.mxu0 0
    %1041 = vmatprep.subr.bf16.mxu0 0
    %1042 = vmatpush1.bf16.msra.mxu0 0
    %1043 = vmatprep.subr.bf16.mxu0 0
    %1044 = vmatpush1.bf16.msra.mxu0 0
    %1045 = vmatprep.subr.bf16.mxu0 0
    %1046 = vmatpush1.bf16.msra.mxu0 0
    %1047 = vmatprep.subr.bf16.mxu0 0
    %1048 = vmatpush1.bf16.msra.mxu0 0
    %1049 = vmatprep.subr.bf16.mxu0 0
    %1050 = vmatpush1.bf16.msra.mxu0 0
    %1051 = vmatprep.subr.bf16.mxu0 0
    %1052 = vmatpush1.bf16.msra.mxu0 0
    %1053 = vmatprep.subr.bf16.mxu0 0
    %1054 = vmatpush1.bf16.msra.mxu0 0
    %1055 = vmatprep.subr.bf16.mxu0 0
    %1056 = vmatpush1.bf16.msra.mxu0 0
    %1057 = vmatprep.subr.bf16.mxu0 0
    %1058 = vmatpush1.bf16.msra.mxu0 0
    %1059 = vmatprep.subr.bf16.mxu0 0
    %1060 = vmatpush1.bf16.msra.mxu0 0
    %1061 = vmatprep.subr.bf16.mxu0 0
    %1062 = vmatpush1.bf16.msra.mxu0 0
    %1063 = vmatprep.subr.bf16.mxu0 0
    %1064 = vmatpush1.bf16.msra.mxu0 0
    %1065 = vmatprep.mubr.bf16.mxu0 0
    %1066 = vmatmul.mubr.bf16.gmra.mrb[0].mxu0 %v1028
    %v1067 = vpop.f32.mrb[0].mxu0
    %v1068 = vadd.f32 0.0, %v1067
    %v1069 = vpop.f32.mrb[0].mxu0
    %v1070 = vpop.f32.mrb[0].mxu0
    %v1071 = vpop.f32.mrb[0].mxu0
    %1072 = vdwg.mxu0
    %v1073 = vpack.c.bf16 %v1068, %v1068
    %v1075 = vsel %vm210, %v1073, 0
    %1077 = vmatprep.subr.bf16.mxu0 0
    %1078 = vmatpush1.bf16.msra.mxu0 %v439
    %1079 = vmatprep.subr.bf16.mxu0 0
    %1080 = vmatpush1.bf16.msra.mxu0 0
    %1081 = vmatprep.subr.bf16.mxu0 0
    %1082 = vmatpush1.bf16.msra.mxu0 0
    %1083 = vmatprep.subr.bf16.mxu0 0
    %1084 = vmatpush1.bf16.msra.mxu0 0
    %1085 = vmatprep.subr.bf16.mxu0 0
    %1086 = vmatpush1.bf16.msra.mxu0 0
    %1087 = vmatprep.subr.bf16.mxu0 0
    %1088 = vmatpush1.bf16.msra.mxu0 0
    %1089 = vmatprep.subr.bf16.mxu0 0
    %1090 = vmatpush1.bf16.msra.mxu0 0
    %1091 = vmatprep.subr.bf16.mxu0 0
    %1092 = vmatpush1.bf16.msra.mxu0 0
    %1093 = vmatprep.subr.bf16.mxu0 0
    %1094 = vmatpush1.bf16.msra.mxu0 0
    %1095 = vmatprep.subr.bf16.mxu0 0
    %1096 = vmatpush1.bf16.msra.mxu0 0
    %1097 = vmatprep.subr.bf16.mxu0 0
    %1098 = vmatpush1.bf16.msra.mxu0 0
    %1099 = vmatprep.subr.bf16.mxu0 0
    %1100 = vmatpush1.bf16.msra.mxu0 0
    %1101 = vmatprep.subr.bf16.mxu0 0
    %1102 = vmatpush1.bf16.msra.mxu0 0
    %1103 = vmatprep.subr.bf16.mxu0 0
    %1104 = vmatpush1.bf16.msra.mxu0 0
    %1105 = vmatprep.subr.bf16.mxu0 0
    %1106 = vmatpush1.bf16.msra.mxu0 0
    %1107 = vmatprep.subr.bf16.mxu0 0
    %1108 = vmatpush1.bf16.msra.mxu0 0
    %1109 = vmatprep.mubr.bf16.mxu0 0
    %1110 = vmatmul.mubr.bf16.gmra.mrb[0].mxu0 %v1075
    %v1111 = vpop.f32.mrb[0].mxu0
    %v1112 = vadd.f32 0.0, %v1111
    %v1113 = vpop.f32.mrb[0].mxu0
    %v1114 = vpop.f32.mrb[0].mxu0
    %v1115 = vpop.f32.mrb[0].mxu0
    %1116 = vdwg.mxu0
    %v1118 = vsel %vm210, %v961, 0
    %1120 = vmatprep.subr.bf16.mxu0 0
    %1121 = vmatpush1.bf16.msra.mxu0 %v485
    %1122 = vmatprep.subr.bf16.mxu0 0
    %1123 = vmatpush1.bf16.msra.mxu0 0
    %1124 = vmatprep.subr.bf16.mxu0 0
    %1125 = vmatpush1.bf16.msra.mxu0 0
    %1126 = vmatprep.subr.bf16.mxu0 0
    %1127 = vmatpush1.bf16.msra.mxu0 0
    %1128 = vmatprep.subr.bf16.mxu0 0
    %1129 = vmatpush1.bf16.msra.mxu0 0
    %1130 = vmatprep.subr.bf16.mxu0 0
    %1131 = vmatpush1.bf16.msra.mxu0 0
    %1132 = vmatprep.subr.bf16.mxu0 0
    %1133 = vmatpush1.bf16.msra.mxu0 0
    %1134 = vmatprep.subr.bf16.mxu0 0
    %1135 = vmatpush1.bf16.msra.mxu0 0
    %1136 = vmatprep.subr.bf16.mxu0 0
    %1137 = vmatpush1.bf16.msra.mxu0 0
    %1138 = vmatprep.subr.bf16.mxu0 0
    %1139 = vmatpush1.bf16.msra.mxu0 0
    %1140 = vmatprep.subr.bf16.mxu0 0
    %1141 = vmatpush1.bf16.msra.mxu0 0
    %1142 = vmatprep.subr.bf16.mxu0 0
    %1143 = vmatpush1.bf16.msra.mxu0 0
    %1144 = vmatprep.subr.bf16.mxu0 0
    %1145 = vmatpush1.bf16.msra.mxu0 0
    %1146 = vmatprep.subr.bf16.mxu0 0
    %1147 = vmatpush1.bf16.msra.mxu0 0
    %1148 = vmatprep.subr.bf16.mxu0 0
    %1149 = vmatpush1.bf16.msra.mxu0 0
    %1150 = vmatprep.subr.bf16.mxu0 0
    %1151 = vmatpush1.bf16.msra.mxu0 0
    %1152 = vmatprep.mubr.bf16.mxu0 0
    %1153 = vmatmul.mubr.bf16.gmra.mrb[0].mxu0 %v1118
    %v1154 = vpop.f32.mrb[0].mxu0
    %v1155 = vadd.f32 %v1112, %v1154
    %v1156 = vpop.f32.mrb[0].mxu0
    %v1157 = vpop.f32.mrb[0].mxu0
    %v1158 = vpop.f32.mrb[0].mxu0
    %1159 = vdwg.mxu0
    %1160 = vrot.lane.b32.xlu0 %v849, 112
    %v1161 = vpop.permute.xlu0 %1160
    %1162 = vrot.lane.b32.xlu0 %v849, 80
    %v1163 = vpop.permute.xlu0 %1162
    %v1165 = vsel %vm210, %v1161, 0
    %v1168 = vsel %vm210, %v1163, 0
    %1170 = vmatprep.subr.bf16.mxu0 0
    %1171 = vmatpush1.bf16.xpose.msra.mxu0 %v1168
    %1172 = vmatprep.subr.bf16.mxu0 0
    %1173 = vmatpush1.bf16.xpose.msra.mxu0 0
    %1174 = vmatprep.subr.bf16.mxu0 0
    %1175 = vmatpush1.bf16.xpose.msra.mxu0 0
    %1176 = vmatprep.subr.bf16.mxu0 0
    %1177 = vmatpush1.bf16.xpose.msra.mxu0 0
    %1178 = vmatprep.subr.bf16.mxu0 0
    %1179 = vmatpush1.bf16.xpose.msra.mxu0 0
    %1180 = vmatprep.subr.bf16.mxu0 0
    %1181 = vmatpush1.bf16.xpose.msra.mxu0 0
    %1182 = vmatprep.subr.bf16.mxu0 0
    %1183 = vmatpush1.bf16.xpose.msra.mxu0 0
    %1184 = vmatprep.subr.bf16.mxu0 0
    %1185 = vmatpush1.bf16.xpose.msra.mxu0 0
    %1186 = vmatprep.subr.bf16.mxu0 0
    %1187 = vmatpush1.bf16.xpose.msra.mxu0 0
    %1188 = vmatprep.subr.bf16.mxu0 0
    %1189 = vmatpush1.bf16.xpose.msra.mxu0 0
    %1190 = vmatprep.subr.bf16.mxu0 0
    %1191 = vmatpush1.bf16.xpose.msra.mxu0 0
    %1192 = vmatprep.subr.bf16.mxu0 0
    %1193 = vmatpush1.bf16.xpose.msra.mxu0 0
    %1194 = vmatprep.subr.bf16.mxu0 0
    %1195 = vmatpush1.bf16.xpose.msra.mxu0 0
    %1196 = vmatprep.subr.bf16.mxu0 0
    %1197 = vmatpush1.bf16.xpose.msra.mxu0 0
    %1198 = vmatprep.subr.bf16.mxu0 0
    %1199 = vmatpush1.bf16.xpose.msra.mxu0 0
    %1200 = vmatprep.subr.bf16.mxu0 0
    %1201 = vmatpush1.bf16.xpose.msra.mxu0 0
    %1202 = vmatprep.mubr.bf16.mxu0 0
    %1203 = vmatmul.mubr.bf16.gmra.mrb[0].mxu0 %v1165
    %v1204 = vpop.f32.mrb[0].mxu0
    %v1205 = vadd.f32 0.0, %v1204
    %v1206 = vpop.f32.mrb[0].mxu0
    %v1207 = vpop.f32.mrb[0].mxu0
    %v1208 = vpop.f32.mrb[0].mxu0
    %1209 = vdwg.mxu0
    %v1210 = vsel %vm899, %v1205, -1e+09
    %v1211 = vsel %vm210, %v1210, -inf
    %1212 = vmax.xlane.f32.xlu0 %v1211
    %v1213 = vpop.xlane.xlu0 %1212
    %v1214 = vsub.f32 %v1210, %v1213
    %v1215 = vmul.f32 %v1214, 1.442695
    %v1216 = vpow.pop %v1215
    %v1217 = vsel %vm210, %v1216, 0.0
    %1218 = vadd.xlane.f32.xlu0 %v1217
    %v1219 = vpop.xlane.xlu0 %1218
    %v1220 = vrcp.pop %v1219
    %v1221 = vmul.f32 %v1216, %v1220
    %v1222 = vpack.c.bf16 %v1221, %v1221
    %1223 = vrot.lane.b32.xlu0 %v849, 48
    %v1224 = vpop.permute.xlu0 %1223
    %v1226 = vsel %vm210, %v1222, 0
    %v1229 = vsel %vm276, %v1224, 0
    %1231 = vmatprep.subr.bf16.mxu0 0
    %1232 = vmatpush1.bf16.msra.mxu0 %v1229
    %1233 = vmatprep.subr.bf16.mxu0 0
    %1234 = vmatpush1.bf16.msra.mxu0 0
    %1235 = vmatprep.subr.bf16.mxu0 0
    %1236 = vmatpush1.bf16.msra.mxu0 0
    %1237 = vmatprep.subr.bf16.mxu0 0
    %1238 = vmatpush1.bf16.msra.mxu0 0
    %1239 = vmatprep.subr.bf16.mxu0 0
    %1240 = vmatpush1.bf16.msra.mxu0 0
    %1241 = vmatprep.subr.bf16.mxu0 0
    %1242 = vmatpush1.bf16.msra.mxu0 0
    %1243 = vmatprep.subr.bf16.mxu0 0
    %1244 = vmatpush1.bf16.msra.mxu0 0
    %1245 = vmatprep.subr.bf16.mxu0 0
    %1246 = vmatpush1.bf16.msra.mxu0 0
    %1247 = vmatprep.subr.bf16.mxu0 0
    %1248 = vmatpush1.bf16.msra.mxu0 0
    %1249 = vmatprep.subr.bf16.mxu0 0
    %1250 = vmatpush1.bf16.msra.mxu0 0
    %1251 = vmatprep.subr.bf16.mxu0 0
    %1252 = vmatpush1.bf16.msra.mxu0 0
    %1253 = vmatprep.subr.bf16.mxu0 0
    %1254 = vmatpush1.bf16.msra.mxu0 0
    %1255 = vmatprep.subr.bf16.mxu0 0
    %1256 = vmatpush1.bf16.msra.mxu0 0
    %1257 = vmatprep.subr.bf16.mxu0 0
    %1258 = vmatpush1.bf16.msra.mxu0 0
    %1259 = vmatprep.subr.bf16.mxu0 0
    %1260 = vmatpush1.bf16.msra.mxu0 0
    %1261 = vmatprep.subr.bf16.mxu0 0
    %1262 = vmatpush1.bf16.msra.mxu0 0
    %1263 = vmatprep.mubr.bf16.mxu0 0
    %1264 = vmatmul.mubr.bf16.gmra.mrb[0].mxu0 %v1226
    %v1265 = vpop.f32.mrb[0].mxu0
    %v1266 = vadd.f32 0.0, %v1265
    %v1267 = vpop.f32.mrb[0].mxu0
    %v1268 = vpop.f32.mrb[0].mxu0
    %v1269 = vpop.f32.mrb[0].mxu0
    %1270 = vdwg.mxu0
    %v1271 = vpack.c.bf16 %v1266, %v1266
    %v1273 = vsel %vm210, %v1271, 0
    %1275 = vmatprep.subr.bf16.mxu0 0
    %1276 = vmatpush1.bf16.msra.mxu0 %v644
    %1277 = vmatprep.subr.bf16.mxu0 0
    %1278 = vmatpush1.bf16.msra.mxu0 0
    %1279 = vmatprep.subr.bf16.mxu0 0
    %1280 = vmatpush1.bf16.msra.mxu0 0
    %1281 = vmatprep.subr.bf16.mxu0 0
    %1282 = vmatpush1.bf16.msra.mxu0 0
    %1283 = vmatprep.subr.bf16.mxu0 0
    %1284 = vmatpush1.bf16.msra.mxu0 0
    %1285 = vmatprep.subr.bf16.mxu0 0
    %1286 = vmatpush1.bf16.msra.mxu0 0
    %1287 = vmatprep.subr.bf16.mxu0 0
    %1288 = vmatpush1.bf16.msra.mxu0 0
    %1289 = vmatprep.subr.bf16.mxu0 0
    %1290 = vmatpush1.bf16.msra.mxu0 0
    %1291 = vmatprep.subr.bf16.mxu0 0
    %1292 = vmatpush1.bf16.msra.mxu0 0
    %1293 = vmatprep.subr.bf16.mxu0 0
    %1294 = vmatpush1.bf16.msra.mxu0 0
    %1295 = vmatprep.subr.bf16.mxu0 0
    %1296 = vmatpush1.bf16.msra.mxu0 0
    %1297 = vmatprep.subr.bf16.mxu0 0
    %1298 = vmatpush1.bf16.msra.mxu0 0
    %1299 = vmatprep.subr.bf16.mxu0 0
    %1300 = vmatpush1.bf16.msra.mxu0 0
    %1301 = vmatprep.subr.bf16.mxu0 0
    %1302 = vmatpush1.bf16.msra.mxu0 0
    %1303 = vmatprep.subr.bf16.mxu0 0
    %1304 = vmatpush1.bf16.msra.mxu0 0
    %1305 = vmatprep.subr.bf16.mxu0 0
    %1306 = vmatpush1.bf16.msra.mxu0 0
    %1307 = vmatprep.mubr.bf16.mxu0 0
    %1308 = vmatmul.mubr.bf16.gmra.mrb[0].mxu0 %v1273
    %v1309 = vpop.f32.mrb[0].mxu0
    %v1310 = vadd.f32 0.0, %v1309
    %v1311 = vpop.f32.mrb[0].mxu0
    %v1312 = vpop.f32.mrb[0].mxu0
    %v1313 = vpop.f32.mrb[0].mxu0
    %1314 = vdwg.mxu0
    %v1315 = vadd.f32 %v1155, %v1310
    %1316 = vrot.lane.b32.xlu0 %v849, 104
    %v1317 = vpop.permute.xlu0 %1316
    %1318 = vrot.lane.b32.xlu0 %v849, 72
    %v1319 = vpop.permute.xlu0 %1318
    %v1321 = vsel %vm210, %v1317, 0
    %v1324 = vsel %vm210, %v1319, 0
    %1326 = vmatprep.subr.bf16.mxu0 0
    %1327 = vmatpush1.bf16.xpose.msra.mxu0 %v1324
    %1328 = vmatprep.subr.bf16.mxu0 0
    %1329 = vmatpush1.bf16.xpose.msra.mxu0 0
    %1330 = vmatprep.subr.bf16.mxu0 0
    %1331 = vmatpush1.bf16.xpose.msra.mxu0 0
    %1332 = vmatprep.subr.bf16.mxu0 0
    %1333 = vmatpush1.bf16.xpose.msra.mxu0 0
    %1334 = vmatprep.subr.bf16.mxu0 0
    %1335 = vmatpush1.bf16.xpose.msra.mxu0 0
    %1336 = vmatprep.subr.bf16.mxu0 0
    %1337 = vmatpush1.bf16.xpose.msra.mxu0 0
    %1338 = vmatprep.subr.bf16.mxu0 0
    %1339 = vmatpush1.bf16.xpose.msra.mxu0 0
    %1340 = vmatprep.subr.bf16.mxu0 0
    %1341 = vmatpush1.bf16.xpose.msra.mxu0 0
    %1342 = vmatprep.subr.bf16.mxu0 0
    %1343 = vmatpush1.bf16.xpose.msra.mxu0 0
    %1344 = vmatprep.subr.bf16.mxu0 0
    %1345 = vmatpush1.bf16.xpose.msra.mxu0 0
    %1346 = vmatprep.subr.bf16.mxu0 0
    %1347 = vmatpush1.bf16.xpose.msra.mxu0 0
    %1348 = vmatprep.subr.bf16.mxu0 0
    %1349 = vmatpush1.bf16.xpose.msra.mxu0 0
    %1350 = vmatprep.subr.bf16.mxu0 0
    %1351 = vmatpush1.bf16.xpose.msra.mxu0 0
    %1352 = vmatprep.subr.bf16.mxu0 0
    %1353 = vmatpush1.bf16.xpose.msra.mxu0 0
    %1354 = vmatprep.subr.bf16.mxu0 0
    %1355 = vmatpush1.bf16.xpose.msra.mxu0 0
    %1356 = vmatprep.subr.bf16.mxu0 0
    %1357 = vmatpush1.bf16.xpose.msra.mxu0 0
    %1358 = vmatprep.mubr.bf16.mxu0 0
    %1359 = vmatmul.mubr.bf16.gmra.mrb[0].mxu0 %v1321
    %v1360 = vpop.f32.mrb[0].mxu0
    %v1361 = vadd.f32 0.0, %v1360
    %v1362 = vpop.f32.mrb[0].mxu0
    %v1363 = vpop.f32.mrb[0].mxu0
    %v1364 = vpop.f32.mrb[0].mxu0
    %1365 = vdwg.mxu0
    %v1366 = vsel %vm899, %v1361, -1e+09
    %v1367 = vsel %vm210, %v1366, -inf
    %1368 = vmax.xlane.f32.xlu0 %v1367
    %v1369 = vpop.xlane.xlu0 %1368
    %v1370 = vsub.f32 %v1366, %v1369
    %v1371 = vmul.f32 %v1370, 1.442695
    %v1372 = vpow.pop %v1371
    %v1373 = vsel %vm210, %v1372, 0.0
    %1374 = vadd.xlane.f32.xlu0 %v1373
    %v1375 = vpop.xlane.xlu0 %1374
    %v1376 = vrcp.pop %v1375
    %v1377 = vmul.f32 %v1372, %v1376
    %v1378 = vpack.c.bf16 %v1377, %v1377
    %1379 = vrot.lane.b32.xlu0 %v849, 40
    %v1380 = vpop.permute.xlu0 %1379
    %v1382 = vsel %vm210, %v1378, 0
    %v1385 = vsel %vm276, %v1380, 0
    %1387 = vmatprep.subr.bf16.mxu0 0
    %1388 = vmatpush1.bf16.msra.mxu0 %v1385
    %1389 = vmatprep.subr.bf16.mxu0 0
    %1390 = vmatpush1.bf16.msra.mxu0 0
    %1391 = vmatprep.subr.bf16.mxu0 0
    %1392 = vmatpush1.bf16.msra.mxu0 0
    %1393 = vmatprep.subr.bf16.mxu0 0
    %1394 = vmatpush1.bf16.msra.mxu0 0
    %1395 = vmatprep.subr.bf16.mxu0 0
    %1396 = vmatpush1.bf16.msra.mxu0 0
    %1397 = vmatprep.subr.bf16.mxu0 0
    %1398 = vmatpush1.bf16.msra.mxu0 0
    %1399 = vmatprep.subr.bf16.mxu0 0
    %1400 = vmatpush1.bf16.msra.mxu0 0
    %1401 = vmatprep.subr.bf16.mxu0 0
    %1402 = vmatpush1.bf16.msra.mxu0 0
    %1403 = vmatprep.subr.bf16.mxu0 0
    %1404 = vmatpush1.bf16.msra.mxu0 0
    %1405 = vmatprep.subr.bf16.mxu0 0
    %1406 = vmatpush1.bf16.msra.mxu0 0
    %1407 = vmatprep.subr.bf16.mxu0 0
    %1408 = vmatpush1.bf16.msra.mxu0 0
    %1409 = vmatprep.subr.bf16.mxu0 0
    %1410 = vmatpush1.bf16.msra.mxu0 0
    %1411 = vmatprep.subr.bf16.mxu0 0
    %1412 = vmatpush1.bf16.msra.mxu0 0
    %1413 = vmatprep.subr.bf16.mxu0 0
    %1414 = vmatpush1.bf16.msra.mxu0 0
    %1415 = vmatprep.subr.bf16.mxu0 0
    %1416 = vmatpush1.bf16.msra.mxu0 0
    %1417 = vmatprep.subr.bf16.mxu0 0
    %1418 = vmatpush1.bf16.msra.mxu0 0
    %1419 = vmatprep.mubr.bf16.mxu0 0
    %1420 = vmatmul.mubr.bf16.gmra.mrb[0].mxu0 %v1382
    %v1421 = vpop.f32.mrb[0].mxu0
    %v1422 = vadd.f32 0.0, %v1421
    %v1423 = vpop.f32.mrb[0].mxu0
    %v1424 = vpop.f32.mrb[0].mxu0
    %v1425 = vpop.f32.mrb[0].mxu0
    %1426 = vdwg.mxu0
    %v1427 = vpack.c.bf16 %v1422, %v1422
    %v1429 = vsel %vm210, %v1427, 0
    %1431 = vmatprep.subr.bf16.mxu0 0
    %1432 = vmatpush1.bf16.msra.mxu0 %v804
    %1433 = vmatprep.subr.bf16.mxu0 0
    %1434 = vmatpush1.bf16.msra.mxu0 0
    %1435 = vmatprep.subr.bf16.mxu0 0
    %1436 = vmatpush1.bf16.msra.mxu0 0
    %1437 = vmatprep.subr.bf16.mxu0 0
    %1438 = vmatpush1.bf16.msra.mxu0 0
    %1439 = vmatprep.subr.bf16.mxu0 0
    %1440 = vmatpush1.bf16.msra.mxu0 0
    %1441 = vmatprep.subr.bf16.mxu0 0
    %1442 = vmatpush1.bf16.msra.mxu0 0
    %1443 = vmatprep.subr.bf16.mxu0 0
    %1444 = vmatpush1.bf16.msra.mxu0 0
    %1445 = vmatprep.subr.bf16.mxu0 0
    %1446 = vmatpush1.bf16.msra.mxu0 0
    %1447 = vmatprep.subr.bf16.mxu0 0
    %1448 = vmatpush1.bf16.msra.mxu0 0
    %1449 = vmatprep.subr.bf16.mxu0 0
    %1450 = vmatpush1.bf16.msra.mxu0 0
    %1451 = vmatprep.subr.bf16.mxu0 0
    %1452 = vmatpush1.bf16.msra.mxu0 0
    %1453 = vmatprep.subr.bf16.mxu0 0
    %1454 = vmatpush1.bf16.msra.mxu0 0
    %1455 = vmatprep.subr.bf16.mxu0 0
    %1456 = vmatpush1.bf16.msra.mxu0 0
    %1457 = vmatprep.subr.bf16.mxu0 0
    %1458 = vmatpush1.bf16.msra.mxu0 0
    %1459 = vmatprep.subr.bf16.mxu0 0
    %1460 = vmatpush1.bf16.msra.mxu0 0
    %1461 = vmatprep.subr.bf16.mxu0 0
    %1462 = vmatpush1.bf16.msra.mxu0 0
    %1463 = vmatprep.mubr.bf16.mxu0 0
    %1464 = vmatmul.mubr.bf16.gmra.mrb[0].mxu0 %v1429
    %v1465 = vpop.f32.mrb[0].mxu0
    %v1466 = vadd.f32 0.0, %v1465
    %v1467 = vpop.f32.mrb[0].mxu0
    %v1468 = vpop.f32.mrb[0].mxu0
    %v1469 = vpop.f32.mrb[0].mxu0
    %1470 = vdwg.mxu0
    %v1471 = vadd.f32 %v1315, %v1466
    %v1472 = vadd.f32 %v91, %v846
    %v1473 = vadd.f32 %v92, %v1471
    %v1474 = vld [vmem:[#allocation10 + $0x8] ss:$0 sm:$0xff]
    %v1475 = vadd.f32 %v1472, %v1474
    %v1476 = vadd.f32 %v1473, %v1474
    %v1477 = vld [vmem:[#allocation10 + $0x2] ss:$0 sm:$0xff]
    %v1478 = vld [vmem:[#allocation10 + $0x5] ss:$0 sm:$0xff]
    %v1479 = vsel %vm97, %v1475, 0.0
    %1480 = vadd.xlane.f32.xlu0 %v1479
    %v1481 = vpop.xlane.xlu0 %1480
    %v1482 = vsel %vm97, %v1476, 0.0
    %1483 = vadd.xlane.f32.xlu0 %v1482
    %v1484 = vpop.xlane.xlu0 %1483
    %v1485 = vmul.f32 %v1481, %v104
    %v1486 = vmul.f32 %v1484, %v104
    %v1487 = vsub.f32 %v1475, %v1485
    %v1488 = vsub.f32 %v1476, %v1486
    %v1489 = vmul.f32 %v1487, %v1487
    %v1490 = vmul.f32 %v1488, %v1488
    %v1491 = vsel %vm97, %v1489, 0.0
    %1492 = vadd.xlane.f32.xlu0 %v1491
    %v1493 = vpop.xlane.xlu0 %1492
    %v1494 = vsel %vm97, %v1490, 0.0
    %1495 = vadd.xlane.f32.xlu0 %v1494
    %v1496 = vpop.xlane.xlu0 %1495
    %v1497 = vmul.f32 %v1493, 0.032258064
    %v1498 = vmul.f32 %v1496, 0.032258064
    %v1499 = vrsqrt.pop %v1497
    %v1500 = vmul.f32 %v1497, %v1499
    %vm1501 = vcmp.eq.f32.partialorder %v1497, inf
    %v1502 = vsel %vm1501, %v1497, %v1500
    %vm1503 = vcmp.eq.f32.partialorder %v1497, 0.0
    %v1504 = vand.u32 %v1497, 2147483648
    %v1505 = vsel %vm1503, %v1504, %v1502
    %v1506 = vrsqrt.pop %v1498
    %v1507 = vmul.f32 %v1498, %v1506
    %vm1508 = vcmp.eq.f32.partialorder %v1498, inf
    %v1509 = vsel %vm1508, %v1498, %v1507
    %vm1510 = vcmp.eq.f32.partialorder %v1498, 0.0
    %v1511 = vand.u32 %v1498, 2147483648
    %v1512 = vsel %vm1510, %v1511, %v1509
    %v1513 = vmul.f32 %v1477, %v1487
    %v1514 = vmul.f32 %v1477, %v1488
    %v1515 = vadd.f32 %v1505, 1e-06
    %v1516 = vadd.f32 %v1512, 1e-06
    %v1517 = vrcp.pop %v1515
    %v1518 = vmul.f32 %v1513, %v1517
    %v1519 = vrcp.pop %v1516
    %v1520 = vmul.f32 %v1514, %v1519
    %v1521 = vadd.f32 %v1518, %v1478
    %v1522 = vadd.f32 %v1520, %v1478
    %v1523 = vld [vmem:[#allocation8 + $0x8] sm:$0xf]
    %v1524 = vld [vmem:[#allocation8 + $0x24] sm:$0xf]
    %v1525 = vld [vmem:[#allocation8 + $0x40] sm:$0xf]
    %v1526 = vld [vmem:[#allocation8 + $0x5c] sm:$0xf]
    %v1527 = vpack.c.bf16 %v1522, %v1521
    %v1528 = vld [vmem:[#allocation10 + $0x10] ss:$0 sm:$0xff]
    %v1533 = vunpack.c.l.b16 %v1523
    %v1534 = vunpack.c.l.b16 %v1524
    %v1535 = vunpack.c.l.b16 %v1525
    %v1536 = vunpack.c.l.b16 %v1526
    %v1537 = vpack.c.b16 %v1534, %v1533
    %v1538 = vpack.c.b16 %v1536, %v1535
    %v1542 = vsel %vm97, %v1527, 0
    %1544 = vmatprep.subr.bf16.mxu0 0
    %1545 = vmatpush1.bf16.msra.mxu0 %v1537
    %1546 = vmatprep.subr.bf16.mxu0 0
    %1547 = vmatpush1.bf16.msra.mxu0 %v1538
    %1548 = vmatprep.subr.bf16.mxu0 0
    %1549 = vmatpush1.bf16.msra.mxu0 0
    %1550 = vmatprep.subr.bf16.mxu0 0
    %1551 = vmatpush1.bf16.msra.mxu0 0
    %1552 = vmatprep.subr.bf16.mxu0 0
    %1553 = vmatpush1.bf16.msra.mxu0 0
    %1554 = vmatprep.subr.bf16.mxu0 0
    %1555 = vmatpush1.bf16.msra.mxu0 0
    %1556 = vmatprep.subr.bf16.mxu0 0
    %1557 = vmatpush1.bf16.msra.mxu0 0
    %1558 = vmatprep.subr.bf16.mxu0 0
    %1559 = vmatpush1.bf16.msra.mxu0 0
    %1560 = vmatprep.subr.bf16.mxu0 0
    %1561 = vmatpush1.bf16.msra.mxu0 0
    %1562 = vmatprep.subr.bf16.mxu0 0
    %1563 = vmatpush1.bf16.msra.mxu0 0
    %1564 = vmatprep.subr.bf16.mxu0 0
    %1565 = vmatpush1.bf16.msra.mxu0 0
    %1566 = vmatprep.subr.bf16.mxu0 0
    %1567 = vmatpush1.bf16.msra.mxu0 0
    %1568 = vmatprep.subr.bf16.mxu0 0
    %1569 = vmatpush1.bf16.msra.mxu0 0
    %1570 = vmatprep.subr.bf16.mxu0 0
    %1571 = vmatpush1.bf16.msra.mxu0 0
    %1572 = vmatprep.subr.bf16.mxu0 0
    %1573 = vmatpush1.bf16.msra.mxu0 0
    %1574 = vmatprep.subr.bf16.mxu0 0
    %1575 = vmatpush1.bf16.msra.mxu0 0
    %1576 = vmatprep.mubr.bf16.mxu0 0
    %1577 = vmatmul.mubr.bf16.gmra.mrb[0].mxu0 %v1542
    %v1578 = vpop.f32.mrb[0].mxu0
    %v1579 = vadd.f32 %v1528, %v1578
    %v1580 = vpop.f32.mrb[0].mxu0
    %v1581 = vpop.f32.mrb[0].mxu0
    %v1582 = vadd.f32 %v1528, %v1581
    %v1583 = vpop.f32.mrb[0].mxu0
    %1584 = vdwg.mxu0
    %v1585 = vld [vmem:[#allocation8 + $0xc] sm:$0xf]
    %v1586 = vld [vmem:[#allocation8 + $0x28] sm:$0xf]
    %v1587 = vld [vmem:[#allocation8 + $0x44] sm:$0xf]
    %v1588 = vld [vmem:[#allocation8 + $0x60] sm:$0xf]
    %v1589 = vld [vmem:[#allocation10 + $0x18] ss:$0 sm:$0xff]
    %v1592 = vunpack.c.l.b16 %v93
    %v1593 = vunpack.c.l.b16 %v94
    %v1594 = vpack.c.b16 %v1593, %v1592
    %v1599 = vunpack.c.l.b16 %v1585
    %v1600 = vunpack.c.l.b16 %v1586
    %v1601 = vunpack.c.l.b16 %v1587
    %v1602 = vunpack.c.l.b16 %v1588
    %v1603 = vpack.c.b16 %v1600, %v1599
    %v1604 = vpack.c.b16 %v1602, %v1601
    %v1608 = vsel %vm97, %v1594, 0
    %1610 = vmatprep.subr.bf16.mxu0 0
    %1611 = vmatpush1.bf16.msra.mxu0 %v1603
    %1612 = vmatprep.subr.bf16.mxu0 0
    %1613 = vmatpush1.bf16.msra.mxu0 %v1604
    %1614 = vmatprep.subr.bf16.mxu0 0
    %1615 = vmatpush1.bf16.msra.mxu0 0
    %1616 = vmatprep.subr.bf16.mxu0 0
    %1617 = vmatpush1.bf16.msra.mxu0 0
    %1618 = vmatprep.subr.bf16.mxu0 0
    %1619 = vmatpush1.bf16.msra.mxu0 0
    %1620 = vmatprep.subr.bf16.mxu0 0
    %1621 = vmatpush1.bf16.msra.mxu0 0
    %1622 = vmatprep.subr.bf16.mxu0 0
    %1623 = vmatpush1.bf16.msra.mxu0 0
    %1624 = vmatprep.subr.bf16.mxu0 0
    %1625 = vmatpush1.bf16.msra.mxu0 0
    %1626 = vmatprep.subr.bf16.mxu0 0
    %1627 = vmatpush1.bf16.msra.mxu0 0
    %1628 = vmatprep.subr.bf16.mxu0 0
    %1629 = vmatpush1.bf16.msra.mxu0 0
    %1630 = vmatprep.subr.bf16.mxu0 0
    %1631 = vmatpush1.bf16.msra.mxu0 0
    %1632 = vmatprep.subr.bf16.mxu0 0
    %1633 = vmatpush1.bf16.msra.mxu0 0
    %1634 = vmatprep.subr.bf16.mxu0 0
    %1635 = vmatpush1.bf16.msra.mxu0 0
    %1636 = vmatprep.subr.bf16.mxu0 0
    %1637 = vmatpush1.bf16.msra.mxu0 0
    %1638 = vmatprep.subr.bf16.mxu0 0
    %1639 = vmatpush1.bf16.msra.mxu0 0
    %1640 = vmatprep.subr.bf16.mxu0 0
    %1641 = vmatpush1.bf16.msra.mxu0 0
    %1642 = vmatprep.mubr.bf16.mxu0 0
    %1643 = vmatmul.mubr.bf16.gmra.mrb[0].mxu0 %v1608
    %v1644 = vpop.f32.mrb[0].mxu0
    %v1645 = vadd.f32 %v1589, %v1644
    %v1646 = vpop.f32.mrb[0].mxu0
    %v1647 = vpop.f32.mrb[0].mxu0
    %v1648 = vadd.f32 %v1589, %v1647
    %v1649 = vpop.f32.mrb[0].mxu0
    %1650 = vdwg.mxu0
    %v1651 = vld [vmem:[%s3] sm:$0x1]
    %v1652 = vpack.c.bf16 %v1579, %v1579
    %v1653 = vpack.c.bf16 %v1645, %v1645
    %v1655 = vsel %vm210, %v1652, 0
    %v1658 = vsel %vm210, %v1653, 0
    %1660 = vmatprep.subr.bf16.mxu0 0
    %1661 = vmatpush1.bf16.xpose.msra.mxu0 %v1658
    %1662 = vmatprep.subr.bf16.mxu0 0
    %1663 = vmatpush1.bf16.xpose.msra.mxu0 0
    %1664 = vmatprep.subr.bf16.mxu0 0
    %1665 = vmatpush1.bf16.xpose.msra.mxu0 0
    %1666 = vmatprep.subr.bf16.mxu0 0
    %1667 = vmatpush1.bf16.xpose.msra.mxu0 0
    %1668 = vmatprep.subr.bf16.mxu0 0
    %1669 = vmatpush1.bf16.xpose.msra.mxu0 0
    %1670 = vmatprep.subr.bf16.mxu0 0
    %1671 = vmatpush1.bf16.xpose.msra.mxu0 0
    %1672 = vmatprep.subr.bf16.mxu0 0
    %1673 = vmatpush1.bf16.xpose.msra.mxu0 0
    %1674 = vmatprep.subr.bf16.mxu0 0
    %1675 = vmatpush1.bf16.xpose.msra.mxu0 0
    %1676 = vmatprep.subr.bf16.mxu0 0
    %1677 = vmatpush1.bf16.xpose.msra.mxu0 0
    %1678 = vmatprep.subr.bf16.mxu0 0
    %1679 = vmatpush1.bf16.xpose.msra.mxu0 0
    %1680 = vmatprep.subr.bf16.mxu0 0
    %1681 = vmatpush1.bf16.xpose.msra.mxu0 0
    %1682 = vmatprep.subr.bf16.mxu0 0
    %1683 = vmatpush1.bf16.xpose.msra.mxu0 0
    %1684 = vmatprep.subr.bf16.mxu0 0
    %1685 = vmatpush1.bf16.xpose.msra.mxu0 0
    %1686 = vmatprep.subr.bf16.mxu0 0
    %1687 = vmatpush1.bf16.xpose.msra.mxu0 0
    %1688 = vmatprep.subr.bf16.mxu0 0
    %1689 = vmatpush1.bf16.xpose.msra.mxu0 0
    %1690 = vmatprep.subr.bf16.mxu0 0
    %1691 = vmatpush1.bf16.xpose.msra.mxu0 0
    %1692 = vmatprep.mubr.bf16.mxu0 0
    %1693 = vmatmul.mubr.bf16.gmra.mrb[0].mxu0 %v1655
    %v1694 = vpop.f32.mrb[0].mxu0
    %v1695 = vadd.f32 0.0, %v1694
    %v1696 = vpop.f32.mrb[0].mxu0
    %v1697 = vpop.f32.mrb[0].mxu0
    %v1698 = vpop.f32.mrb[0].mxu0
    %1699 = vdwg.mxu0
    %vm1700 = vcmp.gt.f32.partialorder %v1651, 0.5
    %v1701 = vsel %vm1700, 1, 0
    %v1702 = vlaneseq
    %v1703 = vshrl.u32 %v1702, 7
    %v1704 = vsub.s32 0, %v1703
    %v1705 = vrot.slane %v1701, %v1704
    %vm1706 = vcmp.eq.s32.totalorder %v1705, 1
    %v1707 = vsel %vm1706, %v1695, -1e+09
    %v1708 = vsel %vm210, %v1707, -inf
    %1709 = vmax.xlane.f32.xlu0 %v1708
    %v1710 = vpop.xlane.xlu0 %1709
    %v1711 = vsub.f32 %v1707, %v1710
    %v1712 = vmul.f32 %v1711, 1.442695
    %v1713 = vpow.pop %v1712
    %v1714 = vsel %vm210, %v1713, 0.0
    %1715 = vadd.xlane.f32.xlu0 %v1714
    %v1716 = vpop.xlane.xlu0 %1715
    %v1717 = vrcp.pop %v1716
    %v1718 = vmul.f32 %v1713, %v1717
    %v1719 = vpack.c.bf16 %v1718, %v1718
    %1721 = vrot.lane.b32.xlu0 %v1653, 96
    %v1722 = vpop.permute.xlu0 %1721
    %v1724 = vsel %vm210, %v1719, 0
    %v1727 = vsel %vm276, %v1722, 0
    %1729 = vmatprep.subr.bf16.mxu0 0
    %1730 = vmatpush1.bf16.msra.mxu0 %v1727
    %1731 = vmatprep.subr.bf16.mxu0 0
    %1732 = vmatpush1.bf16.msra.mxu0 0
    %1733 = vmatprep.subr.bf16.mxu0 0
    %1734 = vmatpush1.bf16.msra.mxu0 0
    %1735 = vmatprep.subr.bf16.mxu0 0
    %1736 = vmatpush1.bf16.msra.mxu0 0
    %1737 = vmatprep.subr.bf16.mxu0 0
    %1738 = vmatpush1.bf16.msra.mxu0 0
    %1739 = vmatprep.subr.bf16.mxu0 0
    %1740 = vmatpush1.bf16.msra.mxu0 0
    %1741 = vmatprep.subr.bf16.mxu0 0
    %1742 = vmatpush1.bf16.msra.mxu0 0
    %1743 = vmatprep.subr.bf16.mxu0 0
    %1744 = vmatpush1.bf16.msra.mxu0 0
    %1745 = vmatprep.subr.bf16.mxu0 0
    %1746 = vmatpush1.bf16.msra.mxu0 0
    %1747 = vmatprep.subr.bf16.mxu0 0
    %1748 = vmatpush1.bf16.msra.mxu0 0
    %1749 = vmatprep.subr.bf16.mxu0 0
    %1750 = vmatpush1.bf16.msra.mxu0 0
    %1751 = vmatprep.subr.bf16.mxu0 0
    %1752 = vmatpush1.bf16.msra.mxu0 0
    %1753 = vmatprep.subr.bf16.mxu0 0
    %1754 = vmatpush1.bf16.msra.mxu0 0
    %1755 = vmatprep.subr.bf16.mxu0 0
    %1756 = vmatpush1.bf16.msra.mxu0 0
    %1757 = vmatprep.subr.bf16.mxu0 0
    %1758 = vmatpush1.bf16.msra.mxu0 0
    %1759 = vmatprep.subr.bf16.mxu0 0
    %1760 = vmatpush1.bf16.msra.mxu0 0
    %1761 = vmatprep.mubr.bf16.mxu0 0
    %1762 = vmatmul.mubr.bf16.gmra.mrb[0].mxu0 %v1724
    %v1763 = vpop.f32.mrb[0].mxu0
    %v1764 = vadd.f32 0.0, %v1763
    %v1765 = vpop.f32.mrb[0].mxu0
    %v1766 = vpop.f32.mrb[0].mxu0
    %v1767 = vpop.f32.mrb[0].mxu0
    %1768 = vdwg.mxu0
    %v1769 = vld [vmem:[#allocation8 + $0x10] sm:$0xf]
    %v1770 = vpack.c.bf16 %v1764, %v1764
    %1772 = vrot.lane.b32.xlu0 %v1652, 120
    %v1773 = vpop.permute.xlu0 %1772
    %1774 = vrot.lane.b32.xlu0 %v1653, 120
    %v1775 = vpop.permute.xlu0 %1774
    %v1777 = vsel %vm210, %v1773, 0
    %v1780 = vsel %vm210, %v1775, 0
    %1782 = vmatprep.subr.bf16.mxu0 0
    %1783 = vmatpush1.bf16.xpose.msra.mxu0 %v1780
    %1784 = vmatprep.subr.bf16.mxu0 0
    %1785 = vmatpush1.bf16.xpose.msra.mxu0 0
    %1786 = vmatprep.subr.bf16.mxu0 0
    %1787 = vmatpush1.bf16.xpose.msra.mxu0 0
    %1788 = vmatprep.subr.bf16.mxu0 0
    %1789 = vmatpush1.bf16.xpose.msra.mxu0 0
    %1790 = vmatprep.subr.bf16.mxu0 0
    %1791 = vmatpush1.bf16.xpose.msra.mxu0 0
    %1792 = vmatprep.subr.bf16.mxu0 0
    %1793 = vmatpush1.bf16.xpose.msra.mxu0 0
    %1794 = vmatprep.subr.bf16.mxu0 0
    %1795 = vmatpush1.bf16.xpose.msra.mxu0 0
    %1796 = vmatprep.subr.bf16.mxu0 0
    %1797 = vmatpush1.bf16.xpose.msra.mxu0 0
    %1798 = vmatprep.subr.bf16.mxu0 0
    %1799 = vmatpush1.bf16.xpose.msra.mxu0 0
    %1800 = vmatprep.subr.bf16.mxu0 0
    %1801 = vmatpush1.bf16.xpose.msra.mxu0 0
    %1802 = vmatprep.subr.bf16.mxu0 0
    %1803 = vmatpush1.bf16.xpose.msra.mxu0 0
    %1804 = vmatprep.subr.bf16.mxu0 0
    %1805 = vmatpush1.bf16.xpose.msra.mxu0 0
    %1806 = vmatprep.subr.bf16.mxu0 0
    %1807 = vmatpush1.bf16.xpose.msra.mxu0 0
    %1808 = vmatprep.subr.bf16.mxu0 0
    %1809 = vmatpush1.bf16.xpose.msra.mxu0 0
    %1810 = vmatprep.subr.bf16.mxu0 0
    %1811 = vmatpush1.bf16.xpose.msra.mxu0 0
    %1812 = vmatprep.subr.bf16.mxu0 0
    %1813 = vmatpush1.bf16.xpose.msra.mxu0 0
    %1814 = vmatprep.mubr.bf16.mxu0 0
    %1815 = vmatmul.mubr.bf16.gmra.mrb[0].mxu0 %v1777
    %v1816 = vpop.f32.mrb[0].mxu0
    %v1817 = vadd.f32 0.0, %v1816
    %v1818 = vpop.f32.mrb[0].mxu0
    %v1819 = vpop.f32.mrb[0].mxu0
    %v1820 = vpop.f32.mrb[0].mxu0
    %1821 = vdwg.mxu0
    %v1822 = vsel %vm1706, %v1817, -1e+09
    %v1823 = vsel %vm210, %v1822, -inf
    %1824 = vmax.xlane.f32.xlu0 %v1823
    %v1825 = vpop.xlane.xlu0 %1824
    %v1826 = vsub.f32 %v1822, %v1825
    %v1827 = vmul.f32 %v1826, 1.442695
    %v1828 = vpow.pop %v1827
    %v1829 = vsel %vm210, %v1828, 0.0
    %1830 = vadd.xlane.f32.xlu0 %v1829
    %v1831 = vpop.xlane.xlu0 %1830
    %v1832 = vrcp.pop %v1831
    %v1833 = vmul.f32 %v1828, %v1832
    %v1834 = vpack.c.bf16 %v1833, %v1833
    %1835 = vrot.lane.b32.xlu0 %v1653, 88
    %v1836 = vpop.permute.xlu0 %1835
    %v1838 = vsel %vm210, %v1834, 0
    %v1841 = vsel %vm276, %v1836, 0
    %1843 = vmatprep.subr.bf16.mxu0 0
    %1844 = vmatpush1.bf16.msra.mxu0 %v1841
    %1845 = vmatprep.subr.bf16.mxu0 0
    %1846 = vmatpush1.bf16.msra.mxu0 0
    %1847 = vmatprep.subr.bf16.mxu0 0
    %1848 = vmatpush1.bf16.msra.mxu0 0
    %1849 = vmatprep.subr.bf16.mxu0 0
    %1850 = vmatpush1.bf16.msra.mxu0 0
    %1851 = vmatprep.subr.bf16.mxu0 0
    %1852 = vmatpush1.bf16.msra.mxu0 0
    %1853 = vmatprep.subr.bf16.mxu0 0
    %1854 = vmatpush1.bf16.msra.mxu0 0
    %1855 = vmatprep.subr.bf16.mxu0 0
    %1856 = vmatpush1.bf16.msra.mxu0 0
    %1857 = vmatprep.subr.bf16.mxu0 0
    %1858 = vmatpush1.bf16.msra.mxu0 0
    %1859 = vmatprep.subr.bf16.mxu0 0
    %1860 = vmatpush1.bf16.msra.mxu0 0
    %1861 = vmatprep.subr.bf16.mxu0 0
    %1862 = vmatpush1.bf16.msra.mxu0 0
    %1863 = vmatprep.subr.bf16.mxu0 0
    %1864 = vmatpush1.bf16.msra.mxu0 0
    %1865 = vmatprep.subr.bf16.mxu0 0
    %1866 = vmatpush1.bf16.msra.mxu0 0
    %1867 = vmatprep.subr.bf16.mxu0 0
    %1868 = vmatpush1.bf16.msra.mxu0 0
    %1869 = vmatprep.subr.bf16.mxu0 0
    %1870 = vmatpush1.bf16.msra.mxu0 0
    %1871 = vmatprep.subr.bf16.mxu0 0
    %1872 = vmatpush1.bf16.msra.mxu0 0
    %1873 = vmatprep.subr.bf16.mxu0 0
    %1874 = vmatpush1.bf16.msra.mxu0 0
    %1875 = vmatprep.mubr.bf16.mxu0 0
    %1876 = vmatmul.mubr.bf16.gmra.mrb[0].mxu0 %v1838
    %v1877 = vpop.f32.mrb[0].mxu0
    %v1878 = vadd.f32 0.0, %v1877
    %v1879 = vpop.f32.mrb[0].mxu0
    %v1880 = vpop.f32.mrb[0].mxu0
    %v1881 = vpop.f32.mrb[0].mxu0
    %1882 = vdwg.mxu0
    %v1883 = vld [vmem:[#allocation8 + $0x2c] sm:$0xf]
    %v1884 = vpack.c.bf16 %v1878, %v1878
    %v1886 = vsel %vm210, %v1884, 0
    %v1889 = vsel %vm276, %v1883, 0
    %1891 = vmatprep.subr.bf16.mxu0 0
    %1892 = vmatpush1.bf16.msra.mxu0 %v1889
    %1893 = vmatprep.subr.bf16.mxu0 0
    %1894 = vmatpush1.bf16.msra.mxu0 0
    %1895 = vmatprep.subr.bf16.mxu0 0
    %1896 = vmatpush1.bf16.msra.mxu0 0
    %1897 = vmatprep.subr.bf16.mxu0 0
    %1898 = vmatpush1.bf16.msra.mxu0 0
    %1899 = vmatprep.subr.bf16.mxu0 0
    %1900 = vmatpush1.bf16.msra.mxu0 0
    %1901 = vmatprep.subr.bf16.mxu0 0
    %1902 = vmatpush1.bf16.msra.mxu0 0
    %1903 = vmatprep.subr.bf16.mxu0 0
    %1904 = vmatpush1.bf16.msra.mxu0 0
    %1905 = vmatprep.subr.bf16.mxu0 0
    %1906 = vmatpush1.bf16.msra.mxu0 0
    %1907 = vmatprep.subr.bf16.mxu0 0
    %1908 = vmatpush1.bf16.msra.mxu0 0
    %1909 = vmatprep.subr.bf16.mxu0 0
    %1910 = vmatpush1.bf16.msra.mxu0 0
    %1911 = vmatprep.subr.bf16.mxu0 0
    %1912 = vmatpush1.bf16.msra.mxu0 0
    %1913 = vmatprep.subr.bf16.mxu0 0
    %1914 = vmatpush1.bf16.msra.mxu0 0
    %1915 = vmatprep.subr.bf16.mxu0 0
    %1916 = vmatpush1.bf16.msra.mxu0 0
    %1917 = vmatprep.subr.bf16.mxu0 0
    %1918 = vmatpush1.bf16.msra.mxu0 0
    %1919 = vmatprep.subr.bf16.mxu0 0
    %1920 = vmatpush1.bf16.msra.mxu0 0
    %1921 = vmatprep.subr.bf16.mxu0 0
    %1922 = vmatpush1.bf16.msra.mxu0 0
    %1923 = vmatprep.mubr.bf16.mxu0 0
    %1924 = vmatmul.mubr.bf16.gmra.mrb[0].mxu0 %v1886
    %v1925 = vpop.f32.mrb[0].mxu0
    %v1926 = vadd.f32 0.0, %v1925
    %v1927 = vpop.f32.mrb[0].mxu0
    %v1928 = vpop.f32.mrb[0].mxu0
    %v1929 = vpop.f32.mrb[0].mxu0
    %1930 = vdwg.mxu0
    %v1932 = vsel %vm210, %v1770, 0
    %v1935 = vsel %vm276, %v1769, 0
    %1937 = vmatprep.subr.bf16.mxu0 0
    %1938 = vmatpush1.bf16.msra.mxu0 %v1935
    %1939 = vmatprep.subr.bf16.mxu0 0
    %1940 = vmatpush1.bf16.msra.mxu0 0
    %1941 = vmatprep.subr.bf16.mxu0 0
    %1942 = vmatpush1.bf16.msra.mxu0 0
    %1943 = vmatprep.subr.bf16.mxu0 0
    %1944 = vmatpush1.bf16.msra.mxu0 0
    %1945 = vmatprep.subr.bf16.mxu0 0
    %1946 = vmatpush1.bf16.msra.mxu0 0
    %1947 = vmatprep.subr.bf16.mxu0 0
    %1948 = vmatpush1.bf16.msra.mxu0 0
    %1949 = vmatprep.subr.bf16.mxu0 0
    %1950 = vmatpush1.bf16.msra.mxu0 0
    %1951 = vmatprep.subr.bf16.mxu0 0
    %1952 = vmatpush1.bf16.msra.mxu0 0
    %1953 = vmatprep.subr.bf16.mxu0 0
    %1954 = vmatpush1.bf16.msra.mxu0 0
    %1955 = vmatprep.subr.bf16.mxu0 0
    %1956 = vmatpush1.bf16.msra.mxu0 0
    %1957 = vmatprep.subr.bf16.mxu0 0
    %1958 = vmatpush1.bf16.msra.mxu0 0
    %1959 = vmatprep.subr.bf16.mxu0 0
    %1960 = vmatpush1.bf16.msra.mxu0 0
    %1961 = vmatprep.subr.bf16.mxu0 0
    %1962 = vmatpush1.bf16.msra.mxu0 0
    %1963 = vmatprep.subr.bf16.mxu0 0
    %1964 = vmatpush1.bf16.msra.mxu0 0
    %1965 = vmatprep.subr.bf16.mxu0 0
    %1966 = vmatpush1.bf16.msra.mxu0 0
    %1967 = vmatprep.subr.bf16.mxu0 0
    %1968 = vmatpush1.bf16.msra.mxu0 0
    %1969 = vmatprep.mubr.bf16.mxu0 0
    %1970 = vmatmul.mubr.bf16.gmra.mrb[0].mxu0 %v1932
    %v1971 = vpop.f32.mrb[0].mxu0
    %v1972 = vadd.f32 %v1926, %v1971
    %v1973 = vpop.f32.mrb[0].mxu0
    %v1974 = vpop.f32.mrb[0].mxu0
    %v1975 = vpop.f32.mrb[0].mxu0
    %1976 = vdwg.mxu0
    %1977 = vrot.lane.b32.xlu0 %v1652, 112
    %v1978 = vpop.permute.xlu0 %1977
    %1979 = vrot.lane.b32.xlu0 %v1653, 112
    %v1980 = vpop.permute.xlu0 %1979
    %v1982 = vsel %vm210, %v1978, 0
    %v1985 = vsel %vm210, %v1980, 0
    %1987 = vmatprep.subr.bf16.mxu0 0
    %1988 = vmatpush1.bf16.xpose.msra.mxu0 %v1985
    %1989 = vmatprep.subr.bf16.mxu0 0
    %1990 = vmatpush1.bf16.xpose.msra.mxu0 0
    %1991 = vmatprep.subr.bf16.mxu0 0
    %1992 = vmatpush1.bf16.xpose.msra.mxu0 0
    %1993 = vmatprep.subr.bf16.mxu0 0
    %1994 = vmatpush1.bf16.xpose.msra.mxu0 0
    %1995 = vmatprep.subr.bf16.mxu0 0
    %1996 = vmatpush1.bf16.xpose.msra.mxu0 0
    %1997 = vmatprep.subr.bf16.mxu0 0
    %1998 = vmatpush1.bf16.xpose.msra.mxu0 0
    %1999 = vmatprep.subr.bf16.mxu0 0
    %2000 = vmatpush1.bf16.xpose.msra.mxu0 0
    %2001 = vmatprep.subr.bf16.mxu0 0
    %2002 = vmatpush1.bf16.xpose.msra.mxu0 0
    %2003 = vmatprep.subr.bf16.mxu0 0
    %2004 = vmatpush1.bf16.xpose.msra.mxu0 0
    %2005 = vmatprep.subr.bf16.mxu0 0
    %2006 = vmatpush1.bf16.xpose.msra.mxu0 0
    %2007 = vmatprep.subr.bf16.mxu0 0
    %2008 = vmatpush1.bf16.xpose.msra.mxu0 0
    %2009 = vmatprep.subr.bf16.mxu0 0
    %2010 = vmatpush1.bf16.xpose.msra.mxu0 0
    %2011 = vmatprep.subr.bf16.mxu0 0
    %2012 = vmatpush1.bf16.xpose.msra.mxu0 0
    %2013 = vmatprep.subr.bf16.mxu0 0
    %2014 = vmatpush1.bf16.xpose.msra.mxu0 0
    %2015 = vmatprep.subr.bf16.mxu0 0
    %2016 = vmatpush1.bf16.xpose.msra.mxu0 0
    %2017 = vmatprep.subr.bf16.mxu0 0
    %2018 = vmatpush1.bf16.xpose.msra.mxu0 0
    %2019 = vmatprep.mubr.bf16.mxu0 0
    %2020 = vmatmul.mubr.bf16.gmra.mrb[0].mxu0 %v1982
    %v2021 = vpop.f32.mrb[0].mxu0
    %v2022 = vadd.f32 0.0, %v2021
    %v2023 = vpop.f32.mrb[0].mxu0
    %v2024 = vpop.f32.mrb[0].mxu0
    %v2025 = vpop.f32.mrb[0].mxu0
    %2026 = vdwg.mxu0
    %v2027 = vsel %vm1706, %v2022, -1e+09
    %v2028 = vsel %vm210, %v2027, -inf
    %2029 = vmax.xlane.f32.xlu0 %v2028
    %v2030 = vpop.xlane.xlu0 %2029
    %v2031 = vsub.f32 %v2027, %v2030
    %v2032 = vmul.f32 %v2031, 1.442695
    %v2033 = vpow.pop %v2032
    %v2034 = vsel %vm210, %v2033, 0.0
    %2035 = vadd.xlane.f32.xlu0 %v2034
    %v2036 = vpop.xlane.xlu0 %2035
    %v2037 = vrcp.pop %v2036
    %v2038 = vmul.f32 %v2033, %v2037
    %v2039 = vpack.c.bf16 %v2038, %v2038
    %2040 = vrot.lane.b32.xlu0 %v1653, 80
    %v2041 = vpop.permute.xlu0 %2040
    %v2043 = vsel %vm210, %v2039, 0
    %v2046 = vsel %vm276, %v2041, 0
    %2048 = vmatprep.subr.bf16.mxu0 0
    %2049 = vmatpush1.bf16.msra.mxu0 %v2046
    %2050 = vmatprep.subr.bf16.mxu0 0
    %2051 = vmatpush1.bf16.msra.mxu0 0
    %2052 = vmatprep.subr.bf16.mxu0 0
    %2053 = vmatpush1.bf16.msra.mxu0 0
    %2054 = vmatprep.subr.bf16.mxu0 0
    %2055 = vmatpush1.bf16.msra.mxu0 0
    %2056 = vmatprep.subr.bf16.mxu0 0
    %2057 = vmatpush1.bf16.msra.mxu0 0
    %2058 = vmatprep.subr.bf16.mxu0 0
    %2059 = vmatpush1.bf16.msra.mxu0 0
    %2060 = vmatprep.subr.bf16.mxu0 0
    %2061 = vmatpush1.bf16.msra.mxu0 0
    %2062 = vmatprep.subr.bf16.mxu0 0
    %2063 = vmatpush1.bf16.msra.mxu0 0
    %2064 = vmatprep.subr.bf16.mxu0 0
    %2065 = vmatpush1.bf16.msra.mxu0 0
    %2066 = vmatprep.subr.bf16.mxu0 0
    %2067 = vmatpush1.bf16.msra.mxu0 0
    %2068 = vmatprep.subr.bf16.mxu0 0
    %2069 = vmatpush1.bf16.msra.mxu0 0
    %2070 = vmatprep.subr.bf16.mxu0 0
    %2071 = vmatpush1.bf16.msra.mxu0 0
    %2072 = vmatprep.subr.bf16.mxu0 0
    %2073 = vmatpush1.bf16.msra.mxu0 0
    %2074 = vmatprep.subr.bf16.mxu0 0
    %2075 = vmatpush1.bf16.msra.mxu0 0
    %2076 = vmatprep.subr.bf16.mxu0 0
    %2077 = vmatpush1.bf16.msra.mxu0 0
    %2078 = vmatprep.subr.bf16.mxu0 0
    %2079 = vmatpush1.bf16.msra.mxu0 0
    %2080 = vmatprep.mubr.bf16.mxu0 0
    %2081 = vmatmul.mubr.bf16.gmra.mrb[0].mxu0 %v2043
    %v2082 = vpop.f32.mrb[0].mxu0
    %v2083 = vadd.f32 0.0, %v2082
    %v2084 = vpop.f32.mrb[0].mxu0
    %v2085 = vpop.f32.mrb[0].mxu0
    %v2086 = vpop.f32.mrb[0].mxu0
    %2087 = vdwg.mxu0
    %v2088 = vld [vmem:[#allocation8 + $0x48] sm:$0xf]
    %v2089 = vpack.c.bf16 %v2083, %v2083
    %v2091 = vsel %vm210, %v2089, 0
    %v2094 = vsel %vm276, %v2088, 0
    %2096 = vmatprep.subr.bf16.mxu0 0
    %2097 = vmatpush1.bf16.msra.mxu0 %v2094
    %2098 = vmatprep.subr.bf16.mxu0 0
    %2099 = vmatpush1.bf16.msra.mxu0 0
    %2100 = vmatprep.subr.bf16.mxu0 0
    %2101 = vmatpush1.bf16.msra.mxu0 0
    %2102 = vmatprep.subr.bf16.mxu0 0
    %2103 = vmatpush1.bf16.msra.mxu0 0
    %2104 = vmatprep.subr.bf16.mxu0 0
    %2105 = vmatpush1.bf16.msra.mxu0 0
    %2106 = vmatprep.subr.bf16.mxu0 0
    %2107 = vmatpush1.bf16.msra.mxu0 0
    %2108 = vmatprep.subr.bf16.mxu0 0
    %2109 = vmatpush1.bf16.msra.mxu0 0
    %2110 = vmatprep.subr.bf16.mxu0 0
    %2111 = vmatpush1.bf16.msra.mxu0 0
    %2112 = vmatprep.subr.bf16.mxu0 0
    %2113 = vmatpush1.bf16.msra.mxu0 0
    %2114 = vmatprep.subr.bf16.mxu0 0
    %2115 = vmatpush1.bf16.msra.mxu0 0
    %2116 = vmatprep.subr.bf16.mxu0 0
    %2117 = vmatpush1.bf16.msra.mxu0 0
    %2118 = vmatprep.subr.bf16.mxu0 0
    %2119 = vmatpush1.bf16.msra.mxu0 0
    %2120 = vmatprep.subr.bf16.mxu0 0
    %2121 = vmatpush1.bf16.msra.mxu0 0
    %2122 = vmatprep.subr.bf16.mxu0 0
    %2123 = vmatpush1.bf16.msra.mxu0 0
    %2124 = vmatprep.subr.bf16.mxu0 0
    %2125 = vmatpush1.bf16.msra.mxu0 0
    %2126 = vmatprep.subr.bf16.mxu0 0
    %2127 = vmatpush1.bf16.msra.mxu0 0
    %2128 = vmatprep.mubr.bf16.mxu0 0
    %2129 = vmatmul.mubr.bf16.gmra.mrb[0].mxu0 %v2091
    %v2130 = vpop.f32.mrb[0].mxu0
    %v2131 = vadd.f32 0.0, %v2130
    %v2132 = vpop.f32.mrb[0].mxu0
    %v2133 = vpop.f32.mrb[0].mxu0
    %v2134 = vpop.f32.mrb[0].mxu0
    %2135 = vdwg.mxu0
    %v2136 = vadd.f32 %v1972, %v2131
    %2137 = vrot.lane.b32.xlu0 %v1652, 104
    %v2138 = vpop.permute.xlu0 %2137
    %2139 = vrot.lane.b32.xlu0 %v1653, 104
    %v2140 = vpop.permute.xlu0 %2139
    %v2142 = vsel %vm210, %v2138, 0
    %v2145 = vsel %vm210, %v2140, 0
    %2147 = vmatprep.subr.bf16.mxu0 0
    %2148 = vmatpush1.bf16.xpose.msra.mxu0 %v2145
    %2149 = vmatprep.subr.bf16.mxu0 0
    %2150 = vmatpush1.bf16.xpose.msra.mxu0 0
    %2151 = vmatprep.subr.bf16.mxu0 0
    %2152 = vmatpush1.bf16.xpose.msra.mxu0 0
    %2153 = vmatprep.subr.bf16.mxu0 0
    %2154 = vmatpush1.bf16.xpose.msra.mxu0 0
    %2155 = vmatprep.subr.bf16.mxu0 0
    %2156 = vmatpush1.bf16.xpose.msra.mxu0 0
    %2157 = vmatprep.subr.bf16.mxu0 0
    %2158 = vmatpush1.bf16.xpose.msra.mxu0 0
    %2159 = vmatprep.subr.bf16.mxu0 0
    %2160 = vmatpush1.bf16.xpose.msra.mxu0 0
    %2161 = vmatprep.subr.bf16.mxu0 0
    %2162 = vmatpush1.bf16.xpose.msra.mxu0 0
    %2163 = vmatprep.subr.bf16.mxu0 0
    %2164 = vmatpush1.bf16.xpose.msra.mxu0 0
    %2165 = vmatprep.subr.bf16.mxu0 0
    %2166 = vmatpush1.bf16.xpose.msra.mxu0 0
    %2167 = vmatprep.subr.bf16.mxu0 0
    %2168 = vmatpush1.bf16.xpose.msra.mxu0 0
    %2169 = vmatprep.subr.bf16.mxu0 0
    %2170 = vmatpush1.bf16.xpose.msra.mxu0 0
    %2171 = vmatprep.subr.bf16.mxu0 0
    %2172 = vmatpush1.bf16.xpose.msra.mxu0 0
    %2173 = vmatprep.subr.bf16.mxu0 0
    %2174 = vmatpush1.bf16.xpose.msra.mxu0 0
    %2175 = vmatprep.subr.bf16.mxu0 0
    %2176 = vmatpush1.bf16.xpose.msra.mxu0 0
    %2177 = vmatprep.subr.bf16.mxu0 0
    %2178 = vmatpush1.bf16.xpose.msra.mxu0 0
    %2179 = vmatprep.mubr.bf16.mxu0 0
    %2180 = vmatmul.mubr.bf16.gmra.mrb[0].mxu0 %v2142
    %v2181 = vpop.f32.mrb[0].mxu0
    %v2182 = vadd.f32 0.0, %v2181
    %v2183 = vpop.f32.mrb[0].mxu0
    %v2184 = vpop.f32.mrb[0].mxu0
    %v2185 = vpop.f32.mrb[0].mxu0
    %2186 = vdwg.mxu0
    %v2187 = vsel %vm1706, %v2182, -1e+09
    %v2188 = vsel %vm210, %v2187, -inf
    %2189 = vmax.xlane.f32.xlu0 %v2188
    %v2190 = vpop.xlane.xlu0 %2189
    %v2191 = vsub.f32 %v2187, %v2190
    %v2192 = vmul.f32 %v2191, 1.442695
    %v2193 = vpow.pop %v2192
    %v2194 = vsel %vm210, %v2193, 0.0
    %2195 = vadd.xlane.f32.xlu0 %v2194
    %v2196 = vpop.xlane.xlu0 %2195
    %v2197 = vrcp.pop %v2196
    %v2198 = vmul.f32 %v2193, %v2197
    %v2199 = vpack.c.bf16 %v2198, %v2198
    %2200 = vrot.lane.b32.xlu0 %v1653, 72
    %v2201 = vpop.permute.xlu0 %2200
    %v2203 = vsel %vm210, %v2199, 0
    %v2206 = vsel %vm276, %v2201, 0
    %2208 = vmatprep.subr.bf16.mxu0 0
    %2209 = vmatpush1.bf16.msra.mxu0 %v2206
    %2210 = vmatprep.subr.bf16.mxu0 0
    %2211 = vmatpush1.bf16.msra.mxu0 0
    %2212 = vmatprep.subr.bf16.mxu0 0
    %2213 = vmatpush1.bf16.msra.mxu0 0
    %2214 = vmatprep.subr.bf16.mxu0 0
    %2215 = vmatpush1.bf16.msra.mxu0 0
    %2216 = vmatprep.subr.bf16.mxu0 0
    %2217 = vmatpush1.bf16.msra.mxu0 0
    %2218 = vmatprep.subr.bf16.mxu0 0
    %2219 = vmatpush1.bf16.msra.mxu0 0
    %2220 = vmatprep.subr.bf16.mxu0 0
    %2221 = vmatpush1.bf16.msra.mxu0 0
    %2222 = vmatprep.subr.bf16.mxu0 0
    %2223 = vmatpush1.bf16.msra.mxu0 0
    %2224 = vmatprep.subr.bf16.mxu0 0
    %2225 = vmatpush1.bf16.msra.mxu0 0
    %2226 = vmatprep.subr.bf16.mxu0 0
    %2227 = vmatpush1.bf16.msra.mxu0 0
    %2228 = vmatprep.subr.bf16.mxu0 0
    %2229 = vmatpush1.bf16.msra.mxu0 0
    %2230 = vmatprep.subr.bf16.mxu0 0
    %2231 = vmatpush1.bf16.msra.mxu0 0
    %2232 = vmatprep.subr.bf16.mxu0 0
    %2233 = vmatpush1.bf16.msra.mxu0 0
    %2234 = vmatprep.subr.bf16.mxu0 0
    %2235 = vmatpush1.bf16.msra.mxu0 0
    %2236 = vmatprep.subr.bf16.mxu0 0
    %2237 = vmatpush1.bf16.msra.mxu0 0
    %2238 = vmatprep.subr.bf16.mxu0 0
    %2239 = vmatpush1.bf16.msra.mxu0 0
    %2240 = vmatprep.mubr.bf16.mxu0 0
    %2241 = vmatmul.mubr.bf16.gmra.mrb[0].mxu0 %v2203
    %v2242 = vpop.f32.mrb[0].mxu0
    %v2243 = vadd.f32 0.0, %v2242
    %v2244 = vpop.f32.mrb[0].mxu0
    %v2245 = vpop.f32.mrb[0].mxu0
    %v2246 = vpop.f32.mrb[0].mxu0
    %2247 = vdwg.mxu0
    %v2248 = vld [vmem:[#allocation8 + $0x64] sm:$0xf]
    %v2249 = vpack.c.bf16 %v2243, %v2243
    %v2251 = vsel %vm210, %v2249, 0
    %v2254 = vsel %vm276, %v2248, 0
    %2256 = vmatprep.subr.bf16.mxu0 0
    %2257 = vmatpush1.bf16.msra.mxu0 %v2254
    %2258 = vmatprep.subr.bf16.mxu0 0
    %2259 = vmatpush1.bf16.msra.mxu0 0
    %2260 = vmatprep.subr.bf16.mxu0 0
    %2261 = vmatpush1.bf16.msra.mxu0 0
    %2262 = vmatprep.subr.bf16.mxu0 0
    %2263 = vmatpush1.bf16.msra.mxu0 0
    %2264 = vmatprep.subr.bf16.mxu0 0
    %2265 = vmatpush1.bf16.msra.mxu0 0
    %2266 = vmatprep.subr.bf16.mxu0 0
    %2267 = vmatpush1.bf16.msra.mxu0 0
    %2268 = vmatprep.subr.bf16.mxu0 0
    %2269 = vmatpush1.bf16.msra.mxu0 0
    %2270 = vmatprep.subr.bf16.mxu0 0
    %2271 = vmatpush1.bf16.msra.mxu0 0
    %2272 = vmatprep.subr.bf16.mxu0 0
    %2273 = vmatpush1.bf16.msra.mxu0 0
    %2274 = vmatprep.subr.bf16.mxu0 0
    %2275 = vmatpush1.bf16.msra.mxu0 0
    %2276 = vmatprep.subr.bf16.mxu0 0
    %2277 = vmatpush1.bf16.msra.mxu0 0
    %2278 = vmatprep.subr.bf16.mxu0 0
    %2279 = vmatpush1.bf16.msra.mxu0 0
    %2280 = vmatprep.subr.bf16.mxu0 0
    %2281 = vmatpush1.bf16.msra.mxu0 0
    %2282 = vmatprep.subr.bf16.mxu0 0
    %2283 = vmatpush1.bf16.msra.mxu0 0
    %2284 = vmatprep.subr.bf16.mxu0 0
    %2285 = vmatpush1.bf16.msra.mxu0 0
    %2286 = vmatprep.subr.bf16.mxu0 0
    %2287 = vmatpush1.bf16.msra.mxu0 0
    %2288 = vmatprep.mubr.bf16.mxu0 0
    %2289 = vmatmul.mubr.bf16.gmra.mrb[0].mxu0 %v2251
    %v2290 = vpop.f32.mrb[0].mxu0
    %v2291 = vadd.f32 0.0, %v2290
    %v2292 = vpop.f32.mrb[0].mxu0
    %v2293 = vpop.f32.mrb[0].mxu0
    %v2294 = vpop.f32.mrb[0].mxu0
    %2295 = vdwg.mxu0
    %v2296 = vadd.f32 %v2136, %v2291
    %s2297 = scalar_lea.vmem %s3, 1
    %v2298 = vld [vmem:[%s2297] sm:$0x1]
    %v2299 = vpack.c.bf16 %v1582, %v1582
    %v2300 = vpack.c.bf16 %v1648, %v1648
    %v2302 = vsel %vm210, %v2299, 0
    %v2305 = vsel %vm210, %v2300, 0
    %2307 = vmatprep.subr.bf16.mxu0 0
    %2308 = vmatpush1.bf16.xpose.msra.mxu0 %v2305
    %2309 = vmatprep.subr.bf16.mxu0 0
    %2310 = vmatpush1.bf16.xpose.msra.mxu0 0
    %2311 = vmatprep.subr.bf16.mxu0 0
    %2312 = vmatpush1.bf16.xpose.msra.mxu0 0
    %2313 = vmatprep.subr.bf16.mxu0 0
    %2314 = vmatpush1.bf16.xpose.msra.mxu0 0
    %2315 = vmatprep.subr.bf16.mxu0 0
    %2316 = vmatpush1.bf16.xpose.msra.mxu0 0
    %2317 = vmatprep.subr.bf16.mxu0 0
    %2318 = vmatpush1.bf16.xpose.msra.mxu0 0
    %2319 = vmatprep.subr.bf16.mxu0 0
    %2320 = vmatpush1.bf16.xpose.msra.mxu0 0
    %2321 = vmatprep.subr.bf16.mxu0 0
    %2322 = vmatpush1.bf16.xpose.msra.mxu0 0
    %2323 = vmatprep.subr.bf16.mxu0 0
    %2324 = vmatpush1.bf16.xpose.msra.mxu0 0
    %2325 = vmatprep.subr.bf16.mxu0 0
    %2326 = vmatpush1.bf16.xpose.msra.mxu0 0
    %2327 = vmatprep.subr.bf16.mxu0 0
    %2328 = vmatpush1.bf16.xpose.msra.mxu0 0
    %2329 = vmatprep.subr.bf16.mxu0 0
    %2330 = vmatpush1.bf16.xpose.msra.mxu0 0
    %2331 = vmatprep.subr.bf16.mxu0 0
    %2332 = vmatpush1.bf16.xpose.msra.mxu0 0
    %2333 = vmatprep.subr.bf16.mxu0 0
    %2334 = vmatpush1.bf16.xpose.msra.mxu0 0
    %2335 = vmatprep.subr.bf16.mxu0 0
    %2336 = vmatpush1.bf16.xpose.msra.mxu0 0
    %2337 = vmatprep.subr.bf16.mxu0 0
    %2338 = vmatpush1.bf16.xpose.msra.mxu0 0
    %2339 = vmatprep.mubr.bf16.mxu0 0
    %2340 = vmatmul.mubr.bf16.gmra.mrb[0].mxu0 %v2302
    %v2341 = vpop.f32.mrb[0].mxu0
    %v2342 = vadd.f32 0.0, %v2341
    %v2343 = vpop.f32.mrb[0].mxu0
    %v2344 = vpop.f32.mrb[0].mxu0
    %v2345 = vpop.f32.mrb[0].mxu0
    %2346 = vdwg.mxu0
    %vm2347 = vcmp.gt.f32.partialorder %v2298, 0.5
    %v2348 = vsel %vm2347, 1, 0
    %v2349 = vlaneseq
    %v2350 = vshrl.u32 %v2349, 7
    %v2351 = vsub.s32 0, %v2350
    %v2352 = vrot.slane %v2348, %v2351
    %vm2353 = vcmp.eq.s32.totalorder %v2352, 1
    %v2354 = vsel %vm2353, %v2342, -1e+09
    %v2355 = vsel %vm210, %v2354, -inf
    %2356 = vmax.xlane.f32.xlu0 %v2355
    %v2357 = vpop.xlane.xlu0 %2356
    %v2358 = vsub.f32 %v2354, %v2357
    %v2359 = vmul.f32 %v2358, 1.442695
    %v2360 = vpow.pop %v2359
    %v2361 = vsel %vm210, %v2360, 0.0
    %2362 = vadd.xlane.f32.xlu0 %v2361
    %v2363 = vpop.xlane.xlu0 %2362
    %v2364 = vrcp.pop %v2363
    %v2365 = vmul.f32 %v2360, %v2364
    %v2366 = vpack.c.bf16 %v2365, %v2365
    %2368 = vrot.lane.b32.xlu0 %v2300, 96
    %v2369 = vpop.permute.xlu0 %2368
    %v2371 = vsel %vm210, %v2366, 0
    %v2374 = vsel %vm276, %v2369, 0
    %2376 = vmatprep.subr.bf16.mxu0 0
    %2377 = vmatpush1.bf16.msra.mxu0 %v2374
    %2378 = vmatprep.subr.bf16.mxu0 0
    %2379 = vmatpush1.bf16.msra.mxu0 0
    %2380 = vmatprep.subr.bf16.mxu0 0
    %2381 = vmatpush1.bf16.msra.mxu0 0
    %2382 = vmatprep.subr.bf16.mxu0 0
    %2383 = vmatpush1.bf16.msra.mxu0 0
    %2384 = vmatprep.subr.bf16.mxu0 0
    %2385 = vmatpush1.bf16.msra.mxu0 0
    %2386 = vmatprep.subr.bf16.mxu0 0
    %2387 = vmatpush1.bf16.msra.mxu0 0
    %2388 = vmatprep.subr.bf16.mxu0 0
    %2389 = vmatpush1.bf16.msra.mxu0 0
    %2390 = vmatprep.subr.bf16.mxu0 0
    %2391 = vmatpush1.bf16.msra.mxu0 0
    %2392 = vmatprep.subr.bf16.mxu0 0
    %2393 = vmatpush1.bf16.msra.mxu0 0
    %2394 = vmatprep.subr.bf16.mxu0 0
    %2395 = vmatpush1.bf16.msra.mxu0 0
    %2396 = vmatprep.subr.bf16.mxu0 0
    %2397 = vmatpush1.bf16.msra.mxu0 0
    %2398 = vmatprep.subr.bf16.mxu0 0
    %2399 = vmatpush1.bf16.msra.mxu0 0
    %2400 = vmatprep.subr.bf16.mxu0 0
    %2401 = vmatpush1.bf16.msra.mxu0 0
    %2402 = vmatprep.subr.bf16.mxu0 0
    %2403 = vmatpush1.bf16.msra.mxu0 0
    %2404 = vmatprep.subr.bf16.mxu0 0
    %2405 = vmatpush1.bf16.msra.mxu0 0
    %2406 = vmatprep.subr.bf16.mxu0 0
    %2407 = vmatpush1.bf16.msra.mxu0 0
    %2408 = vmatprep.mubr.bf16.mxu0 0
    %2409 = vmatmul.mubr.bf16.gmra.mrb[0].mxu0 %v2371
    %v2410 = vpop.f32.mrb[0].mxu0
    %v2411 = vadd.f32 0.0, %v2410
    %v2412 = vpop.f32.mrb[0].mxu0
    %v2413 = vpop.f32.mrb[0].mxu0
    %v2414 = vpop.f32.mrb[0].mxu0
    %2415 = vdwg.mxu0
    %v2416 = vpack.c.bf16 %v2411, %v2411
    %2418 = vrot.lane.b32.xlu0 %v2299, 120
    %v2419 = vpop.permute.xlu0 %2418
    %2420 = vrot.lane.b32.xlu0 %v2300, 120
    %v2421 = vpop.permute.xlu0 %2420
    %v2423 = vsel %vm210, %v2419, 0
    %v2426 = vsel %vm210, %v2421, 0
    %2428 = vmatprep.subr.bf16.mxu0 0
    %2429 = vmatpush1.bf16.xpose.msra.mxu0 %v2426
    %2430 = vmatprep.subr.bf16.mxu0 0
    %2431 = vmatpush1.bf16.xpose.msra.mxu0 0
    %2432 = vmatprep.subr.bf16.mxu0 0
    %2433 = vmatpush1.bf16.xpose.msra.mxu0 0
    %2434 = vmatprep.subr.bf16.mxu0 0
    %2435 = vmatpush1.bf16.xpose.msra.mxu0 0
    %2436 = vmatprep.subr.bf16.mxu0 0
    %2437 = vmatpush1.bf16.xpose.msra.mxu0 0
    %2438 = vmatprep.subr.bf16.mxu0 0
    %2439 = vmatpush1.bf16.xpose.msra.mxu0 0
    %2440 = vmatprep.subr.bf16.mxu0 0
    %2441 = vmatpush1.bf16.xpose.msra.mxu0 0
    %2442 = vmatprep.subr.bf16.mxu0 0
    %2443 = vmatpush1.bf16.xpose.msra.mxu0 0
    %2444 = vmatprep.subr.bf16.mxu0 0
    %2445 = vmatpush1.bf16.xpose.msra.mxu0 0
    %2446 = vmatprep.subr.bf16.mxu0 0
    %2447 = vmatpush1.bf16.xpose.msra.mxu0 0
    %2448 = vmatprep.subr.bf16.mxu0 0
    %2449 = vmatpush1.bf16.xpose.msra.mxu0 0
    %2450 = vmatprep.subr.bf16.mxu0 0
    %2451 = vmatpush1.bf16.xpose.msra.mxu0 0
    %2452 = vmatprep.subr.bf16.mxu0 0
    %2453 = vmatpush1.bf16.xpose.msra.mxu0 0
    %2454 = vmatprep.subr.bf16.mxu0 0
    %2455 = vmatpush1.bf16.xpose.msra.mxu0 0
    %2456 = vmatprep.subr.bf16.mxu0 0
    %2457 = vmatpush1.bf16.xpose.msra.mxu0 0
    %2458 = vmatprep.subr.bf16.mxu0 0
    %2459 = vmatpush1.bf16.xpose.msra.mxu0 0
    %2460 = vmatprep.mubr.bf16.mxu0 0
    %2461 = vmatmul.mubr.bf16.gmra.mrb[0].mxu0 %v2423
    %v2462 = vpop.f32.mrb[0].mxu0
    %v2463 = vadd.f32 0.0, %v2462
    %v2464 = vpop.f32.mrb[0].mxu0
    %v2465 = vpop.f32.mrb[0].mxu0
    %v2466 = vpop.f32.mrb[0].mxu0
    %2467 = vdwg.mxu0
    %v2468 = vsel %vm2353, %v2463, -1e+09
    %v2469 = vsel %vm210, %v2468, -inf
    %2470 = vmax.xlane.f32.xlu0 %v2469
    %v2471 = vpop.xlane.xlu0 %2470
    %v2472 = vsub.f32 %v2468, %v2471
    %v2473 = vmul.f32 %v2472, 1.442695
    %v2474 = vpow.pop %v2473
    %v2475 = vsel %vm210, %v2474, 0.0
    %2476 = vadd.xlane.f32.xlu0 %v2475
    %v2477 = vpop.xlane.xlu0 %2476
    %v2478 = vrcp.pop %v2477
    %v2479 = vmul.f32 %v2474, %v2478
    %v2480 = vpack.c.bf16 %v2479, %v2479
    %2481 = vrot.lane.b32.xlu0 %v2300, 88
    %v2482 = vpop.permute.xlu0 %2481
    %v2484 = vsel %vm210, %v2480, 0
    %v2487 = vsel %vm276, %v2482, 0
    %2489 = vmatprep.subr.bf16.mxu0 0
    %2490 = vmatpush1.bf16.msra.mxu0 %v2487
    %2491 = vmatprep.subr.bf16.mxu0 0
    %2492 = vmatpush1.bf16.msra.mxu0 0
    %2493 = vmatprep.subr.bf16.mxu0 0
    %2494 = vmatpush1.bf16.msra.mxu0 0
    %2495 = vmatprep.subr.bf16.mxu0 0
    %2496 = vmatpush1.bf16.msra.mxu0 0
    %2497 = vmatprep.subr.bf16.mxu0 0
    %2498 = vmatpush1.bf16.msra.mxu0 0
    %2499 = vmatprep.subr.bf16.mxu0 0
    %2500 = vmatpush1.bf16.msra.mxu0 0
    %2501 = vmatprep.subr.bf16.mxu0 0
    %2502 = vmatpush1.bf16.msra.mxu0 0
    %2503 = vmatprep.subr.bf16.mxu0 0
    %2504 = vmatpush1.bf16.msra.mxu0 0
    %2505 = vmatprep.subr.bf16.mxu0 0
    %2506 = vmatpush1.bf16.msra.mxu0 0
    %2507 = vmatprep.subr.bf16.mxu0 0
    %2508 = vmatpush1.bf16.msra.mxu0 0
    %2509 = vmatprep.subr.bf16.mxu0 0
    %2510 = vmatpush1.bf16.msra.mxu0 0
    %2511 = vmatprep.subr.bf16.mxu0 0
    %2512 = vmatpush1.bf16.msra.mxu0 0
    %2513 = vmatprep.subr.bf16.mxu0 0
    %2514 = vmatpush1.bf16.msra.mxu0 0
    %2515 = vmatprep.subr.bf16.mxu0 0
    %2516 = vmatpush1.bf16.msra.mxu0 0
    %2517 = vmatprep.subr.bf16.mxu0 0
    %2518 = vmatpush1.bf16.msra.mxu0 0
    %2519 = vmatprep.subr.bf16.mxu0 0
    %2520 = vmatpush1.bf16.msra.mxu0 0
    %2521 = vmatprep.mubr.bf16.mxu0 0
    %2522 = vmatmul.mubr.bf16.gmra.mrb[0].mxu0 %v2484
    %v2523 = vpop.f32.mrb[0].mxu0
    %v2524 = vadd.f32 0.0, %v2523
    %v2525 = vpop.f32.mrb[0].mxu0
    %v2526 = vpop.f32.mrb[0].mxu0
    %v2527 = vpop.f32.mrb[0].mxu0
    %2528 = vdwg.mxu0
    %v2529 = vpack.c.bf16 %v2524, %v2524
    %v2531 = vsel %vm210, %v2529, 0
    %2533 = vmatprep.subr.bf16.mxu0 0
    %2534 = vmatpush1.bf16.msra.mxu0 %v1889
    %2535 = vmatprep.subr.bf16.mxu0 0
    %2536 = vmatpush1.bf16.msra.mxu0 0
    %2537 = vmatprep.subr.bf16.mxu0 0
    %2538 = vmatpush1.bf16.msra.mxu0 0
    %2539 = vmatprep.subr.bf16.mxu0 0
    %2540 = vmatpush1.bf16.msra.mxu0 0
    %2541 = vmatprep.subr.bf16.mxu0 0
    %2542 = vmatpush1.bf16.msra.mxu0 0
    %2543 = vmatprep.subr.bf16.mxu0 0
    %2544 = vmatpush1.bf16.msra.mxu0 0
    %2545 = vmatprep.subr.bf16.mxu0 0
    %2546 = vmatpush1.bf16.msra.mxu0 0
    %2547 = vmatprep.subr.bf16.mxu0 0
    %2548 = vmatpush1.bf16.msra.mxu0 0
    %2549 = vmatprep.subr.bf16.mxu0 0
    %2550 = vmatpush1.bf16.msra.mxu0 0
    %2551 = vmatprep.subr.bf16.mxu0 0
    %2552 = vmatpush1.bf16.msra.mxu0 0
    %2553 = vmatprep.subr.bf16.mxu0 0
    %2554 = vmatpush1.bf16.msra.mxu0 0
    %2555 = vmatprep.subr.bf16.mxu0 0
    %2556 = vmatpush1.bf16.msra.mxu0 0
    %2557 = vmatprep.subr.bf16.mxu0 0
    %2558 = vmatpush1.bf16.msra.mxu0 0
    %2559 = vmatprep.subr.bf16.mxu0 0
    %2560 = vmatpush1.bf16.msra.mxu0 0
    %2561 = vmatprep.subr.bf16.mxu0 0
    %2562 = vmatpush1.bf16.msra.mxu0 0
    %2563 = vmatprep.subr.bf16.mxu0 0
    %2564 = vmatpush1.bf16.msra.mxu0 0
    %2565 = vmatprep.mubr.bf16.mxu0 0
    %2566 = vmatmul.mubr.bf16.gmra.mrb[0].mxu0 %v2531
    %v2567 = vpop.f32.mrb[0].mxu0
    %v2568 = vadd.f32 0.0, %v2567
    %v2569 = vpop.f32.mrb[0].mxu0
    %v2570 = vpop.f32.mrb[0].mxu0
    %v2571 = vpop.f32.mrb[0].mxu0
    %2572 = vdwg.mxu0
    %v2574 = vsel %vm210, %v2416, 0
    %2576 = vmatprep.subr.bf16.mxu0 0
    %2577 = vmatpush1.bf16.msra.mxu0 %v1935
    %2578 = vmatprep.subr.bf16.mxu0 0
    %2579 = vmatpush1.bf16.msra.mxu0 0
    %2580 = vmatprep.subr.bf16.mxu0 0
    %2581 = vmatpush1.bf16.msra.mxu0 0
    %2582 = vmatprep.subr.bf16.mxu0 0
    %2583 = vmatpush1.bf16.msra.mxu0 0
    %2584 = vmatprep.subr.bf16.mxu0 0
    %2585 = vmatpush1.bf16.msra.mxu0 0
    %2586 = vmatprep.subr.bf16.mxu0 0
    %2587 = vmatpush1.bf16.msra.mxu0 0
    %2588 = vmatprep.subr.bf16.mxu0 0
    %2589 = vmatpush1.bf16.msra.mxu0 0
    %2590 = vmatprep.subr.bf16.mxu0 0
    %2591 = vmatpush1.bf16.msra.mxu0 0
    %2592 = vmatprep.subr.bf16.mxu0 0
    %2593 = vmatpush1.bf16.msra.mxu0 0
    %2594 = vmatprep.subr.bf16.mxu0 0
    %2595 = vmatpush1.bf16.msra.mxu0 0
    %2596 = vmatprep.subr.bf16.mxu0 0
    %2597 = vmatpush1.bf16.msra.mxu0 0
    %2598 = vmatprep.subr.bf16.mxu0 0
    %2599 = vmatpush1.bf16.msra.mxu0 0
    %2600 = vmatprep.subr.bf16.mxu0 0
    %2601 = vmatpush1.bf16.msra.mxu0 0
    %2602 = vmatprep.subr.bf16.mxu0 0
    %2603 = vmatpush1.bf16.msra.mxu0 0
    %2604 = vmatprep.subr.bf16.mxu0 0
    %2605 = vmatpush1.bf16.msra.mxu0 0
    %2606 = vmatprep.subr.bf16.mxu0 0
    %2607 = vmatpush1.bf16.msra.mxu0 0
    %2608 = vmatprep.mubr.bf16.mxu0 0
    %2609 = vmatmul.mubr.bf16.gmra.mrb[0].mxu0 %v2574
    %v2610 = vpop.f32.mrb[0].mxu0
    %v2611 = vadd.f32 %v2568, %v2610
    %v2612 = vpop.f32.mrb[0].mxu0
    %v2613 = vpop.f32.mrb[0].mxu0
    %v2614 = vpop.f32.mrb[0].mxu0
    %2615 = vdwg.mxu0
    %2616 = vrot.lane.b32.xlu0 %v2299, 112
    %v2617 = vpop.permute.xlu0 %2616
    %2618 = vrot.lane.b32.xlu0 %v2300, 112
    %v2619 = vpop.permute.xlu0 %2618
    %v2621 = vsel %vm210, %v2617, 0
    %v2624 = vsel %vm210, %v2619, 0
    %2626 = vmatprep.subr.bf16.mxu0 0
    %2627 = vmatpush1.bf16.xpose.msra.mxu0 %v2624
    %2628 = vmatprep.subr.bf16.mxu0 0
    %2629 = vmatpush1.bf16.xpose.msra.mxu0 0
    %2630 = vmatprep.subr.bf16.mxu0 0
    %2631 = vmatpush1.bf16.xpose.msra.mxu0 0
    %2632 = vmatprep.subr.bf16.mxu0 0
    %2633 = vmatpush1.bf16.xpose.msra.mxu0 0
    %2634 = vmatprep.subr.bf16.mxu0 0
    %2635 = vmatpush1.bf16.xpose.msra.mxu0 0
    %2636 = vmatprep.subr.bf16.mxu0 0
    %2637 = vmatpush1.bf16.xpose.msra.mxu0 0
    %2638 = vmatprep.subr.bf16.mxu0 0
    %2639 = vmatpush1.bf16.xpose.msra.mxu0 0
    %2640 = vmatprep.subr.bf16.mxu0 0
    %2641 = vmatpush1.bf16.xpose.msra.mxu0 0
    %2642 = vmatprep.subr.bf16.mxu0 0
    %2643 = vmatpush1.bf16.xpose.msra.mxu0 0
    %2644 = vmatprep.subr.bf16.mxu0 0
    %2645 = vmatpush1.bf16.xpose.msra.mxu0 0
    %2646 = vmatprep.subr.bf16.mxu0 0
    %2647 = vmatpush1.bf16.xpose.msra.mxu0 0
    %2648 = vmatprep.subr.bf16.mxu0 0
    %2649 = vmatpush1.bf16.xpose.msra.mxu0 0
    %2650 = vmatprep.subr.bf16.mxu0 0
    %2651 = vmatpush1.bf16.xpose.msra.mxu0 0
    %2652 = vmatprep.subr.bf16.mxu0 0
    %2653 = vmatpush1.bf16.xpose.msra.mxu0 0
    %2654 = vmatprep.subr.bf16.mxu0 0
    %2655 = vmatpush1.bf16.xpose.msra.mxu0 0
    %2656 = vmatprep.subr.bf16.mxu0 0
    %2657 = vmatpush1.bf16.xpose.msra.mxu0 0
    %2658 = vmatprep.mubr.bf16.mxu0 0
    %2659 = vmatmul.mubr.bf16.gmra.mrb[0].mxu0 %v2621
    %v2660 = vpop.f32.mrb[0].mxu0
    %v2661 = vadd.f32 0.0, %v2660
    %v2662 = vpop.f32.mrb[0].mxu0
    %v2663 = vpop.f32.mrb[0].mxu0
    %v2664 = vpop.f32.mrb[0].mxu0
    %2665 = vdwg.mxu0
    %v2666 = vsel %vm2353, %v2661, -1e+09
    %v2667 = vsel %vm210, %v2666, -inf
    %2668 = vmax.xlane.f32.xlu0 %v2667
    %v2669 = vpop.xlane.xlu0 %2668
    %v2670 = vsub.f32 %v2666, %v2669
    %v2671 = vmul.f32 %v2670, 1.442695
    %v2672 = vpow.pop %v2671
    %v2673 = vsel %vm210, %v2672, 0.0
    %2674 = vadd.xlane.f32.xlu0 %v2673
    %v2675 = vpop.xlane.xlu0 %2674
    %v2676 = vrcp.pop %v2675
    %v2677 = vmul.f32 %v2672, %v2676
    %v2678 = vpack.c.bf16 %v2677, %v2677
    %2679 = vrot.lane.b32.xlu0 %v2300, 80
    %v2680 = vpop.permute.xlu0 %2679
    %v2682 = vsel %vm210, %v2678, 0
    %v2685 = vsel %vm276, %v2680, 0
    %2687 = vmatprep.subr.bf16.mxu0 0
    %2688 = vmatpush1.bf16.msra.mxu0 %v2685
    %2689 = vmatprep.subr.bf16.mxu0 0
    %2690 = vmatpush1.bf16.msra.mxu0 0
    %2691 = vmatprep.subr.bf16.mxu0 0
    %2692 = vmatpush1.bf16.msra.mxu0 0
    %2693 = vmatprep.subr.bf16.mxu0 0
    %2694 = vmatpush1.bf16.msra.mxu0 0
    %2695 = vmatprep.subr.bf16.mxu0 0
    %2696 = vmatpush1.bf16.msra.mxu0 0
    %2697 = vmatprep.subr.bf16.mxu0 0
    %2698 = vmatpush1.bf16.msra.mxu0 0
    %2699 = vmatprep.subr.bf16.mxu0 0
    %2700 = vmatpush1.bf16.msra.mxu0 0
    %2701 = vmatprep.subr.bf16.mxu0 0
    %2702 = vmatpush1.bf16.msra.mxu0 0
    %2703 = vmatprep.subr.bf16.mxu0 0
    %2704 = vmatpush1.bf16.msra.mxu0 0
    %2705 = vmatprep.subr.bf16.mxu0 0
    %2706 = vmatpush1.bf16.msra.mxu0 0
    %2707 = vmatprep.subr.bf16.mxu0 0
    %2708 = vmatpush1.bf16.msra.mxu0 0
    %2709 = vmatprep.subr.bf16.mxu0 0
    %2710 = vmatpush1.bf16.msra.mxu0 0
    %2711 = vmatprep.subr.bf16.mxu0 0
    %2712 = vmatpush1.bf16.msra.mxu0 0
    %2713 = vmatprep.subr.bf16.mxu0 0
    %2714 = vmatpush1.bf16.msra.mxu0 0
    %2715 = vmatprep.subr.bf16.mxu0 0
    %2716 = vmatpush1.bf16.msra.mxu0 0
    %2717 = vmatprep.subr.bf16.mxu0 0
    %2718 = vmatpush1.bf16.msra.mxu0 0
    %2719 = vmatprep.mubr.bf16.mxu0 0
    %2720 = vmatmul.mubr.bf16.gmra.mrb[0].mxu0 %v2682
    %v2721 = vpop.f32.mrb[0].mxu0
    %v2722 = vadd.f32 0.0, %v2721
    %v2723 = vpop.f32.mrb[0].mxu0
    %v2724 = vpop.f32.mrb[0].mxu0
    %v2725 = vpop.f32.mrb[0].mxu0
    %2726 = vdwg.mxu0
    %v2727 = vpack.c.bf16 %v2722, %v2722
    %v2729 = vsel %vm210, %v2727, 0
    %2731 = vmatprep.subr.bf16.mxu0 0
    %2732 = vmatpush1.bf16.msra.mxu0 %v2094
    %2733 = vmatprep.subr.bf16.mxu0 0
    %2734 = vmatpush1.bf16.msra.mxu0 0
    %2735 = vmatprep.subr.bf16.mxu0 0
    %2736 = vmatpush1.bf16.msra.mxu0 0
    %2737 = vmatprep.subr.bf16.mxu0 0
    %2738 = vmatpush1.bf16.msra.mxu0 0
    %2739 = vmatprep.subr.bf16.mxu0 0
    %2740 = vmatpush1.bf16.msra.mxu0 0
    %2741 = vmatprep.subr.bf16.mxu0 0
    %2742 = vmatpush1.bf16.msra.mxu0 0
    %2743 = vmatprep.subr.bf16.mxu0 0
    %2744 = vmatpush1.bf16.msra.mxu0 0
    %2745 = vmatprep.subr.bf16.mxu0 0
    %2746 = vmatpush1.bf16.msra.mxu0 0
    %2747 = vmatprep.subr.bf16.mxu0 0
    %2748 = vmatpush1.bf16.msra.mxu0 0
    %2749 = vmatprep.subr.bf16.mxu0 0
    %2750 = vmatpush1.bf16.msra.mxu0 0
    %2751 = vmatprep.subr.bf16.mxu0 0
    %2752 = vmatpush1.bf16.msra.mxu0 0
    %2753 = vmatprep.subr.bf16.mxu0 0
    %2754 = vmatpush1.bf16.msra.mxu0 0
    %2755 = vmatprep.subr.bf16.mxu0 0
    %2756 = vmatpush1.bf16.msra.mxu0 0
    %2757 = vmatprep.subr.bf16.mxu0 0
    %2758 = vmatpush1.bf16.msra.mxu0 0
    %2759 = vmatprep.subr.bf16.mxu0 0
    %2760 = vmatpush1.bf16.msra.mxu0 0
    %2761 = vmatprep.subr.bf16.mxu0 0
    %2762 = vmatpush1.bf16.msra.mxu0 0
    %2763 = vmatprep.mubr.bf16.mxu0 0
    %2764 = vmatmul.mubr.bf16.gmra.mrb[0].mxu0 %v2729
    %v2765 = vpop.f32.mrb[0].mxu0
    %v2766 = vadd.f32 0.0, %v2765
    %v2767 = vpop.f32.mrb[0].mxu0
    %v2768 = vpop.f32.mrb[0].mxu0
    %v2769 = vpop.f32.mrb[0].mxu0
    %2770 = vdwg.mxu0
    %v2771 = vadd.f32 %v2611, %v2766
    %2772 = vrot.lane.b32.xlu0 %v2299, 104
    %v2773 = vpop.permute.xlu0 %2772
    %2774 = vrot.lane.b32.xlu0 %v2300, 104
    %v2775 = vpop.permute.xlu0 %2774
    %v2777 = vsel %vm210, %v2773, 0
    %v2780 = vsel %vm210, %v2775, 0
    %2782 = vmatprep.subr.bf16.mxu0 0
    %2783 = vmatpush1.bf16.xpose.msra.mxu0 %v2780
    %2784 = vmatprep.subr.bf16.mxu0 0
    %2785 = vmatpush1.bf16.xpose.msra.mxu0 0
    %2786 = vmatprep.subr.bf16.mxu0 0
    %2787 = vmatpush1.bf16.xpose.msra.mxu0 0
    %2788 = vmatprep.subr.bf16.mxu0 0
    %2789 = vmatpush1.bf16.xpose.msra.mxu0 0
    %2790 = vmatprep.subr.bf16.mxu0 0
    %2791 = vmatpush1.bf16.xpose.msra.mxu0 0
    %2792 = vmatprep.subr.bf16.mxu0 0
    %2793 = vmatpush1.bf16.xpose.msra.mxu0 0
    %2794 = vmatprep.subr.bf16.mxu0 0
    %2795 = vmatpush1.bf16.xpose.msra.mxu0 0
    %2796 = vmatprep.subr.bf16.mxu0 0
    %2797 = vmatpush1.bf16.xpose.msra.mxu0 0
    %2798 = vmatprep.subr.bf16.mxu0 0
    %2799 = vmatpush1.bf16.xpose.msra.mxu0 0
    %2800 = vmatprep.subr.bf16.mxu0 0
    %2801 = vmatpush1.bf16.xpose.msra.mxu0 0
    %2802 = vmatprep.subr.bf16.mxu0 0
    %2803 = vmatpush1.bf16.xpose.msra.mxu0 0
    %2804 = vmatprep.subr.bf16.mxu0 0
    %2805 = vmatpush1.bf16.xpose.msra.mxu0 0
    %2806 = vmatprep.subr.bf16.mxu0 0
    %2807 = vmatpush1.bf16.xpose.msra.mxu0 0
    %2808 = vmatprep.subr.bf16.mxu0 0
    %2809 = vmatpush1.bf16.xpose.msra.mxu0 0
    %2810 = vmatprep.subr.bf16.mxu0 0
    %2811 = vmatpush1.bf16.xpose.msra.mxu0 0
    %2812 = vmatprep.subr.bf16.mxu0 0
    %2813 = vmatpush1.bf16.xpose.msra.mxu0 0
    %2814 = vmatprep.mubr.bf16.mxu0 0
    %2815 = vmatmul.mubr.bf16.gmra.mrb[0].mxu0 %v2777
    %v2816 = vpop.f32.mrb[0].mxu0
    %v2817 = vadd.f32 0.0, %v2816
    %v2818 = vpop.f32.mrb[0].mxu0
    %v2819 = vpop.f32.mrb[0].mxu0
    %v2820 = vpop.f32.mrb[0].mxu0
    %2821 = vdwg.mxu0
    %v2822 = vsel %vm2353, %v2817, -1e+09
    %v2823 = vsel %vm210, %v2822, -inf
    %2824 = vmax.xlane.f32.xlu0 %v2823
    %v2825 = vpop.xlane.xlu0 %2824
    %v2826 = vsub.f32 %v2822, %v2825
    %v2827 = vmul.f32 %v2826, 1.442695
    %v2828 = vpow.pop %v2827
    %v2829 = vsel %vm210, %v2828, 0.0
    %2830 = vadd.xlane.f32.xlu0 %v2829
    %v2831 = vpop.xlane.xlu0 %2830
    %v2832 = vrcp.pop %v2831
    %v2833 = vmul.f32 %v2828, %v2832
    %v2834 = vpack.c.bf16 %v2833, %v2833
    %2835 = vrot.lane.b32.xlu0 %v2300, 72
    %v2836 = vpop.permute.xlu0 %2835
    %v2838 = vsel %vm210, %v2834, 0
    %v2841 = vsel %vm276, %v2836, 0
    %2843 = vmatprep.subr.bf16.mxu0 0
    %2844 = vmatpush1.bf16.msra.mxu0 %v2841
    %2845 = vmatprep.subr.bf16.mxu0 0
    %2846 = vmatpush1.bf16.msra.mxu0 0
    %2847 = vmatprep.subr.bf16.mxu0 0
    %2848 = vmatpush1.bf16.msra.mxu0 0
    %2849 = vmatprep.subr.bf16.mxu0 0
    %2850 = vmatpush1.bf16.msra.mxu0 0
    %2851 = vmatprep.subr.bf16.mxu0 0
    %2852 = vmatpush1.bf16.msra.mxu0 0
    %2853 = vmatprep.subr.bf16.mxu0 0
    %2854 = vmatpush1.bf16.msra.mxu0 0
    %2855 = vmatprep.subr.bf16.mxu0 0
    %2856 = vmatpush1.bf16.msra.mxu0 0
    %2857 = vmatprep.subr.bf16.mxu0 0
    %2858 = vmatpush1.bf16.msra.mxu0 0
    %2859 = vmatprep.subr.bf16.mxu0 0
    %2860 = vmatpush1.bf16.msra.mxu0 0
    %2861 = vmatprep.subr.bf16.mxu0 0
    %2862 = vmatpush1.bf16.msra.mxu0 0
    %2863 = vmatprep.subr.bf16.mxu0 0
    %2864 = vmatpush1.bf16.msra.mxu0 0
    %2865 = vmatprep.subr.bf16.mxu0 0
    %2866 = vmatpush1.bf16.msra.mxu0 0
    %2867 = vmatprep.subr.bf16.mxu0 0
    %2868 = vmatpush1.bf16.msra.mxu0 0
    %2869 = vmatprep.subr.bf16.mxu0 0
    %2870 = vmatpush1.bf16.msra.mxu0 0
    %2871 = vmatprep.subr.bf16.mxu0 0
    %2872 = vmatpush1.bf16.msra.mxu0 0
    %2873 = vmatprep.subr.bf16.mxu0 0
    %2874 = vmatpush1.bf16.msra.mxu0 0
    %2875 = vmatprep.mubr.bf16.mxu0 0
    %2876 = vmatmul.mubr.bf16.gmra.mrb[0].mxu0 %v2838
    %v2877 = vpop.f32.mrb[0].mxu0
    %v2878 = vadd.f32 0.0, %v2877
    %v2879 = vpop.f32.mrb[0].mxu0
    %v2880 = vpop.f32.mrb[0].mxu0
    %v2881 = vpop.f32.mrb[0].mxu0
    %2882 = vdwg.mxu0
    %v2883 = vpack.c.bf16 %v2878, %v2878
    %v2885 = vsel %vm210, %v2883, 0
    %2887 = vmatprep.subr.bf16.mxu0 0
    %2888 = vmatpush1.bf16.msra.mxu0 %v2254
    %2889 = vmatprep.subr.bf16.mxu0 0
    %2890 = vmatpush1.bf16.msra.mxu0 0
    %2891 = vmatprep.subr.bf16.mxu0 0
    %2892 = vmatpush1.bf16.msra.mxu0 0
    %2893 = vmatprep.subr.bf16.mxu0 0
    %2894 = vmatpush1.bf16.msra.mxu0 0
    %2895 = vmatprep.subr.bf16.mxu0 0
    %2896 = vmatpush1.bf16.msra.mxu0 0
    %2897 = vmatprep.subr.bf16.mxu0 0
    %2898 = vmatpush1.bf16.msra.mxu0 0
    %2899 = vmatprep.subr.bf16.mxu0 0
    %2900 = vmatpush1.bf16.msra.mxu0 0
    %2901 = vmatprep.subr.bf16.mxu0 0
    %2902 = vmatpush1.bf16.msra.mxu0 0
    %2903 = vmatprep.subr.bf16.mxu0 0
    %2904 = vmatpush1.bf16.msra.mxu0 0
    %2905 = vmatprep.subr.bf16.mxu0 0
    %2906 = vmatpush1.bf16.msra.mxu0 0
    %2907 = vmatprep.subr.bf16.mxu0 0
    %2908 = vmatpush1.bf16.msra.mxu0 0
    %2909 = vmatprep.subr.bf16.mxu0 0
    %2910 = vmatpush1.bf16.msra.mxu0 0
    %2911 = vmatprep.subr.bf16.mxu0 0
    %2912 = vmatpush1.bf16.msra.mxu0 0
    %2913 = vmatprep.subr.bf16.mxu0 0
    %2914 = vmatpush1.bf16.msra.mxu0 0
    %2915 = vmatprep.subr.bf16.mxu0 0
    %2916 = vmatpush1.bf16.msra.mxu0 0
    %2917 = vmatprep.subr.bf16.mxu0 0
    %2918 = vmatpush1.bf16.msra.mxu0 0
    %2919 = vmatprep.mubr.bf16.mxu0 0
    %2920 = vmatmul.mubr.bf16.gmra.mrb[0].mxu0 %v2885
    %v2921 = vpop.f32.mrb[0].mxu0
    %v2922 = vadd.f32 0.0, %v2921
    %v2923 = vpop.f32.mrb[0].mxu0
    %v2924 = vpop.f32.mrb[0].mxu0
    %v2925 = vpop.f32.mrb[0].mxu0
    %2926 = vdwg.mxu0
    %v2927 = vadd.f32 %v2771, %v2922
    %v2928 = vadd.f32 %v1475, %v2296
    %v2929 = vadd.f32 %v1476, %v2927
    %v2930 = vld [vmem:[#allocation10 + $0x20] ss:$0 sm:$0xff]
    %v2931 = vadd.f32 %v2928, %v2930
    %v2932 = vadd.f32 %v2929, %v2930
    %v2933 = vld [vmem:[#allocation10 + $0x3] ss:$0 sm:$0xff]
    %v2934 = vld [vmem:[#allocation10 + $0x6] ss:$0 sm:$0xff]
    %v2935 = vsel %vm97, %v2931, 0.0
    %2936 = vadd.xlane.f32.xlu0 %v2935
    %v2937 = vpop.xlane.xlu0 %2936
    %v2938 = vsel %vm97, %v2932, 0.0
    %2939 = vadd.xlane.f32.xlu0 %v2938
    %v2940 = vpop.xlane.xlu0 %2939
    %v2941 = vmul.f32 %v2937, %v104
    %v2942 = vmul.f32 %v2940, %v104
    %v2943 = vsub.f32 %v2931, %v2941
    %v2944 = vsub.f32 %v2932, %v2942
    %v2945 = vmul.f32 %v2943, %v2943
    %v2946 = vmul.f32 %v2944, %v2944
    %v2947 = vsel %vm97, %v2945, 0.0
    %2948 = vadd.xlane.f32.xlu0 %v2947
    %v2949 = vpop.xlane.xlu0 %2948
    %v2950 = vsel %vm97, %v2946, 0.0
    %2951 = vadd.xlane.f32.xlu0 %v2950
    %v2952 = vpop.xlane.xlu0 %2951
    %v2953 = vmul.f32 %v2949, 0.032258064
    %v2954 = vmul.f32 %v2952, 0.032258064
    %v2955 = vrsqrt.pop %v2953
    %v2956 = vmul.f32 %v2953, %v2955
    %vm2957 = vcmp.eq.f32.partialorder %v2953, inf
    %v2958 = vsel %vm2957, %v2953, %v2956
    %vm2959 = vcmp.eq.f32.partialorder %v2953, 0.0
    %v2960 = vand.u32 %v2953, 2147483648
    %v2961 = vsel %vm2959, %v2960, %v2958
    %v2962 = vrsqrt.pop %v2954
    %v2963 = vmul.f32 %v2954, %v2962
    %vm2964 = vcmp.eq.f32.partialorder %v2954, inf
    %v2965 = vsel %vm2964, %v2954, %v2963
    %vm2966 = vcmp.eq.f32.partialorder %v2954, 0.0
    %v2967 = vand.u32 %v2954, 2147483648
    %v2968 = vsel %vm2966, %v2967, %v2965
    %v2969 = vmul.f32 %v2933, %v2943
    %v2970 = vmul.f32 %v2933, %v2944
    %v2971 = vadd.f32 %v2961, 1e-06
    %v2972 = vadd.f32 %v2968, 1e-06
    %v2973 = vrcp.pop %v2971
    %v2974 = vmul.f32 %v2969, %v2973
    %v2975 = vrcp.pop %v2972
    %v2976 = vmul.f32 %v2970, %v2975
    %v2977 = vadd.f32 %v2974, %v2934
    %v2978 = vadd.f32 %v2976, %v2934
    %v2979 = vld [vmem:[#allocation8 + $0x14] sm:$0xf]
    %v2980 = vld [vmem:[#allocation8 + $0x30] sm:$0xf]
    %v2981 = vld [vmem:[#allocation8 + $0x4c] sm:$0xf]
    %v2982 = vld [vmem:[#allocation8 + $0x68] sm:$0xf]
    %v2983 = vpack.c.bf16 %v2978, %v2977
    %v2984 = vld [vmem:[#allocation10 + $0x28] ss:$0 sm:$0xff]
    %v2989 = vunpack.c.l.b16 %v2979
    %v2990 = vunpack.c.l.b16 %v2980
    %v2991 = vunpack.c.l.b16 %v2981
    %v2992 = vunpack.c.l.b16 %v2982
    %v2993 = vpack.c.b16 %v2990, %v2989
    %v2994 = vpack.c.b16 %v2992, %v2991
    %v2998 = vsel %vm97, %v2983, 0
    %3000 = vmatprep.subr.bf16.mxu0 0
    %3001 = vmatpush1.bf16.msra.mxu0 %v2993
    %3002 = vmatprep.subr.bf16.mxu0 0
    %3003 = vmatpush1.bf16.msra.mxu0 %v2994
    %3004 = vmatprep.subr.bf16.mxu0 0
    %3005 = vmatpush1.bf16.msra.mxu0 0
    %3006 = vmatprep.subr.bf16.mxu0 0
    %3007 = vmatpush1.bf16.msra.mxu0 0
    %3008 = vmatprep.subr.bf16.mxu0 0
    %3009 = vmatpush1.bf16.msra.mxu0 0
    %3010 = vmatprep.subr.bf16.mxu0 0
    %3011 = vmatpush1.bf16.msra.mxu0 0
    %3012 = vmatprep.subr.bf16.mxu0 0
    %3013 = vmatpush1.bf16.msra.mxu0 0
    %3014 = vmatprep.subr.bf16.mxu0 0
    %3015 = vmatpush1.bf16.msra.mxu0 0
    %3016 = vmatprep.subr.bf16.mxu0 0
    %3017 = vmatpush1.bf16.msra.mxu0 0
    %3018 = vmatprep.subr.bf16.mxu0 0
    %3019 = vmatpush1.bf16.msra.mxu0 0
    %3020 = vmatprep.subr.bf16.mxu0 0
    %3021 = vmatpush1.bf16.msra.mxu0 0
    %3022 = vmatprep.subr.bf16.mxu0 0
    %3023 = vmatpush1.bf16.msra.mxu0 0
    %3024 = vmatprep.subr.bf16.mxu0 0
    %3025 = vmatpush1.bf16.msra.mxu0 0
    %3026 = vmatprep.subr.bf16.mxu0 0
    %3027 = vmatpush1.bf16.msra.mxu0 0
    %3028 = vmatprep.subr.bf16.mxu0 0
    %3029 = vmatpush1.bf16.msra.mxu0 0
    %3030 = vmatprep.subr.bf16.mxu0 0
    %3031 = vmatpush1.bf16.msra.mxu0 0
    %3032 = vmatprep.mubr.bf16.mxu0 0
    %3033 = vmatmul.mubr.bf16.gmra.mrb[0].mxu0 %v2998
    %v3034 = vpop.f32.mrb[0].mxu0
    %v3035 = vadd.f32 %v2984, %v3034
    %v3036 = vpop.f32.mrb[0].mxu0
    %v3037 = vpop.f32.mrb[0].mxu0
    %v3038 = vadd.f32 %v2984, %v3037
    %v3039 = vpop.f32.mrb[0].mxu0
    %3040 = vdwg.mxu0
    %v3041 = vmax.f32 %v3035, 0.0
    %v3042 = vmax.f32 %v3038, 0.0
    %v3043 = vld [vmem:[#allocation8 + $0x18] sm:$0xf]
    %v3044 = vld [vmem:[#allocation8 + $0x34] sm:$0xf]
    %v3045 = vld [vmem:[#allocation8 + $0x50] sm:$0xf]
    %v3046 = vld [vmem:[#allocation8 + $0x6c] sm:$0xf]
    %v3047 = vpack.c.bf16 %v3042, %v3041
    %v3052 = vunpack.c.l.b16 %v3043
    %v3053 = vunpack.c.l.b16 %v3044
    %v3054 = vunpack.c.l.b16 %v3045
    %v3055 = vunpack.c.l.b16 %v3046
    %v3056 = vpack.c.b16 %v3053, %v3052
    %v3057 = vpack.c.b16 %v3055, %v3054
    %vm3058 = vcmask 523264
    %v3060 = vsel %vm3058, %v3047, 0
    %v3063 = vsel %vm3058, %v3056, 0
    %v3066 = vsel %vm3058, %v3057, 0
    %3068 = vmatprep.subr.bf16.mxu0 0
    %3069 = vmatpush1.bf16.xpose.msra.mxu0 %v3063
    %3070 = vmatprep.subr.bf16.mxu0 0
    %3071 = vmatpush1.bf16.xpose.msra.mxu0 %v3066
    %3072 = vmatprep.subr.bf16.mxu0 0
    %3073 = vmatpush1.bf16.xpose.msra.mxu0 0
    %3074 = vmatprep.subr.bf16.mxu0 0
    %3075 = vmatpush1.bf16.xpose.msra.mxu0 0
    %3076 = vmatprep.subr.bf16.mxu0 0
    %3077 = vmatpush1.bf16.xpose.msra.mxu0 0
    %3078 = vmatprep.subr.bf16.mxu0 0
    %3079 = vmatpush1.bf16.xpose.msra.mxu0 0
    %3080 = vmatprep.subr.bf16.mxu0 0
    %3081 = vmatpush1.bf16.xpose.msra.mxu0 0
    %3082 = vmatprep.subr.bf16.mxu0 0
    %3083 = vmatpush1.bf16.xpose.msra.mxu0 0
    %3084 = vmatprep.subr.bf16.mxu0 0
    %3085 = vmatpush1.bf16.xpose.msra.mxu0 0
    %3086 = vmatprep.subr.bf16.mxu0 0
    %3087 = vmatpush1.bf16.xpose.msra.mxu0 0
    %3088 = vmatprep.subr.bf16.mxu0 0
    %3089 = vmatpush1.bf16.xpose.msra.mxu0 0
    %3090 = vmatprep.subr.bf16.mxu0 0
    %3091 = vmatpush1.bf16.xpose.msra.mxu0 0
    %3092 = vmatprep.subr.bf16.mxu0 0
    %3093 = vmatpush1.bf16.xpose.msra.mxu0 0
    %3094 = vmatprep.subr.bf16.mxu0 0
    %3095 = vmatpush1.bf16.xpose.msra.mxu0 0
    %3096 = vmatprep.subr.bf16.mxu0 0
    %3097 = vmatpush1.bf16.xpose.msra.mxu0 0
    %3098 = vmatprep.subr.bf16.mxu0 0
    %3099 = vmatpush1.bf16.xpose.msra.mxu0 0
    %3100 = vmatprep.mubr.bf16.mxu0 0
    %3101 = vmatmul.mubr.bf16.gmra.mrb[0].mxu0 %v3060
    %v3102 = vpop.f32.mrb[0].mxu0
    %v3103 = vadd.f32 0.0, %v3102
    %v3104 = vpop.f32.mrb[0].mxu0
    %v3105 = vpop.f32.mrb[0].mxu0
    %v3106 = vadd.f32 0.0, %v3105
    %v3107 = vpop.f32.mrb[0].mxu0
    %3108 = vdwg.mxu0
    %v3109 = vadd.f32 %v2931, %v3103
    %v3110 = vadd.f32 %v2932, %v3106
    %v3111 = vld [vmem:[#allocation10 + $0x30] ss:$0 sm:$0xff]
    %v3112 = vadd.f32 %v3109, %v3111
    %v3113 = vadd.f32 %v3110, %v3111
    %3114 = vst.msk [vmem:[#allocation11] sm:$0xff] %vm97, %v3112
    %3115 = vst.msk [vmem:[#allocation11 + $0x8] sm:$0xff] %vm97, %v3113
    // Predicated region
    $region46: #{tpu_custom_call.1} parent=1 // pred_check
      _
    $region47: #{tpu_custom_call.1} parent=1 // pred_check_branch
      %3117 = sbr.rel (0) target = $region49
    $region48: #{tpu_custom_call.1} parent=1 // pred_region
      %s3119 = ssub.s32 256, 256
      %3120 = vsyncadd [#allocation4], %s3119
      %s3121 = sshll.u32 [#allocation11], 4
      %s3122 = int_to_ptr.vmem [resolvable:$true] %s3121
      %3127 = dma.vmem_to_hbm [thread:$0]  %s3122, 256, %s6, [#allocation4], 128, 128, 8
    $region49: #{tpu_custom_call.1} parent=1 // pred_fallthru
      _
    // Predicated region
    $region50: #{tpu_custom_call.1} parent=1 // pred_check
      _
    $region51: #{tpu_custom_call.1} parent=1 // pred_check_branch
      %3129 = sbr.rel (0) target = $region53
    $region52: #{tpu_custom_call.1} parent=1 // pred_region
      %3130 = dma.done [#allocation4], 256
    $region53: #{tpu_custom_call.1} parent=1 // pred_fallthru
      _
    %3131 = vsyncpa [#allocation3], 1
    %3132 = vsyncpa [#allocation6], 1
    %3133 = vsyncpa [#allocation9], 1
    %3134 = vsyncpa [#allocation4], 1

</llo_original>
